<compile_context>
chip_gen: v5e
topology: v5e:2x2
jax: 0.10.0
libtpu: 0.0.40
codegen_flags: <defaults>
</compile_context>

<pallas_src>
import math

import jax
import jax.numpy as jnp
from jax import lax
from jax.experimental import pallas as pl
from jax.experimental.pallas import tpu as pltpu

# ---- model config (small, deterministic) ----
D_MODEL = 32
D_STATE = 16                      # N (power of two, used for the bit-mask below)
D_CONV = 4
EXPAND = 2
D_INNER = EXPAND * D_MODEL        # E = 64
DT_RANK = math.ceil(D_MODEL / 16) # R = 2
SEQ_LEN = 16                      # L
BATCH = 2
N_LAYERS = 2
LN_EPS = 1e-5


# ------------------------- kernel helpers -------------------------

def _layernorm(x, gamma, beta):
    mu = jnp.mean(x, axis=-1, keepdims=True)
    xm = x - mu
    var = jnp.mean(xm * xm, axis=-1, keepdims=True)
    return xm * lax.rsqrt(var + LN_EPS) * gamma[None, :] + beta[None, :]


# ------------------------- fused backbone kernel -------------------------

def _backbone_kernel(x_ref, ln_ref, vec_ref, w_in_ref, w_x_ref, w_dt_ref,
                     a_ref, w_out_ref, o_ref):
    L, E, N, R = SEQ_LEN, D_INNER, D_STATE, DT_RANK
    f32 = jnp.float32
    bf16 = jnp.bfloat16

    x = x_ref[0]                                              # (L, D) f32

    # Layer-independent selection / mask matrices for the hoisted scan setup:
    #   r_sel[i, t] = 1  iff  i // N == t   (repeat each timestep row N times)
    #   m_sel[i, n] = 1  iff  i %  N == n   (select the state index in a group)
    row = lax.broadcasted_iota(jnp.int32, (L * N, L), 0)
    col = lax.broadcasted_iota(jnp.int32, (L * N, L), 1)
    d0 = row - col * N
    r_sel = jnp.logical_and(d0 >= 0, d0 < N).astype(f32)      # (L*N, L)
    row2 = lax.broadcasted_iota(jnp.int32, (L * N, N), 0)
    col2 = lax.broadcasted_iota(jnp.int32, (L * N, N), 1)
    d1 = row2 - col2
    m_sel = jnp.logical_and(jnp.bitwise_and(d1, N - 1) == 0,
                            d1 >= 0).astype(f32)              # (L*N, N)

    for l in range(N_LAYERS):                                 # unrolled layer loop
        ln = ln_ref[l]                                        # (2, D): gamma, beta
        vec = vec_ref[l]                                      # (7, E): conv_w[0..3], conv_b, b_dt, D
        w_in = w_in_ref[l].astype(bf16)                       # (D, 2E)
        w_x = w_x_ref[l].astype(bf16)                         # (E, R + 2N)
        w_dt = w_dt_ref[l]                                    # (R, E)
        a_log = a_ref[l]                                      # (N, E)
        w_out = w_out_ref[l].astype(bf16)                     # (E, D)

        # ---- LayerNorm(dim) ----
        xn = _layernorm(x, ln[0], ln[1])                      # (L, D)

        # ---- Mamba: in_proj (no bias), bf16 MXU / f32 accumulate ----
        xz = jnp.dot(xn.astype(bf16), w_in, preferred_element_type=f32)   # (L, 2E)
        xi = xz[:, :E]
        z = xz[:, E:]

        # ---- causal depthwise conv1d (kernel D_CONV, left pad D_CONV-1) + SiLU
        #      via shifted adds in the native (L, E) layout ----
        conv = xi * vec[D_CONV - 1][None, :] + vec[D_CONV][None, :]       # tap k=K-1, shift 0, + bias
        for k in range(D_CONV - 1):
            s = D_CONV - 1 - k                                # causal shift for tap k
            shifted = jnp.concatenate(
                [jnp.zeros((s, E), f32), xi[:L - s, :]], axis=0)          # row t -> xi[t-s]
            conv = conv + shifted * vec[k][None, :]
        xc = jax.nn.silu(conv)                                # (L, E)

        # ---- x_proj -> [dt_raw | B | C] ----
        xdbl = jnp.dot(xc.astype(bf16), w_x, preferred_element_type=f32)  # (L, R+2N)
        dt_raw = xdbl[:, :R]
        bmat = xdbl[:, R:R + N]                               # (L, N)
        cmat = xdbl[:, R + N:R + 2 * N]                       # (L, N)

        # ---- dt_proj (small rank, unrolled) + softplus ----
        dt = jnp.broadcast_to(vec[D_CONV + 1][None, :], (L, E))
        for r in range(R):
            dt = dt + dt_raw[:, r:r + 1] * w_dt[r][None, :]
        dt = jax.nn.softplus(dt)                              # (L, E)

        # ---- selective scan: state (N, E); discretization + exp hoisted ----
        a_par = -jnp.exp(a_log)                               # (N, E)
        # row i = t*N + n of the (L*N, E) slabs corresponds to (timestep t, state n)
        dt_exp = jnp.dot(r_sel, dt, preferred_element_type=f32)         # dt[t, e]
        u_exp = jnp.dot(r_sel, dt * xc, preferred_element_type=f32)     # dt[t,e]*x[t,e]
        a_tile = jnp.dot(m_sel, a_par, preferred_element_type=f32)      # A[n, e]
        da = jnp.exp(dt_exp * a_tile)                                   # exp(dt*A), one big EUP batch
        bv = jnp.sum(jnp.dot(r_sel, bmat, preferred_element_type=f32) * m_sel,
                     axis=1, keepdims=True)                             # (L*N, 1): B[t, n]
        cv = jnp.sum(jnp.dot(r_sel, cmat, preferred_element_type=f32) * m_sel,
                     axis=1, keepdims=True)                             # (L*N, 1): C[t, n]
        dbu = u_exp * bv                                                # dt*B*x

        h = jnp.zeros((N, E), f32)
        ys = []
        for t in range(L):                                    # fully unrolled recurrence
            lo = t * N
            h = da[lo:lo + N, :] * h + dbu[lo:lo + N, :]      # (N, E) multiply-add
            ys.append(jnp.sum(h * cv[lo:lo + N, :], axis=0, keepdims=True))  # (1, E)
        y = jnp.concatenate(ys, axis=0) + vec[D_CONV + 2][None, :] * xc  # + D * x skip

        # ---- gate, out_proj, residual (dropout/drop_path rate 0.0 -> identity) ----
        y = y * jax.nn.silu(z)
        out = jnp.dot(y.astype(bf16), w_out, preferred_element_type=f32)  # (L, D)
        x = out + x

    # ---- final backbone LayerNorm ----
    ln_f = ln_ref[N_LAYERS]
    o_ref[0] = _layernorm(x, ln_f[0], ln_f[1])


# ------------------------- wrapper -------------------------

def mamba_backbone(x, ln_pack, vec_pack, w_in, w_x, w_dt, a_log_t, w_out):
    B, L, Dm = x.shape

    def _full(shape):
        n = len(shape)
        return pl.BlockSpec(shape, lambda b: (0,) * n)

    return pl.pallas_call(
        _backbone_kernel,
        out_shape=jax.ShapeDtypeStruct((B, L, Dm), jnp.float32),
        grid=(B,),
        in_specs=[
            pl.BlockSpec((1, L, Dm), lambda b: (b, 0, 0)),    # x (per batch element)
            _full(ln_pack.shape),                             # (NL+1, 2, D)
            _full(vec_pack.shape),                            # (NL, 7, E)
            _full(w_in.shape),                                # (NL, D, 2E)
            _full(w_x.shape),                                 # (NL, E, R+2N)
            _full(w_dt.shape),                                # (NL, R, E)
            _full(a_log_t.shape),                             # (NL, N, E)
            _full(w_out.shape),                               # (NL, E, D)
        ],
        out_specs=pl.BlockSpec((1, L, Dm), lambda b: (b, 0, 0)),
        input_output_aliases={0: 0},                          # write result over x
        compiler_params=pltpu.CompilerParams(
            dimension_semantics=("parallel",)),               # B=2 across v7x's 2 TCs
    )(x, ln_pack, vec_pack, w_in, w_x, w_dt, a_log_t, w_out)


# ------------------------- deterministic parameter init -------------------------

def init_params(key):
    keys = jax.random.split(key, N_LAYERS)
    scale = 0.05
    # A_log stored transposed (N, E): A_log[n, e] = log(n + 1)  (mamba_ssm S4D init)
    a_log = jnp.log(jnp.broadcast_to(
        jnp.arange(1, D_STATE + 1, dtype=jnp.float32)[:, None],
        (D_STATE, D_INNER)))
    # softplus^-1(0.01) so initial dt ~ 0.01, as in mamba_ssm init
    b_dt = jnp.log(jnp.expm1(jnp.full((D_INNER,), 0.01, jnp.float32)))

    ln_rows, vec_rows = [], []
    w_in_l, w_x_l, w_dt_l, a_l, w_out_l = [], [], [], [], []
    for k in keys:
        ks = jax.random.split(k, 6)
        ln_rows.append(jnp.stack([jnp.ones((D_MODEL,), jnp.float32),
                                  jnp.zeros((D_MODEL,), jnp.float32)]))
        conv_w = 0.2 * jax.random.normal(ks[1], (D_CONV, D_INNER), jnp.float32)
        conv_b = 0.02 * jax.random.normal(ks[2], (1, D_INNER), jnp.float32)
        d_par = jnp.ones((1, D_INNER), jnp.float32)
        # packed per-channel vectors: rows 0..3 conv taps, 4 conv bias, 5 dt bias, 6 D
        vec_rows.append(jnp.concatenate([conv_w, conv_b, b_dt[None, :], d_par], axis=0))
        w_in_l.append(scale * jax.random.normal(ks[0], (D_MODEL, 2 * D_INNER), jnp.float32))
        w_x_l.append(scale * jax.random.normal(
            ks[3], (D_INNER, DT_RANK + 2 * D_STATE), jnp.float32))
        w_dt_l.append(0.1 * jax.random.normal(ks[4], (DT_RANK, D_INNER), jnp.float32))
        a_l.append(a_log)
        w_out_l.append(scale * jax.random.normal(ks[5], (D_INNER, D_MODEL), jnp.float32))
    # final backbone LayerNorm packed as the last (gamma, beta) entry
    ln_rows.append(jnp.stack([jnp.ones((D_MODEL,), jnp.float32),
                              jnp.zeros((D_MODEL,), jnp.float32)]))

    return (jnp.stack(ln_rows), jnp.stack(vec_rows), jnp.stack(w_in_l),
            jnp.stack(w_x_l), jnp.stack(w_dt_l), jnp.stack(a_l),
            jnp.stack(w_out_l))


if __name__ == "__main__":
    root = jax.random.PRNGKey(0)
    k_x, k_p = jax.random.split(root)

    x = jax.random.normal(k_x, (BATCH, SEQ_LEN, D_MODEL), jnp.float32)
    params = init_params(k_p)

    fwd = jax.jit(mamba_backbone, donate_argnums=(0,))
    out = jax.block_until_ready(fwd(x, *params))

    assert out.shape == (BATCH, SEQ_LEN, D_MODEL), out.shape
    assert bool(jnp.all(jnp.isfinite(out))), "non-finite output"
    print("KERNEL_OK")
</pallas_src>

<mosaic_0001>
module attributes {stable_mosaic.version = 11 : i64} {
  func.func @_backbone_kernel(%arg0: i32, %arg1: memref<1x16x32xf32, #tpu.memory_space<vmem>>, %arg2: memref<3x2x32xf32, #tpu.memory_space<vmem>>, %arg3: memref<2x7x64xf32, #tpu.memory_space<vmem>>, %arg4: memref<2x32x128xf32, #tpu.memory_space<vmem>>, %arg5: memref<2x64x34xf32, #tpu.memory_space<vmem>>, %arg6: memref<2x2x64xf32, #tpu.memory_space<vmem>>, %arg7: memref<2x16x64xf32, #tpu.memory_space<vmem>>, %arg8: memref<2x64x32xf32, #tpu.memory_space<vmem>>, %arg9: memref<1x16x32xf32, #tpu.memory_space<vmem>>) attributes {dimension_semantics = [#tpu.dimension_semantics<parallel>], iteration_bounds = array<i64: 2>, scalar_prefetch = 0 : i64, scratch_operands = 0 : i64, tpu.core_type = #tpu.core_type<tc>, window_params = [{transform_indices = @transform_0, window_bounds = array<i64: 1, 16, 32>}, {pipeline_mode = #tpu.pipeline_mode<synchronous>, transform_indices = @transform_1, window_bounds = array<i64: 3, 2, 32>}, {pipeline_mode = #tpu.pipeline_mode<synchronous>, transform_indices = @transform_2, window_bounds = array<i64: 2, 7, 64>}, {pipeline_mode = #tpu.pipeline_mode<synchronous>, transform_indices = @transform_3, window_bounds = array<i64: 2, 32, 128>}, {pipeline_mode = #tpu.pipeline_mode<synchronous>, transform_indices = @transform_4, window_bounds = array<i64: 2, 64, 34>}, {pipeline_mode = #tpu.pipeline_mode<synchronous>, transform_indices = @transform_5, window_bounds = array<i64: 2, 2, 64>}, {pipeline_mode = #tpu.pipeline_mode<synchronous>, transform_indices = @transform_6, window_bounds = array<i64: 2, 16, 64>}, {pipeline_mode = #tpu.pipeline_mode<synchronous>, transform_indices = @transform_7, window_bounds = array<i64: 2, 64, 32>}, {transform_indices = @transform_8, window_bounds = array<i64: 1, 16, 32>}]} {
    %c0 = arith.constant 0 : index
    %c0_0 = arith.constant 0 : index
    %c0_1 = arith.constant 0 : index
    %0 = vector.load %arg1[%c0, %c0_0, %c0_1] : memref<1x16x32xf32, #tpu.memory_space<vmem>>, vector<1x16x32xf32>
    %1 = vector.shape_cast %0 : vector<1x16x32xf32> to vector<16x32xf32>
    %2 = tpu.iota {dimensions = array<i32: 0>} : vector<256x16xi32>
    %3 = tpu.iota {dimensions = array<i32: 1>} : vector<256x16xi32>
    %c16_i32 = arith.constant 16 : i32
    %4 = vector.broadcast %c16_i32 : i32 to vector<256x16xi32>
    %5 = arith.muli %3, %4 : vector<256x16xi32>
    %6 = arith.subi %2, %5 : vector<256x16xi32>
    %c0_i32 = arith.constant 0 : i32
    %7 = vector.broadcast %c0_i32 : i32 to vector<256x16xi32>
    %8 = arith.cmpi sge, %6, %7 : vector<256x16xi32>
    %c16_i32_2 = arith.constant 16 : i32
    %9 = vector.broadcast %c16_i32_2 : i32 to vector<256x16xi32>
    %10 = arith.cmpi slt, %6, %9 : vector<256x16xi32>
    %11 = arith.andi %8, %10 : vector<256x16xi1>
    %12 = arith.extui %11 : vector<256x16xi1> to vector<256x16xi32>
    %13 = arith.sitofp %12 : vector<256x16xi32> to vector<256x16xf32>
    %14 = tpu.iota {dimensions = array<i32: 0>} : vector<256x16xi32>
    %15 = tpu.iota {dimensions = array<i32: 1>} : vector<256x16xi32>
    %16 = arith.subi %14, %15 : vector<256x16xi32>
    %c15_i32 = arith.constant 15 : i32
    %17 = vector.broadcast %c15_i32 : i32 to vector<256x16xi32>
    %18 = arith.andi %16, %17 : vector<256x16xi32>
    %c0_i32_3 = arith.constant 0 : i32
    %19 = vector.broadcast %c0_i32_3 : i32 to vector<256x16xi32>
    %20 = arith.cmpi eq, %18, %19 : vector<256x16xi32>
    %c0_i32_4 = arith.constant 0 : i32
    %21 = vector.broadcast %c0_i32_4 : i32 to vector<256x16xi32>
    %22 = arith.cmpi sge, %16, %21 : vector<256x16xi32>
    %23 = arith.andi %20, %22 : vector<256x16xi1>
    %24 = arith.extui %23 : vector<256x16xi1> to vector<256x16xi32>
    %25 = arith.sitofp %24 : vector<256x16xi32> to vector<256x16xf32>
    %c0_5 = arith.constant 0 : index
    %c0_6 = arith.constant 0 : index
    %c0_7 = arith.constant 0 : index
    %26 = vector.load %arg2[%c0_5, %c0_6, %c0_7] : memref<3x2x32xf32, #tpu.memory_space<vmem>>, vector<1x2x32xf32>
    %27 = vector.shape_cast %26 : vector<1x2x32xf32> to vector<2x32xf32>
    %c0_8 = arith.constant 0 : index
    %c0_9 = arith.constant 0 : index
    %c0_10 = arith.constant 0 : index
    %28 = vector.load %arg3[%c0_8, %c0_9, %c0_10] : memref<2x7x64xf32, #tpu.memory_space<vmem>>, vector<1x7x64xf32>
    %29 = vector.shape_cast %28 : vector<1x7x64xf32> to vector<7x64xf32>
    %c0_11 = arith.constant 0 : index
    %c0_12 = arith.constant 0 : index
    %c0_13 = arith.constant 0 : index
    %30 = vector.load %arg4[%c0_11, %c0_12, %c0_13] : memref<2x32x128xf32, #tpu.memory_space<vmem>>, vector<1x32x128xf32>
    %31 = vector.shape_cast %30 : vector<1x32x128xf32> to vector<32x128xf32>
    %32 = arith.truncf %31 : vector<32x128xf32> to vector<32x128xbf16>
    %c0_14 = arith.constant 0 : index
    %c0_15 = arith.constant 0 : index
    %c0_16 = arith.constant 0 : index
    %33 = vector.load %arg5[%c0_14, %c0_15, %c0_16] : memref<2x64x34xf32, #tpu.memory_space<vmem>>, vector<1x64x34xf32>
    %34 = vector.shape_cast %33 : vector<1x64x34xf32> to vector<64x34xf32>
    %35 = arith.truncf %34 : vector<64x34xf32> to vector<64x34xbf16>
    %c0_17 = arith.constant 0 : index
    %c0_18 = arith.constant 0 : index
    %c0_19 = arith.constant 0 : index
    %36 = vector.load %arg6[%c0_17, %c0_18, %c0_19] : memref<2x2x64xf32, #tpu.memory_space<vmem>>, vector<1x2x64xf32>
    %37 = vector.shape_cast %36 : vector<1x2x64xf32> to vector<2x64xf32>
    %c0_20 = arith.constant 0 : index
    %c0_21 = arith.constant 0 : index
    %c0_22 = arith.constant 0 : index
    %38 = vector.load %arg7[%c0_20, %c0_21, %c0_22] : memref<2x16x64xf32, #tpu.memory_space<vmem>>, vector<1x16x64xf32>
    %39 = vector.shape_cast %38 : vector<1x16x64xf32> to vector<16x64xf32>
    %c0_23 = arith.constant 0 : index
    %c0_24 = arith.constant 0 : index
    %c0_25 = arith.constant 0 : index
    %40 = vector.load %arg8[%c0_23, %c0_24, %c0_25] : memref<2x64x32xf32, #tpu.memory_space<vmem>>, vector<1x64x32xf32>
    %41 = vector.shape_cast %40 : vector<1x64x32xf32> to vector<64x32xf32>
    %42 = arith.truncf %41 : vector<64x32xf32> to vector<64x32xbf16>
    %43 = vector.extract_strided_slice %27 {offsets = [0, 0], sizes = [1, 32], strides = [1, 1]} : vector<2x32xf32> to vector<1x32xf32>
    %44 = vector.shape_cast %43 : vector<1x32xf32> to vector<32xf32>
    %45 = vector.extract_strided_slice %27 {offsets = [1, 0], sizes = [1, 32], strides = [1, 1]} : vector<2x32xf32> to vector<1x32xf32>
    %46 = vector.shape_cast %45 : vector<1x32xf32> to vector<32xf32>
    %cst = arith.constant dense<0.000000e+00> : vector<16xf32>
    %47 = vector.multi_reduction <add>, %1, %cst [1] : vector<16x32xf32> to vector<16xf32>
    %48 = vector.shape_cast %47 : vector<16xf32> to vector<16x1xf32>
    %cst_26 = arith.constant 3.200000e+01 : f32
    %49 = vector.broadcast %cst_26 : f32 to vector<16x1xf32>
    %50 = arith.divf %48, %49 : vector<16x1xf32>
    %51 = vector.broadcast %50 : vector<16x1xf32> to vector<16x32xf32>
    %52 = arith.subf %1, %51 : vector<16x32xf32>
    %53 = arith.mulf %52, %52 : vector<16x32xf32>
    %cst_27 = arith.constant dense<0.000000e+00> : vector<16xf32>
    %54 = vector.multi_reduction <add>, %53, %cst_27 [1] : vector<16x32xf32> to vector<16xf32>
    %55 = vector.shape_cast %54 : vector<16xf32> to vector<16x1xf32>
    %cst_28 = arith.constant 3.200000e+01 : f32
    %56 = vector.broadcast %cst_28 : f32 to vector<16x1xf32>
    %57 = arith.divf %55, %56 : vector<16x1xf32>
    %cst_29 = arith.constant 9.99999974E-6 : f32
    %58 = vector.broadcast %cst_29 : f32 to vector<16x1xf32>
    %59 = arith.addf %57, %58 : vector<16x1xf32>
    %60 = math.rsqrt %59 : vector<16x1xf32>
    %61 = vector.broadcast %60 : vector<16x1xf32> to vector<16x32xf32>
    %62 = arith.mulf %52, %61 : vector<16x32xf32>
    %63 = vector.shape_cast %44 : vector<32xf32> to vector<1x32xf32>
    %64 = vector.broadcast %63 : vector<1x32xf32> to vector<16x32xf32>
    %65 = arith.mulf %62, %64 : vector<16x32xf32>
    %66 = vector.shape_cast %46 : vector<32xf32> to vector<1x32xf32>
    %67 = vector.broadcast %66 : vector<1x32xf32> to vector<16x32xf32>
    %68 = arith.addf %65, %67 : vector<16x32xf32>
    %69 = arith.truncf %68 : vector<16x32xf32> to vector<16x32xbf16>
    %cst_30 = arith.constant dense<0.000000e+00> : vector<16x128xf32>
    %70 = tpu.matmul %69, %32, %cst_30 {dimension_numbers = #tpu.dot_dimension_numbers<[1], [0], [0], [1], [0, 0, 1, 1], [], []>} : vector<16x32xbf16>, vector<32x128xbf16>, vector<16x128xf32> -> vector<16x128xf32>
    %71 = vector.extract_strided_slice %70 {offsets = [0, 0], sizes = [16, 64], strides = [1, 1]} : vector<16x128xf32> to vector<16x64xf32>
    %72 = vector.extract_strided_slice %70 {offsets = [0, 64], sizes = [16, 64], strides = [1, 1]} : vector<16x128xf32> to vector<16x64xf32>
    %73 = vector.extract_strided_slice %29 {offsets = [3, 0], sizes = [1, 64], strides = [1, 1]} : vector<7x64xf32> to vector<1x64xf32>
    %74 = vector.shape_cast %73 : vector<1x64xf32> to vector<64xf32>
    %75 = vector.shape_cast %74 : vector<64xf32> to vector<1x64xf32>
    %76 = vector.broadcast %75 : vector<1x64xf32> to vector<16x64xf32>
    %77 = arith.mulf %71, %76 : vector<16x64xf32>
    %78 = vector.extract_strided_slice %29 {offsets = [4, 0], sizes = [1, 64], strides = [1, 1]} : vector<7x64xf32> to vector<1x64xf32>
    %79 = vector.shape_cast %78 : vector<1x64xf32> to vector<64xf32>
    %80 = vector.shape_cast %79 : vector<64xf32> to vector<1x64xf32>
    %81 = vector.broadcast %80 : vector<1x64xf32> to vector<16x64xf32>
    %82 = arith.addf %77, %81 : vector<16x64xf32>
    %cst_31 = arith.constant 0.000000e+00 : f32
    %83 = vector.broadcast %cst_31 : f32 to vector<3x64xf32>
    %84 = vector.extract_strided_slice %71 {offsets = [0, 0], sizes = [13, 64], strides = [1, 1]} : vector<16x64xf32> to vector<13x64xf32>
    %85 = tpu.concatenate %83, %84 in 0 : vector<3x64xf32>, vector<13x64xf32> -> vector<16x64xf32>
    %86 = vector.extract_strided_slice %29 {offsets = [0, 0], sizes = [1, 64], strides = [1, 1]} : vector<7x64xf32> to vector<1x64xf32>
    %87 = vector.shape_cast %86 : vector<1x64xf32> to vector<64xf32>
    %88 = vector.shape_cast %87 : vector<64xf32> to vector<1x64xf32>
    %89 = vector.broadcast %88 : vector<1x64xf32> to vector<16x64xf32>
    %90 = arith.mulf %85, %89 : vector<16x64xf32>
    %91 = arith.addf %82, %90 : vector<16x64xf32>
    %cst_32 = arith.constant 0.000000e+00 : f32
    %92 = vector.broadcast %cst_32 : f32 to vector<2x64xf32>
    %93 = vector.extract_strided_slice %71 {offsets = [0, 0], sizes = [14, 64], strides = [1, 1]} : vector<16x64xf32> to vector<14x64xf32>
    %94 = tpu.concatenate %92, %93 in 0 : vector<2x64xf32>, vector<14x64xf32> -> vector<16x64xf32>
    %95 = vector.extract_strided_slice %29 {offsets = [1, 0], sizes = [1, 64], strides = [1, 1]} : vector<7x64xf32> to vector<1x64xf32>
    %96 = vector.shape_cast %95 : vector<1x64xf32> to vector<64xf32>
    %97 = vector.shape_cast %96 : vector<64xf32> to vector<1x64xf32>
    %98 = vector.broadcast %97 : vector<1x64xf32> to vector<16x64xf32>
    %99 = arith.mulf %94, %98 : vector<16x64xf32>
    %100 = arith.addf %91, %99 : vector<16x64xf32>
    %cst_33 = arith.constant 0.000000e+00 : f32
    %101 = vector.broadcast %cst_33 : f32 to vector<1x64xf32>
    %102 = vector.extract_strided_slice %71 {offsets = [0, 0], sizes = [15, 64], strides = [1, 1]} : vector<16x64xf32> to vector<15x64xf32>
    %103 = tpu.concatenate %101, %102 in 0 : vector<1x64xf32>, vector<15x64xf32> -> vector<16x64xf32>
    %104 = vector.extract_strided_slice %29 {offsets = [2, 0], sizes = [1, 64], strides = [1, 1]} : vector<7x64xf32> to vector<1x64xf32>
    %105 = vector.shape_cast %104 : vector<1x64xf32> to vector<64xf32>
    %106 = vector.shape_cast %105 : vector<64xf32> to vector<1x64xf32>
    %107 = vector.broadcast %106 : vector<1x64xf32> to vector<16x64xf32>
    %108 = arith.mulf %103, %107 : vector<16x64xf32>
    %109 = arith.addf %100, %108 : vector<16x64xf32>
    %110 = arith.negf %109 : vector<16x64xf32>
    %111 = math.exp %110 : vector<16x64xf32>
    %cst_34 = arith.constant 1.000000e+00 : f32
    %112 = vector.broadcast %cst_34 : f32 to vector<16x64xf32>
    %113 = arith.addf %112, %111 : vector<16x64xf32>
    %114 = arith.divf %112, %113 : vector<16x64xf32>
    %115 = arith.mulf %109, %114 : vector<16x64xf32>
    %116 = arith.truncf %115 : vector<16x64xf32> to vector<16x64xbf16>
    %cst_35 = arith.constant dense<0.000000e+00> : vector<16x34xf32>
    %117 = tpu.matmul %116, %35, %cst_35 {dimension_numbers = #tpu.dot_dimension_numbers<[1], [0], [0], [1], [0, 0, 1, 1], [], []>} : vector<16x64xbf16>, vector<64x34xbf16>, vector<16x34xf32> -> vector<16x34xf32>
    %118 = vector.extract_strided_slice %117 {offsets = [0, 0], sizes = [16, 2], strides = [1, 1]} : vector<16x34xf32> to vector<16x2xf32>
    %119 = vector.extract_strided_slice %117 {offsets = [0, 2], sizes = [16, 16], strides = [1, 1]} : vector<16x34xf32> to vector<16x16xf32>
    %120 = vector.extract_strided_slice %117 {offsets = [0, 18], sizes = [16, 16], strides = [1, 1]} : vector<16x34xf32> to vector<16x16xf32>
    %121 = vector.extract_strided_slice %29 {offsets = [5, 0], sizes = [1, 64], strides = [1, 1]} : vector<7x64xf32> to vector<1x64xf32>
    %122 = vector.shape_cast %121 : vector<1x64xf32> to vector<64xf32>
    %123 = vector.shape_cast %122 : vector<64xf32> to vector<1x64xf32>
    %124 = vector.shape_cast %123 : vector<1x64xf32> to vector<1x64xf32>
    %125 = vector.broadcast %124 : vector<1x64xf32> to vector<16x64xf32>
    %126 = vector.extract_strided_slice %118 {offsets = [0, 0], sizes = [16, 1], strides = [1, 1]} : vector<16x2xf32> to vector<16x1xf32>
    %127 = vector.extract_strided_slice %37 {offsets = [0, 0], sizes = [1, 64], strides = [1, 1]} : vector<2x64xf32> to vector<1x64xf32>
    %128 = vector.shape_cast %127 : vector<1x64xf32> to vector<64xf32>
    %129 = vector.shape_cast %128 : vector<64xf32> to vector<1x64xf32>
    %130 = vector.broadcast %126 : vector<16x1xf32> to vector<16x64xf32>
    %131 = vector.broadcast %129 : vector<1x64xf32> to vector<16x64xf32>
    %132 = arith.mulf %130, %131 : vector<16x64xf32>
    %133 = arith.addf %125, %132 : vector<16x64xf32>
    %134 = vector.extract_strided_slice %118 {offsets = [0, 1], sizes = [16, 1], strides = [1, 1]} : vector<16x2xf32> to vector<16x1xf32>
    %135 = vector.extract_strided_slice %37 {offsets = [1, 0], sizes = [1, 64], strides = [1, 1]} : vector<2x64xf32> to vector<1x64xf32>
    %136 = vector.shape_cast %135 : vector<1x64xf32> to vector<64xf32>
    %137 = vector.shape_cast %136 : vector<64xf32> to vector<1x64xf32>
    %138 = vector.broadcast %134 : vector<16x1xf32> to vector<16x64xf32>
    %139 = vector.broadcast %137 : vector<1x64xf32> to vector<16x64xf32>
    %140 = arith.mulf %138, %139 : vector<16x64xf32>
    %141 = arith.addf %133, %140 : vector<16x64xf32>
    %cst_36 = arith.constant 0.000000e+00 : f32
    %142 = vector.broadcast %cst_36 : f32 to vector<16x64xf32>
    %143 = arith.maximumf %141, %142 : vector<16x64xf32>
    %144 = vector.broadcast %cst_36 : f32 to vector<16x64xf32>
    %145 = arith.subf %141, %144 : vector<16x64xf32>
    %146 = arith.cmpf one, %145, %145 : vector<16x64xf32>
    %147 = vector.broadcast %cst_36 : f32 to vector<16x64xf32>
    %148 = arith.addf %141, %147 : vector<16x64xf32>
    %149 = math.absf %145 : vector<16x64xf32>
    %cst_37 = arith.constant 0.000000e+00 : f32
    %150 = vector.broadcast %cst_37 : f32 to vector<16x64xf32>
    %151 = arith.subf %150, %149 : vector<16x64xf32>
    %152 = math.exp %151 : vector<16x64xf32>
    %153 = math.log1p %152 : vector<16x64xf32>
    %154 = arith.addf %143, %153 : vector<16x64xf32>
    %155 = arith.select %146, %148, %154 : vector<16x64xi1>, vector<16x64xf32>
    %156 = math.exp %39 : vector<16x64xf32>
    %cst_38 = arith.constant 0.000000e+00 : f32
    %157 = vector.broadcast %cst_38 : f32 to vector<16x64xf32>
    %158 = arith.subf %157, %156 : vector<16x64xf32>
    %cst_39 = arith.constant dense<0.000000e+00> : vector<256x64xf32>
    %159 = tpu.matmul %13, %155, %cst_39 {dimension_numbers = #tpu.dot_dimension_numbers<[1], [0], [0], [1], [0, 0, 1, 1], [], []>} : vector<256x16xf32>, vector<16x64xf32>, vector<256x64xf32> -> vector<256x64xf32>
    %160 = arith.mulf %155, %115 : vector<16x64xf32>
    %cst_40 = arith.constant dense<0.000000e+00> : vector<256x64xf32>
    %161 = tpu.matmul %13, %160, %cst_40 {dimension_numbers = #tpu.dot_dimension_numbers<[1], [0], [0], [1], [0, 0, 1, 1], [], []>} : vector<256x16xf32>, vector<16x64xf32>, vector<256x64xf32> -> vector<256x64xf32>
    %cst_41 = arith.constant dense<0.000000e+00> : vector<256x64xf32>
    %162 = tpu.matmul %25, %158, %cst_41 {dimension_numbers = #tpu.dot_dimension_numbers<[1], [0], [0], [1], [0, 0, 1, 1], [], []>} : vector<256x16xf32>, vector<16x64xf32>, vector<256x64xf32> -> vector<256x64xf32>
    %163 = arith.mulf %159, %162 : vector<256x64xf32>
    %164 = math.exp %163 : vector<256x64xf32>
    %cst_42 = arith.constant dense<0.000000e+00> : vector<256x16xf32>
    %165 = tpu.matmul %13, %119, %cst_42 {dimension_numbers = #tpu.dot_dimension_numbers<[1], [0], [0], [1], [0, 0, 1, 1], [], []>} : vector<256x16xf32>, vector<16x16xf32>, vector<256x16xf32> -> vector<256x16xf32>
    %166 = arith.mulf %165, %25 : vector<256x16xf32>
    %cst_43 = arith.constant dense<0.000000e+00> : vector<256xf32>
    %167 = vector.multi_reduction <add>, %166, %cst_43 [1] : vector<256x16xf32> to vector<256xf32>
    %168 = vector.shape_cast %167 : vector<256xf32> to vector<256x1xf32>
    %cst_44 = arith.constant dense<0.000000e+00> : vector<256x16xf32>
    %169 = tpu.matmul %13, %120, %cst_44 {dimension_numbers = #tpu.dot_dimension_numbers<[1], [0], [0], [1], [0, 0, 1, 1], [], []>} : vector<256x16xf32>, vector<16x16xf32>, vector<256x16xf32> -> vector<256x16xf32>
    %170 = arith.mulf %169, %25 : vector<256x16xf32>
    %cst_45 = arith.constant dense<0.000000e+00> : vector<256xf32>
    %171 = vector.multi_reduction <add>, %170, %cst_45 [1] : vector<256x16xf32> to vector<256xf32>
    %172 = vector.shape_cast %171 : vector<256xf32> to vector<256x1xf32>
    %173 = vector.broadcast %168 : vector<256x1xf32> to vector<256x64xf32>
    %174 = arith.mulf %161, %173 : vector<256x64xf32>
    %cst_46 = arith.constant 0.000000e+00 : f32
    %175 = vector.broadcast %cst_46 : f32 to vector<16x64xf32>
    %176 = vector.extract_strided_slice %164 {offsets = [0, 0], sizes = [16, 64], strides = [1, 1]} : vector<256x64xf32> to vector<16x64xf32>
    %177 = arith.mulf %176, %175 : vector<16x64xf32>
    %178 = vector.extract_strided_slice %174 {offsets = [0, 0], sizes = [16, 64], strides = [1, 1]} : vector<256x64xf32> to vector<16x64xf32>
    %179 = arith.addf %177, %178 : vector<16x64xf32>
    %180 = vector.extract_strided_slice %172 {offsets = [0, 0], sizes = [16, 1], strides = [1, 1]} : vector<256x1xf32> to vector<16x1xf32>
    %181 = vector.broadcast %180 : vector<16x1xf32> to vector<16x64xf32>
    %182 = arith.mulf %179, %181 : vector<16x64xf32>
    %cst_47 = arith.constant dense<0.000000e+00> : vector<64xf32>
    %183 = vector.multi_reduction <add>, %182, %cst_47 [0] : vector<16x64xf32> to vector<64xf32>
    %184 = vector.shape_cast %183 : vector<64xf32> to vector<1x64xf32>
    %185 = vector.extract_strided_slice %164 {offsets = [16, 0], sizes = [16, 64], strides = [1, 1]} : vector<256x64xf32> to vector<16x64xf32>
    %186 = arith.mulf %185, %179 : vector<16x64xf32>
    %187 = vector.extract_strided_slice %174 {offsets = [16, 0], sizes = [16, 64], strides = [1, 1]} : vector<256x64xf32> to vector<16x64xf32>
    %188 = arith.addf %186, %187 : vector<16x64xf32>
    %189 = vector.extract_strided_slice %172 {offsets = [16, 0], sizes = [16, 1], strides = [1, 1]} : vector<256x1xf32> to vector<16x1xf32>
    %190 = vector.broadcast %189 : vector<16x1xf32> to vector<16x64xf32>
    %191 = arith.mulf %188, %190 : vector<16x64xf32>
    %cst_48 = arith.constant dense<0.000000e+00> : vector<64xf32>
    %192 = vector.multi_reduction <add>, %191, %cst_48 [0] : vector<16x64xf32> to vector<64xf32>
    %193 = vector.shape_cast %192 : vector<64xf32> to vector<1x64xf32>
    %194 = vector.extract_strided_slice %164 {offsets = [32, 0], sizes = [16, 64], strides = [1, 1]} : vector<256x64xf32> to vector<16x64xf32>
    %195 = arith.mulf %194, %188 : vector<16x64xf32>
    %196 = vector.extract_strided_slice %174 {offsets = [32, 0], sizes = [16, 64], strides = [1, 1]} : vector<256x64xf32> to vector<16x64xf32>
    %197 = arith.addf %195, %196 : vector<16x64xf32>
    %198 = vector.extract_strided_slice %172 {offsets = [32, 0], sizes = [16, 1], strides = [1, 1]} : vector<256x1xf32> to vector<16x1xf32>
    %199 = vector.broadcast %198 : vector<16x1xf32> to vector<16x64xf32>
    %200 = arith.mulf %197, %199 : vector<16x64xf32>
    %cst_49 = arith.constant dense<0.000000e+00> : vector<64xf32>
    %201 = vector.multi_reduction <add>, %200, %cst_49 [0] : vector<16x64xf32> to vector<64xf32>
    %202 = vector.shape_cast %201 : vector<64xf32> to vector<1x64xf32>
    %203 = vector.extract_strided_slice %164 {offsets = [48, 0], sizes = [16, 64], strides = [1, 1]} : vector<256x64xf32> to vector<16x64xf32>
    %204 = arith.mulf %203, %197 : vector<16x64xf32>
    %205 = vector.extract_strided_slice %174 {offsets = [48, 0], sizes = [16, 64], strides = [1, 1]} : vector<256x64xf32> to vector<16x64xf32>
    %206 = arith.addf %204, %205 : vector<16x64xf32>
    %207 = vector.extract_strided_slice %172 {offsets = [48, 0], sizes = [16, 1], strides = [1, 1]} : vector<256x1xf32> to vector<16x1xf32>
    %208 = vector.broadcast %207 : vector<16x1xf32> to vector<16x64xf32>
    %209 = arith.mulf %206, %208 : vector<16x64xf32>
    %cst_50 = arith.constant dense<0.000000e+00> : vector<64xf32>
    %210 = vector.multi_reduction <add>, %209, %cst_50 [0] : vector<16x64xf32> to vector<64xf32>
    %211 = vector.shape_cast %210 : vector<64xf32> to vector<1x64xf32>
    %212 = vector.extract_strided_slice %164 {offsets = [64, 0], sizes = [16, 64], strides = [1, 1]} : vector<256x64xf32> to vector<16x64xf32>
    %213 = arith.mulf %212, %206 : vector<16x64xf32>
    %214 = vector.extract_strided_slice %174 {offsets = [64, 0], sizes = [16, 64], strides = [1, 1]} : vector<256x64xf32> to vector<16x64xf32>
    %215 = arith.addf %213, %214 : vector<16x64xf32>
    %216 = vector.extract_strided_slice %172 {offsets = [64, 0], sizes = [16, 1], strides = [1, 1]} : vector<256x1xf32> to vector<16x1xf32>
    %217 = vector.broadcast %216 : vector<16x1xf32> to vector<16x64xf32>
    %218 = arith.mulf %215, %217 : vector<16x64xf32>
    %cst_51 = arith.constant dense<0.000000e+00> : vector<64xf32>
    %219 = vector.multi_reduction <add>, %218, %cst_51 [0] : vector<16x64xf32> to vector<64xf32>
    %220 = vector.shape_cast %219 : vector<64xf32> to vector<1x64xf32>
    %221 = vector.extract_strided_slice %164 {offsets = [80, 0], sizes = [16, 64], strides = [1, 1]} : vector<256x64xf32> to vector<16x64xf32>
    %222 = arith.mulf %221, %215 : vector<16x64xf32>
    %223 = vector.extract_strided_slice %174 {offsets = [80, 0], sizes = [16, 64], strides = [1, 1]} : vector<256x64xf32> to vector<16x64xf32>
    %224 = arith.addf %222, %223 : vector<16x64xf32>
    %225 = vector.extract_strided_slice %172 {offsets = [80, 0], sizes = [16, 1], strides = [1, 1]} : vector<256x1xf32> to vector<16x1xf32>
    %226 = vector.broadcast %225 : vector<16x1xf32> to vector<16x64xf32>
    %227 = arith.mulf %224, %226 : vector<16x64xf32>
    %cst_52 = arith.constant dense<0.000000e+00> : vector<64xf32>
    %228 = vector.multi_reduction <add>, %227, %cst_52 [0] : vector<16x64xf32> to vector<64xf32>
    %229 = vector.shape_cast %228 : vector<64xf32> to vector<1x64xf32>
    %230 = vector.extract_strided_slice %164 {offsets = [96, 0], sizes = [16, 64], strides = [1, 1]} : vector<256x64xf32> to vector<16x64xf32>
    %231 = arith.mulf %230, %224 : vector<16x64xf32>
    %232 = vector.extract_strided_slice %174 {offsets = [96, 0], sizes = [16, 64], strides = [1, 1]} : vector<256x64xf32> to vector<16x64xf32>
    %233 = arith.addf %231, %232 : vector<16x64xf32>
    %234 = vector.extract_strided_slice %172 {offsets = [96, 0], sizes = [16, 1], strides = [1, 1]} : vector<256x1xf32> to vector<16x1xf32>
    %235 = vector.broadcast %234 : vector<16x1xf32> to vector<16x64xf32>
    %236 = arith.mulf %233, %235 : vector<16x64xf32>
    %cst_53 = arith.constant dense<0.000000e+00> : vector<64xf32>
    %237 = vector.multi_reduction <add>, %236, %cst_53 [0] : vector<16x64xf32> to vector<64xf32>
    %238 = vector.shape_cast %237 : vector<64xf32> to vector<1x64xf32>
    %239 = vector.extract_strided_slice %164 {offsets = [112, 0], sizes = [16, 64], strides = [1, 1]} : vector<256x64xf32> to vector<16x64xf32>
    %240 = arith.mulf %239, %233 : vector<16x64xf32>
    %241 = vector.extract_strided_slice %174 {offsets = [112, 0], sizes = [16, 64], strides = [1, 1]} : vector<256x64xf32> to vector<16x64xf32>
    %242 = arith.addf %240, %241 : vector<16x64xf32>
    %243 = vector.extract_strided_slice %172 {offsets = [112, 0], sizes = [16, 1], strides = [1, 1]} : vector<256x1xf32> to vector<16x1xf32>
    %244 = vector.broadcast %243 : vector<16x1xf32> to vector<16x64xf32>
    %245 = arith.mulf %242, %244 : vector<16x64xf32>
    %cst_54 = arith.constant dense<0.000000e+00> : vector<64xf32>
    %246 = vector.multi_reduction <add>, %245, %cst_54 [0] : vector<16x64xf32> to vector<64xf32>
    %247 = vector.shape_cast %246 : vector<64xf32> to vector<1x64xf32>
    %248 = vector.extract_strided_slice %164 {offsets = [128, 0], sizes = [16, 64], strides = [1, 1]} : vector<256x64xf32> to vector<16x64xf32>
    %249 = arith.mulf %248, %242 : vector<16x64xf32>
    %250 = vector.extract_strided_slice %174 {offsets = [128, 0], sizes = [16, 64], strides = [1, 1]} : vector<256x64xf32> to vector<16x64xf32>
    %251 = arith.addf %249, %250 : vector<16x64xf32>
    %252 = vector.extract_strided_slice %172 {offsets = [128, 0], sizes = [16, 1], strides = [1, 1]} : vector<256x1xf32> to vector<16x1xf32>
    %253 = vector.broadcast %252 : vector<16x1xf32> to vector<16x64xf32>
    %254 = arith.mulf %251, %253 : vector<16x64xf32>
    %cst_55 = arith.constant dense<0.000000e+00> : vector<64xf32>
    %255 = vector.multi_reduction <add>, %254, %cst_55 [0] : vector<16x64xf32> to vector<64xf32>
    %256 = vector.shape_cast %255 : vector<64xf32> to vector<1x64xf32>
    %257 = vector.extract_strided_slice %164 {offsets = [144, 0], sizes = [16, 64], strides = [1, 1]} : vector<256x64xf32> to vector<16x64xf32>
    %258 = arith.mulf %257, %251 : vector<16x64xf32>
    %259 = vector.extract_strided_slice %174 {offsets = [144, 0], sizes = [16, 64], strides = [1, 1]} : vector<256x64xf32> to vector<16x64xf32>
    %260 = arith.addf %258, %259 : vector<16x64xf32>
    %261 = vector.extract_strided_slice %172 {offsets = [144, 0], sizes = [16, 1], strides = [1, 1]} : vector<256x1xf32> to vector<16x1xf32>
    %262 = vector.broadcast %261 : vector<16x1xf32> to vector<16x64xf32>
    %263 = arith.mulf %260, %262 : vector<16x64xf32>
    %cst_56 = arith.constant dense<0.000000e+00> : vector<64xf32>
    %264 = vector.multi_reduction <add>, %263, %cst_56 [0] : vector<16x64xf32> to vector<64xf32>
    %265 = vector.shape_cast %264 : vector<64xf32> to vector<1x64xf32>
    %266 = vector.extract_strided_slice %164 {offsets = [160, 0], sizes = [16, 64], strides = [1, 1]} : vector<256x64xf32> to vector<16x64xf32>
    %267 = arith.mulf %266, %260 : vector<16x64xf32>
    %268 = vector.extract_strided_slice %174 {offsets = [160, 0], sizes = [16, 64], strides = [1, 1]} : vector<256x64xf32> to vector<16x64xf32>
    %269 = arith.addf %267, %268 : vector<16x64xf32>
    %270 = vector.extract_strided_slice %172 {offsets = [160, 0], sizes = [16, 1], strides = [1, 1]} : vector<256x1xf32> to vector<16x1xf32>
    %271 = vector.broadcast %270 : vector<16x1xf32> to vector<16x64xf32>
    %272 = arith.mulf %269, %271 : vector<16x64xf32>
    %cst_57 = arith.constant dense<0.000000e+00> : vector<64xf32>
    %273 = vector.multi_reduction <add>, %272, %cst_57 [0] : vector<16x64xf32> to vector<64xf32>
    %274 = vector.shape_cast %273 : vector<64xf32> to vector<1x64xf32>
    %275 = vector.extract_strided_slice %164 {offsets = [176, 0], sizes = [16, 64], strides = [1, 1]} : vector<256x64xf32> to vector<16x64xf32>
    %276 = arith.mulf %275, %269 : vector<16x64xf32>
    %277 = vector.extract_strided_slice %174 {offsets = [176, 0], sizes = [16, 64], strides = [1, 1]} : vector<256x64xf32> to vector<16x64xf32>
    %278 = arith.addf %276, %277 : vector<16x64xf32>
    %279 = vector.extract_strided_slice %172 {offsets = [176, 0], sizes = [16, 1], strides = [1, 1]} : vector<256x1xf32> to vector<16x1xf32>
    %280 = vector.broadcast %279 : vector<16x1xf32> to vector<16x64xf32>
    %281 = arith.mulf %278, %280 : vector<16x64xf32>
    %cst_58 = arith.constant dense<0.000000e+00> : vector<64xf32>
    %282 = vector.multi_reduction <add>, %281, %cst_58 [0] : vector<16x64xf32> to vector<64xf32>
    %283 = vector.shape_cast %282 : vector<64xf32> to vector<1x64xf32>
    %284 = vector.extract_strided_slice %164 {offsets = [192, 0], sizes = [16, 64], strides = [1, 1]} : vector<256x64xf32> to vector<16x64xf32>
    %285 = arith.mulf %284, %278 : vector<16x64xf32>
    %286 = vector.extract_strided_slice %174 {offsets = [192, 0], sizes = [16, 64], strides = [1, 1]} : vector<256x64xf32> to vector<16x64xf32>
    %287 = arith.addf %285, %286 : vector<16x64xf32>
    %288 = vector.extract_strided_slice %172 {offsets = [192, 0], sizes = [16, 1], strides = [1, 1]} : vector<256x1xf32> to vector<16x1xf32>
    %289 = vector.broadcast %288 : vector<16x1xf32> to vector<16x64xf32>
    %290 = arith.mulf %287, %289 : vector<16x64xf32>
    %cst_59 = arith.constant dense<0.000000e+00> : vector<64xf32>
    %291 = vector.multi_reduction <add>, %290, %cst_59 [0] : vector<16x64xf32> to vector<64xf32>
    %292 = vector.shape_cast %291 : vector<64xf32> to vector<1x64xf32>
    %293 = vector.extract_strided_slice %164 {offsets = [208, 0], sizes = [16, 64], strides = [1, 1]} : vector<256x64xf32> to vector<16x64xf32>
    %294 = arith.mulf %293, %287 : vector<16x64xf32>
    %295 = vector.extract_strided_slice %174 {offsets = [208, 0], sizes = [16, 64], strides = [1, 1]} : vector<256x64xf32> to vector<16x64xf32>
    %296 = arith.addf %294, %295 : vector<16x64xf32>
    %297 = vector.extract_strided_slice %172 {offsets = [208, 0], sizes = [16, 1], strides = [1, 1]} : vector<256x1xf32> to vector<16x1xf32>
    %298 = vector.broadcast %297 : vector<16x1xf32> to vector<16x64xf32>
    %299 = arith.mulf %296, %298 : vector<16x64xf32>
    %cst_60 = arith.constant dense<0.000000e+00> : vector<64xf32>
    %300 = vector.multi_reduction <add>, %299, %cst_60 [0] : vector<16x64xf32> to vector<64xf32>
    %301 = vector.shape_cast %300 : vector<64xf32> to vector<1x64xf32>
    %302 = vector.extract_strided_slice %164 {offsets = [224, 0], sizes = [16, 64], strides = [1, 1]} : vector<256x64xf32> to vector<16x64xf32>
    %303 = arith.mulf %302, %296 : vector<16x64xf32>
    %304 = vector.extract_strided_slice %174 {offsets = [224, 0], sizes = [16, 64], strides = [1, 1]} : vector<256x64xf32> to vector<16x64xf32>
    %305 = arith.addf %303, %304 : vector<16x64xf32>
    %306 = vector.extract_strided_slice %172 {offsets = [224, 0], sizes = [16, 1], strides = [1, 1]} : vector<256x1xf32> to vector<16x1xf32>
    %307 = vector.broadcast %306 : vector<16x1xf32> to vector<16x64xf32>
    %308 = arith.mulf %305, %307 : vector<16x64xf32>
    %cst_61 = arith.constant dense<0.000000e+00> : vector<64xf32>
    %309 = vector.multi_reduction <add>, %308, %cst_61 [0] : vector<16x64xf32> to vector<64xf32>
    %310 = vector.shape_cast %309 : vector<64xf32> to vector<1x64xf32>
    %311 = vector.extract_strided_slice %164 {offsets = [240, 0], sizes = [16, 64], strides = [1, 1]} : vector<256x64xf32> to vector<16x64xf32>
    %312 = arith.mulf %311, %305 : vector<16x64xf32>
    %313 = vector.extract_strided_slice %174 {offsets = [240, 0], sizes = [16, 64], strides = [1, 1]} : vector<256x64xf32> to vector<16x64xf32>
    %314 = arith.addf %312, %313 : vector<16x64xf32>
    %315 = vector.extract_strided_slice %172 {offsets = [240, 0], sizes = [16, 1], strides = [1, 1]} : vector<256x1xf32> to vector<16x1xf32>
    %316 = vector.broadcast %315 : vector<16x1xf32> to vector<16x64xf32>
    %317 = arith.mulf %314, %316 : vector<16x64xf32>
    %cst_62 = arith.constant dense<0.000000e+00> : vector<64xf32>
    %318 = vector.multi_reduction <add>, %317, %cst_62 [0] : vector<16x64xf32> to vector<64xf32>
    %319 = vector.shape_cast %318 : vector<64xf32> to vector<1x64xf32>
    %320 = tpu.concatenate %184, %193, %202, %211, %220, %229, %238, %247, %256, %265, %274, %283, %292, %301, %310, %319 in 0 : vector<1x64xf32>, vector<1x64xf32>, vector<1x64xf32>, vector<1x64xf32>, vector<1x64xf32>, vector<1x64xf32>, vector<1x64xf32>, vector<1x64xf32>, vector<1x64xf32>, vector<1x64xf32>, vector<1x64xf32>, vector<1x64xf32>, vector<1x64xf32>, vector<1x64xf32>, vector<1x64xf32>, vector<1x64xf32> -> vector<16x64xf32>
    %321 = vector.extract_strided_slice %29 {offsets = [6, 0], sizes = [1, 64], strides = [1, 1]} : vector<7x64xf32> to vector<1x64xf32>
    %322 = vector.shape_cast %321 : vector<1x64xf32> to vector<64xf32>
    %323 = vector.shape_cast %322 : vector<64xf32> to vector<1x64xf32>
    %324 = vector.broadcast %323 : vector<1x64xf32> to vector<16x64xf32>
    %325 = arith.mulf %324, %115 : vector<16x64xf32>
    %326 = arith.addf %320, %325 : vector<16x64xf32>
    %327 = arith.negf %72 : vector<16x64xf32>
    %328 = math.exp %327 : vector<16x64xf32>
    %cst_63 = arith.constant 1.000000e+00 : f32
    %329 = vector.broadcast %cst_63 : f32 to vector<16x64xf32>
    %330 = arith.addf %329, %328 : vector<16x64xf32>
    %331 = arith.divf %329, %330 : vector<16x64xf32>
    %332 = arith.mulf %72, %331 : vector<16x64xf32>
    %333 = arith.mulf %326, %332 : vector<16x64xf32>
    %334 = arith.truncf %333 : vector<16x64xf32> to vector<16x64xbf16>
    %cst_64 = arith.constant dense<0.000000e+00> : vector<16x32xf32>
    %335 = tpu.matmul %334, %42, %cst_64 {dimension_numbers = #tpu.dot_dimension_numbers<[1], [0], [0], [1], [0, 0, 1, 1], [], []>} : vector<16x64xbf16>, vector<64x32xbf16>, vector<16x32xf32> -> vector<16x32xf32>
    %336 = arith.addf %335, %1 : vector<16x32xf32>
    %c1 = arith.constant 1 : index
    %c0_65 = arith.constant 0 : index
    %c0_66 = arith.constant 0 : index
    %337 = vector.load %arg2[%c1, %c0_65, %c0_66] : memref<3x2x32xf32, #tpu.memory_space<vmem>>, vector<1x2x32xf32>
    %338 = vector.shape_cast %337 : vector<1x2x32xf32> to vector<2x32xf32>
    %c1_67 = arith.constant 1 : index
    %c0_68 = arith.constant 0 : index
    %c0_69 = arith.constant 0 : index
    %339 = vector.load %arg3[%c1_67, %c0_68, %c0_69] : memref<2x7x64xf32, #tpu.memory_space<vmem>>, vector<1x7x64xf32>
    %340 = vector.shape_cast %339 : vector<1x7x64xf32> to vector<7x64xf32>
    %c1_70 = arith.constant 1 : index
    %c0_71 = arith.constant 0 : index
    %c0_72 = arith.constant 0 : index
    %341 = vector.load %arg4[%c1_70, %c0_71, %c0_72] : memref<2x32x128xf32, #tpu.memory_space<vmem>>, vector<1x32x128xf32>
    %342 = vector.shape_cast %341 : vector<1x32x128xf32> to vector<32x128xf32>
    %343 = arith.truncf %342 : vector<32x128xf32> to vector<32x128xbf16>
    %c1_73 = arith.constant 1 : index
    %c0_74 = arith.constant 0 : index
    %c0_75 = arith.constant 0 : index
    %344 = vector.load %arg5[%c1_73, %c0_74, %c0_75] : memref<2x64x34xf32, #tpu.memory_space<vmem>>, vector<1x64x34xf32>
    %345 = vector.shape_cast %344 : vector<1x64x34xf32> to vector<64x34xf32>
    %346 = arith.truncf %345 : vector<64x34xf32> to vector<64x34xbf16>
    %c1_76 = arith.constant 1 : index
    %c0_77 = arith.constant 0 : index
    %c0_78 = arith.constant 0 : index
    %347 = vector.load %arg6[%c1_76, %c0_77, %c0_78] : memref<2x2x64xf32, #tpu.memory_space<vmem>>, vector<1x2x64xf32>
    %348 = vector.shape_cast %347 : vector<1x2x64xf32> to vector<2x64xf32>
    %c1_79 = arith.constant 1 : index
    %c0_80 = arith.constant 0 : index
    %c0_81 = arith.constant 0 : index
    %349 = vector.load %arg7[%c1_79, %c0_80, %c0_81] : memref<2x16x64xf32, #tpu.memory_space<vmem>>, vector<1x16x64xf32>
    %350 = vector.shape_cast %349 : vector<1x16x64xf32> to vector<16x64xf32>
    %c1_82 = arith.constant 1 : index
    %c0_83 = arith.constant 0 : index
    %c0_84 = arith.constant 0 : index
    %351 = vector.load %arg8[%c1_82, %c0_83, %c0_84] : memref<2x64x32xf32, #tpu.memory_space<vmem>>, vector<1x64x32xf32>
    %352 = vector.shape_cast %351 : vector<1x64x32xf32> to vector<64x32xf32>
    %353 = arith.truncf %352 : vector<64x32xf32> to vector<64x32xbf16>
    %354 = vector.extract_strided_slice %338 {offsets = [0, 0], sizes = [1, 32], strides = [1, 1]} : vector<2x32xf32> to vector<1x32xf32>
    %355 = vector.shape_cast %354 : vector<1x32xf32> to vector<32xf32>
    %356 = vector.extract_strided_slice %338 {offsets = [1, 0], sizes = [1, 32], strides = [1, 1]} : vector<2x32xf32> to vector<1x32xf32>
    %357 = vector.shape_cast %356 : vector<1x32xf32> to vector<32xf32>
    %cst_85 = arith.constant dense<0.000000e+00> : vector<16xf32>
    %358 = vector.multi_reduction <add>, %336, %cst_85 [1] : vector<16x32xf32> to vector<16xf32>
    %359 = vector.shape_cast %358 : vector<16xf32> to vector<16x1xf32>
    %cst_86 = arith.constant 3.200000e+01 : f32
    %360 = vector.broadcast %cst_86 : f32 to vector<16x1xf32>
    %361 = arith.divf %359, %360 : vector<16x1xf32>
    %362 = vector.broadcast %361 : vector<16x1xf32> to vector<16x32xf32>
    %363 = arith.subf %336, %362 : vector<16x32xf32>
    %364 = arith.mulf %363, %363 : vector<16x32xf32>
    %cst_87 = arith.constant dense<0.000000e+00> : vector<16xf32>
    %365 = vector.multi_reduction <add>, %364, %cst_87 [1] : vector<16x32xf32> to vector<16xf32>
    %366 = vector.shape_cast %365 : vector<16xf32> to vector<16x1xf32>
    %cst_88 = arith.constant 3.200000e+01 : f32
    %367 = vector.broadcast %cst_88 : f32 to vector<16x1xf32>
    %368 = arith.divf %366, %367 : vector<16x1xf32>
    %cst_89 = arith.constant 9.99999974E-6 : f32
    %369 = vector.broadcast %cst_89 : f32 to vector<16x1xf32>
    %370 = arith.addf %368, %369 : vector<16x1xf32>
    %371 = math.rsqrt %370 : vector<16x1xf32>
    %372 = vector.broadcast %371 : vector<16x1xf32> to vector<16x32xf32>
    %373 = arith.mulf %363, %372 : vector<16x32xf32>
    %374 = vector.shape_cast %355 : vector<32xf32> to vector<1x32xf32>
    %375 = vector.broadcast %374 : vector<1x32xf32> to vector<16x32xf32>
    %376 = arith.mulf %373, %375 : vector<16x32xf32>
    %377 = vector.shape_cast %357 : vector<32xf32> to vector<1x32xf32>
    %378 = vector.broadcast %377 : vector<1x32xf32> to vector<16x32xf32>
    %379 = arith.addf %376, %378 : vector<16x32xf32>
    %380 = arith.truncf %379 : vector<16x32xf32> to vector<16x32xbf16>
    %cst_90 = arith.constant dense<0.000000e+00> : vector<16x128xf32>
    %381 = tpu.matmul %380, %343, %cst_90 {dimension_numbers = #tpu.dot_dimension_numbers<[1], [0], [0], [1], [0, 0, 1, 1], [], []>} : vector<16x32xbf16>, vector<32x128xbf16>, vector<16x128xf32> -> vector<16x128xf32>
    %382 = vector.extract_strided_slice %381 {offsets = [0, 0], sizes = [16, 64], strides = [1, 1]} : vector<16x128xf32> to vector<16x64xf32>
    %383 = vector.extract_strided_slice %381 {offsets = [0, 64], sizes = [16, 64], strides = [1, 1]} : vector<16x128xf32> to vector<16x64xf32>
    %384 = vector.extract_strided_slice %340 {offsets = [3, 0], sizes = [1, 64], strides = [1, 1]} : vector<7x64xf32> to vector<1x64xf32>
    %385 = vector.shape_cast %384 : vector<1x64xf32> to vector<64xf32>
    %386 = vector.shape_cast %385 : vector<64xf32> to vector<1x64xf32>
    %387 = vector.broadcast %386 : vector<1x64xf32> to vector<16x64xf32>
    %388 = arith.mulf %382, %387 : vector<16x64xf32>
    %389 = vector.extract_strided_slice %340 {offsets = [4, 0], sizes = [1, 64], strides = [1, 1]} : vector<7x64xf32> to vector<1x64xf32>
    %390 = vector.shape_cast %389 : vector<1x64xf32> to vector<64xf32>
    %391 = vector.shape_cast %390 : vector<64xf32> to vector<1x64xf32>
    %392 = vector.broadcast %391 : vector<1x64xf32> to vector<16x64xf32>
    %393 = arith.addf %388, %392 : vector<16x64xf32>
    %cst_91 = arith.constant 0.000000e+00 : f32
    %394 = vector.broadcast %cst_91 : f32 to vector<3x64xf32>
    %395 = vector.extract_strided_slice %382 {offsets = [0, 0], sizes = [13, 64], strides = [1, 1]} : vector<16x64xf32> to vector<13x64xf32>
    %396 = tpu.concatenate %394, %395 in 0 : vector<3x64xf32>, vector<13x64xf32> -> vector<16x64xf32>
    %397 = vector.extract_strided_slice %340 {offsets = [0, 0], sizes = [1, 64], strides = [1, 1]} : vector<7x64xf32> to vector<1x64xf32>
    %398 = vector.shape_cast %397 : vector<1x64xf32> to vector<64xf32>
    %399 = vector.shape_cast %398 : vector<64xf32> to vector<1x64xf32>
    %400 = vector.broadcast %399 : vector<1x64xf32> to vector<16x64xf32>
    %401 = arith.mulf %396, %400 : vector<16x64xf32>
    %402 = arith.addf %393, %401 : vector<16x64xf32>
    %cst_92 = arith.constant 0.000000e+00 : f32
    %403 = vector.broadcast %cst_92 : f32 to vector<2x64xf32>
    %404 = vector.extract_strided_slice %382 {offsets = [0, 0], sizes = [14, 64], strides = [1, 1]} : vector<16x64xf32> to vector<14x64xf32>
    %405 = tpu.concatenate %403, %404 in 0 : vector<2x64xf32>, vector<14x64xf32> -> vector<16x64xf32>
    %406 = vector.extract_strided_slice %340 {offsets = [1, 0], sizes = [1, 64], strides = [1, 1]} : vector<7x64xf32> to vector<1x64xf32>
    %407 = vector.shape_cast %406 : vector<1x64xf32> to vector<64xf32>
    %408 = vector.shape_cast %407 : vector<64xf32> to vector<1x64xf32>
    %409 = vector.broadcast %408 : vector<1x64xf32> to vector<16x64xf32>
    %410 = arith.mulf %405, %409 : vector<16x64xf32>
    %411 = arith.addf %402, %410 : vector<16x64xf32>
    %cst_93 = arith.constant 0.000000e+00 : f32
    %412 = vector.broadcast %cst_93 : f32 to vector<1x64xf32>
    %413 = vector.extract_strided_slice %382 {offsets = [0, 0], sizes = [15, 64], strides = [1, 1]} : vector<16x64xf32> to vector<15x64xf32>
    %414 = tpu.concatenate %412, %413 in 0 : vector<1x64xf32>, vector<15x64xf32> -> vector<16x64xf32>
    %415 = vector.extract_strided_slice %340 {offsets = [2, 0], sizes = [1, 64], strides = [1, 1]} : vector<7x64xf32> to vector<1x64xf32>
    %416 = vector.shape_cast %415 : vector<1x64xf32> to vector<64xf32>
    %417 = vector.shape_cast %416 : vector<64xf32> to vector<1x64xf32>
    %418 = vector.broadcast %417 : vector<1x64xf32> to vector<16x64xf32>
    %419 = arith.mulf %414, %418 : vector<16x64xf32>
    %420 = arith.addf %411, %419 : vector<16x64xf32>
    %421 = arith.negf %420 : vector<16x64xf32>
    %422 = math.exp %421 : vector<16x64xf32>
    %cst_94 = arith.constant 1.000000e+00 : f32
    %423 = vector.broadcast %cst_94 : f32 to vector<16x64xf32>
    %424 = arith.addf %423, %422 : vector<16x64xf32>
    %425 = arith.divf %423, %424 : vector<16x64xf32>
    %426 = arith.mulf %420, %425 : vector<16x64xf32>
    %427 = arith.truncf %426 : vector<16x64xf32> to vector<16x64xbf16>
    %cst_95 = arith.constant dense<0.000000e+00> : vector<16x34xf32>
    %428 = tpu.matmul %427, %346, %cst_95 {dimension_numbers = #tpu.dot_dimension_numbers<[1], [0], [0], [1], [0, 0, 1, 1], [], []>} : vector<16x64xbf16>, vector<64x34xbf16>, vector<16x34xf32> -> vector<16x34xf32>
    %429 = vector.extract_strided_slice %428 {offsets = [0, 0], sizes = [16, 2], strides = [1, 1]} : vector<16x34xf32> to vector<16x2xf32>
    %430 = vector.extract_strided_slice %428 {offsets = [0, 2], sizes = [16, 16], strides = [1, 1]} : vector<16x34xf32> to vector<16x16xf32>
    %431 = vector.extract_strided_slice %428 {offsets = [0, 18], sizes = [16, 16], strides = [1, 1]} : vector<16x34xf32> to vector<16x16xf32>
    %432 = vector.extract_strided_slice %340 {offsets = [5, 0], sizes = [1, 64], strides = [1, 1]} : vector<7x64xf32> to vector<1x64xf32>
    %433 = vector.shape_cast %432 : vector<1x64xf32> to vector<64xf32>
    %434 = vector.shape_cast %433 : vector<64xf32> to vector<1x64xf32>
    %435 = vector.shape_cast %434 : vector<1x64xf32> to vector<1x64xf32>
    %436 = vector.broadcast %435 : vector<1x64xf32> to vector<16x64xf32>
    %437 = vector.extract_strided_slice %429 {offsets = [0, 0], sizes = [16, 1], strides = [1, 1]} : vector<16x2xf32> to vector<16x1xf32>
    %438 = vector.extract_strided_slice %348 {offsets = [0, 0], sizes = [1, 64], strides = [1, 1]} : vector<2x64xf32> to vector<1x64xf32>
    %439 = vector.shape_cast %438 : vector<1x64xf32> to vector<64xf32>
    %440 = vector.shape_cast %439 : vector<64xf32> to vector<1x64xf32>
    %441 = vector.broadcast %437 : vector<16x1xf32> to vector<16x64xf32>
    %442 = vector.broadcast %440 : vector<1x64xf32> to vector<16x64xf32>
    %443 = arith.mulf %441, %442 : vector<16x64xf32>
    %444 = arith.addf %436, %443 : vector<16x64xf32>
    %445 = vector.extract_strided_slice %429 {offsets = [0, 1], sizes = [16, 1], strides = [1, 1]} : vector<16x2xf32> to vector<16x1xf32>
    %446 = vector.extract_strided_slice %348 {offsets = [1, 0], sizes = [1, 64], strides = [1, 1]} : vector<2x64xf32> to vector<1x64xf32>
    %447 = vector.shape_cast %446 : vector<1x64xf32> to vector<64xf32>
    %448 = vector.shape_cast %447 : vector<64xf32> to vector<1x64xf32>
    %449 = vector.broadcast %445 : vector<16x1xf32> to vector<16x64xf32>
    %450 = vector.broadcast %448 : vector<1x64xf32> to vector<16x64xf32>
    %451 = arith.mulf %449, %450 : vector<16x64xf32>
    %452 = arith.addf %444, %451 : vector<16x64xf32>
    %cst_96 = arith.constant 0.000000e+00 : f32
    %453 = vector.broadcast %cst_96 : f32 to vector<16x64xf32>
    %454 = arith.maximumf %452, %453 : vector<16x64xf32>
    %455 = vector.broadcast %cst_96 : f32 to vector<16x64xf32>
    %456 = arith.subf %452, %455 : vector<16x64xf32>
    %457 = arith.cmpf one, %456, %456 : vector<16x64xf32>
    %458 = vector.broadcast %cst_96 : f32 to vector<16x64xf32>
    %459 = arith.addf %452, %458 : vector<16x64xf32>
    %460 = math.absf %456 : vector<16x64xf32>
    %cst_97 = arith.constant 0.000000e+00 : f32
    %461 = vector.broadcast %cst_97 : f32 to vector<16x64xf32>
    %462 = arith.subf %461, %460 : vector<16x64xf32>
    %463 = math.exp %462 : vector<16x64xf32>
    %464 = math.log1p %463 : vector<16x64xf32>
    %465 = arith.addf %454, %464 : vector<16x64xf32>
    %466 = arith.select %457, %459, %465 : vector<16x64xi1>, vector<16x64xf32>
    %467 = math.exp %350 : vector<16x64xf32>
    %cst_98 = arith.constant 0.000000e+00 : f32
    %468 = vector.broadcast %cst_98 : f32 to vector<16x64xf32>
    %469 = arith.subf %468, %467 : vector<16x64xf32>
    %cst_99 = arith.constant dense<0.000000e+00> : vector<256x64xf32>
    %470 = tpu.matmul %13, %466, %cst_99 {dimension_numbers = #tpu.dot_dimension_numbers<[1], [0], [0], [1], [0, 0, 1, 1], [], []>} : vector<256x16xf32>, vector<16x64xf32>, vector<256x64xf32> -> vector<256x64xf32>
    %471 = arith.mulf %466, %426 : vector<16x64xf32>
    %cst_100 = arith.constant dense<0.000000e+00> : vector<256x64xf32>
    %472 = tpu.matmul %13, %471, %cst_100 {dimension_numbers = #tpu.dot_dimension_numbers<[1], [0], [0], [1], [0, 0, 1, 1], [], []>} : vector<256x16xf32>, vector<16x64xf32>, vector<256x64xf32> -> vector<256x64xf32>
    %cst_101 = arith.constant dense<0.000000e+00> : vector<256x64xf32>
    %473 = tpu.matmul %25, %469, %cst_101 {dimension_numbers = #tpu.dot_dimension_numbers<[1], [0], [0], [1], [0, 0, 1, 1], [], []>} : vector<256x16xf32>, vector<16x64xf32>, vector<256x64xf32> -> vector<256x64xf32>
    %474 = arith.mulf %470, %473 : vector<256x64xf32>
    %475 = math.exp %474 : vector<256x64xf32>
    %cst_102 = arith.constant dense<0.000000e+00> : vector<256x16xf32>
    %476 = tpu.matmul %13, %430, %cst_102 {dimension_numbers = #tpu.dot_dimension_numbers<[1], [0], [0], [1], [0, 0, 1, 1], [], []>} : vector<256x16xf32>, vector<16x16xf32>, vector<256x16xf32> -> vector<256x16xf32>
    %477 = arith.mulf %476, %25 : vector<256x16xf32>
    %cst_103 = arith.constant dense<0.000000e+00> : vector<256xf32>
    %478 = vector.multi_reduction <add>, %477, %cst_103 [1] : vector<256x16xf32> to vector<256xf32>
    %479 = vector.shape_cast %478 : vector<256xf32> to vector<256x1xf32>
    %cst_104 = arith.constant dense<0.000000e+00> : vector<256x16xf32>
    %480 = tpu.matmul %13, %431, %cst_104 {dimension_numbers = #tpu.dot_dimension_numbers<[1], [0], [0], [1], [0, 0, 1, 1], [], []>} : vector<256x16xf32>, vector<16x16xf32>, vector<256x16xf32> -> vector<256x16xf32>
    %481 = arith.mulf %480, %25 : vector<256x16xf32>
    %cst_105 = arith.constant dense<0.000000e+00> : vector<256xf32>
    %482 = vector.multi_reduction <add>, %481, %cst_105 [1] : vector<256x16xf32> to vector<256xf32>
    %483 = vector.shape_cast %482 : vector<256xf32> to vector<256x1xf32>
    %484 = vector.broadcast %479 : vector<256x1xf32> to vector<256x64xf32>
    %485 = arith.mulf %472, %484 : vector<256x64xf32>
    %cst_106 = arith.constant 0.000000e+00 : f32
    %486 = vector.broadcast %cst_106 : f32 to vector<16x64xf32>
    %487 = vector.extract_strided_slice %475 {offsets = [0, 0], sizes = [16, 64], strides = [1, 1]} : vector<256x64xf32> to vector<16x64xf32>
    %488 = arith.mulf %487, %486 : vector<16x64xf32>
    %489 = vector.extract_strided_slice %485 {offsets = [0, 0], sizes = [16, 64], strides = [1, 1]} : vector<256x64xf32> to vector<16x64xf32>
    %490 = arith.addf %488, %489 : vector<16x64xf32>
    %491 = vector.extract_strided_slice %483 {offsets = [0, 0], sizes = [16, 1], strides = [1, 1]} : vector<256x1xf32> to vector<16x1xf32>
    %492 = vector.broadcast %491 : vector<16x1xf32> to vector<16x64xf32>
    %493 = arith.mulf %490, %492 : vector<16x64xf32>
    %cst_107 = arith.constant dense<0.000000e+00> : vector<64xf32>
    %494 = vector.multi_reduction <add>, %493, %cst_107 [0] : vector<16x64xf32> to vector<64xf32>
    %495 = vector.shape_cast %494 : vector<64xf32> to vector<1x64xf32>
    %496 = vector.extract_strided_slice %475 {offsets = [16, 0], sizes = [16, 64], strides = [1, 1]} : vector<256x64xf32> to vector<16x64xf32>
    %497 = arith.mulf %496, %490 : vector<16x64xf32>
    %498 = vector.extract_strided_slice %485 {offsets = [16, 0], sizes = [16, 64], strides = [1, 1]} : vector<256x64xf32> to vector<16x64xf32>
    %499 = arith.addf %497, %498 : vector<16x64xf32>
    %500 = vector.extract_strided_slice %483 {offsets = [16, 0], sizes = [16, 1], strides = [1, 1]} : vector<256x1xf32> to vector<16x1xf32>
    %501 = vector.broadcast %500 : vector<16x1xf32> to vector<16x64xf32>
    %502 = arith.mulf %499, %501 : vector<16x64xf32>
    %cst_108 = arith.constant dense<0.000000e+00> : vector<64xf32>
    %503 = vector.multi_reduction <add>, %502, %cst_108 [0] : vector<16x64xf32> to vector<64xf32>
    %504 = vector.shape_cast %503 : vector<64xf32> to vector<1x64xf32>
    %505 = vector.extract_strided_slice %475 {offsets = [32, 0], sizes = [16, 64], strides = [1, 1]} : vector<256x64xf32> to vector<16x64xf32>
    %506 = arith.mulf %505, %499 : vector<16x64xf32>
    %507 = vector.extract_strided_slice %485 {offsets = [32, 0], sizes = [16, 64], strides = [1, 1]} : vector<256x64xf32> to vector<16x64xf32>
    %508 = arith.addf %506, %507 : vector<16x64xf32>
    %509 = vector.extract_strided_slice %483 {offsets = [32, 0], sizes = [16, 1], strides = [1, 1]} : vector<256x1xf32> to vector<16x1xf32>
    %510 = vector.broadcast %509 : vector<16x1xf32> to vector<16x64xf32>
    %511 = arith.mulf %508, %510 : vector<16x64xf32>
    %cst_109 = arith.constant dense<0.000000e+00> : vector<64xf32>
    %512 = vector.multi_reduction <add>, %511, %cst_109 [0] : vector<16x64xf32> to vector<64xf32>
    %513 = vector.shape_cast %512 : vector<64xf32> to vector<1x64xf32>
    %514 = vector.extract_strided_slice %475 {offsets = [48, 0], sizes = [16, 64], strides = [1, 1]} : vector<256x64xf32> to vector<16x64xf32>
    %515 = arith.mulf %514, %508 : vector<16x64xf32>
    %516 = vector.extract_strided_slice %485 {offsets = [48, 0], sizes = [16, 64], strides = [1, 1]} : vector<256x64xf32> to vector<16x64xf32>
    %517 = arith.addf %515, %516 : vector<16x64xf32>
    %518 = vector.extract_strided_slice %483 {offsets = [48, 0], sizes = [16, 1], strides = [1, 1]} : vector<256x1xf32> to vector<16x1xf32>
    %519 = vector.broadcast %518 : vector<16x1xf32> to vector<16x64xf32>
    %520 = arith.mulf %517, %519 : vector<16x64xf32>
    %cst_110 = arith.constant dense<0.000000e+00> : vector<64xf32>
    %521 = vector.multi_reduction <add>, %520, %cst_110 [0] : vector<16x64xf32> to vector<64xf32>
    %522 = vector.shape_cast %521 : vector<64xf32> to vector<1x64xf32>
    %523 = vector.extract_strided_slice %475 {offsets = [64, 0], sizes = [16, 64], strides = [1, 1]} : vector<256x64xf32> to vector<16x64xf32>
    %524 = arith.mulf %523, %517 : vector<16x64xf32>
    %525 = vector.extract_strided_slice %485 {offsets = [64, 0], sizes = [16, 64], strides = [1, 1]} : vector<256x64xf32> to vector<16x64xf32>
    %526 = arith.addf %524, %525 : vector<16x64xf32>
    %527 = vector.extract_strided_slice %483 {offsets = [64, 0], sizes = [16, 1], strides = [1, 1]} : vector<256x1xf32> to vector<16x1xf32>
    %528 = vector.broadcast %527 : vector<16x1xf32> to vector<16x64xf32>
    %529 = arith.mulf %526, %528 : vector<16x64xf32>
    %cst_111 = arith.constant dense<0.000000e+00> : vector<64xf32>
    %530 = vector.multi_reduction <add>, %529, %cst_111 [0] : vector<16x64xf32> to vector<64xf32>
    %531 = vector.shape_cast %530 : vector<64xf32> to vector<1x64xf32>
    %532 = vector.extract_strided_slice %475 {offsets = [80, 0], sizes = [16, 64], strides = [1, 1]} : vector<256x64xf32> to vector<16x64xf32>
    %533 = arith.mulf %532, %526 : vector<16x64xf32>
    %534 = vector.extract_strided_slice %485 {offsets = [80, 0], sizes = [16, 64], strides = [1, 1]} : vector<256x64xf32> to vector<16x64xf32>
    %535 = arith.addf %533, %534 : vector<16x64xf32>
    %536 = vector.extract_strided_slice %483 {offsets = [80, 0], sizes = [16, 1], strides = [1, 1]} : vector<256x1xf32> to vector<16x1xf32>
    %537 = vector.broadcast %536 : vector<16x1xf32> to vector<16x64xf32>
    %538 = arith.mulf %535, %537 : vector<16x64xf32>
    %cst_112 = arith.constant dense<0.000000e+00> : vector<64xf32>
    %539 = vector.multi_reduction <add>, %538, %cst_112 [0] : vector<16x64xf32> to vector<64xf32>
    %540 = vector.shape_cast %539 : vector<64xf32> to vector<1x64xf32>
    %541 = vector.extract_strided_slice %475 {offsets = [96, 0], sizes = [16, 64], strides = [1, 1]} : vector<256x64xf32> to vector<16x64xf32>
    %542 = arith.mulf %541, %535 : vector<16x64xf32>
    %543 = vector.extract_strided_slice %485 {offsets = [96, 0], sizes = [16, 64], strides = [1, 1]} : vector<256x64xf32> to vector<16x64xf32>
    %544 = arith.addf %542, %543 : vector<16x64xf32>
    %545 = vector.extract_strided_slice %483 {offsets = [96, 0], sizes = [16, 1], strides = [1, 1]} : vector<256x1xf32> to vector<16x1xf32>
    %546 = vector.broadcast %545 : vector<16x1xf32> to vector<16x64xf32>
    %547 = arith.mulf %544, %546 : vector<16x64xf32>
    %cst_113 = arith.constant dense<0.000000e+00> : vector<64xf32>
    %548 = vector.multi_reduction <add>, %547, %cst_113 [0] : vector<16x64xf32> to vector<64xf32>
    %549 = vector.shape_cast %548 : vector<64xf32> to vector<1x64xf32>
    %550 = vector.extract_strided_slice %475 {offsets = [112, 0], sizes = [16, 64], strides = [1, 1]} : vector<256x64xf32> to vector<16x64xf32>
    %551 = arith.mulf %550, %544 : vector<16x64xf32>
    %552 = vector.extract_strided_slice %485 {offsets = [112, 0], sizes = [16, 64], strides = [1, 1]} : vector<256x64xf32> to vector<16x64xf32>
    %553 = arith.addf %551, %552 : vector<16x64xf32>
    %554 = vector.extract_strided_slice %483 {offsets = [112, 0], sizes = [16, 1], strides = [1, 1]} : vector<256x1xf32> to vector<16x1xf32>
    %555 = vector.broadcast %554 : vector<16x1xf32> to vector<16x64xf32>
    %556 = arith.mulf %553, %555 : vector<16x64xf32>
    %cst_114 = arith.constant dense<0.000000e+00> : vector<64xf32>
    %557 = vector.multi_reduction <add>, %556, %cst_114 [0] : vector<16x64xf32> to vector<64xf32>
    %558 = vector.shape_cast %557 : vector<64xf32> to vector<1x64xf32>
    %559 = vector.extract_strided_slice %475 {offsets = [128, 0], sizes = [16, 64], strides = [1, 1]} : vector<256x64xf32> to vector<16x64xf32>
    %560 = arith.mulf %559, %553 : vector<16x64xf32>
    %561 = vector.extract_strided_slice %485 {offsets = [128, 0], sizes = [16, 64], strides = [1, 1]} : vector<256x64xf32> to vector<16x64xf32>
    %562 = arith.addf %560, %561 : vector<16x64xf32>
    %563 = vector.extract_strided_slice %483 {offsets = [128, 0], sizes = [16, 1], strides = [1, 1]} : vector<256x1xf32> to vector<16x1xf32>
    %564 = vector.broadcast %563 : vector<16x1xf32> to vector<16x64xf32>
    %565 = arith.mulf %562, %564 : vector<16x64xf32>
    %cst_115 = arith.constant dense<0.000000e+00> : vector<64xf32>
    %566 = vector.multi_reduction <add>, %565, %cst_115 [0] : vector<16x64xf32> to vector<64xf32>
    %567 = vector.shape_cast %566 : vector<64xf32> to vector<1x64xf32>
    %568 = vector.extract_strided_slice %475 {offsets = [144, 0], sizes = [16, 64], strides = [1, 1]} : vector<256x64xf32> to vector<16x64xf32>
    %569 = arith.mulf %568, %562 : vector<16x64xf32>
    %570 = vector.extract_strided_slice %485 {offsets = [144, 0], sizes = [16, 64], strides = [1, 1]} : vector<256x64xf32> to vector<16x64xf32>
    %571 = arith.addf %569, %570 : vector<16x64xf32>
    %572 = vector.extract_strided_slice %483 {offsets = [144, 0], sizes = [16, 1], strides = [1, 1]} : vector<256x1xf32> to vector<16x1xf32>
    %573 = vector.broadcast %572 : vector<16x1xf32> to vector<16x64xf32>
    %574 = arith.mulf %571, %573 : vector<16x64xf32>
    %cst_116 = arith.constant dense<0.000000e+00> : vector<64xf32>
    %575 = vector.multi_reduction <add>, %574, %cst_116 [0] : vector<16x64xf32> to vector<64xf32>
    %576 = vector.shape_cast %575 : vector<64xf32> to vector<1x64xf32>
    %577 = vector.extract_strided_slice %475 {offsets = [160, 0], sizes = [16, 64], strides = [1, 1]} : vector<256x64xf32> to vector<16x64xf32>
    %578 = arith.mulf %577, %571 : vector<16x64xf32>
    %579 = vector.extract_strided_slice %485 {offsets = [160, 0], sizes = [16, 64], strides = [1, 1]} : vector<256x64xf32> to vector<16x64xf32>
    %580 = arith.addf %578, %579 : vector<16x64xf32>
    %581 = vector.extract_strided_slice %483 {offsets = [160, 0], sizes = [16, 1], strides = [1, 1]} : vector<256x1xf32> to vector<16x1xf32>
    %582 = vector.broadcast %581 : vector<16x1xf32> to vector<16x64xf32>
    %583 = arith.mulf %580, %582 : vector<16x64xf32>
    %cst_117 = arith.constant dense<0.000000e+00> : vector<64xf32>
    %584 = vector.multi_reduction <add>, %583, %cst_117 [0] : vector<16x64xf32> to vector<64xf32>
    %585 = vector.shape_cast %584 : vector<64xf32> to vector<1x64xf32>
    %586 = vector.extract_strided_slice %475 {offsets = [176, 0], sizes = [16, 64], strides = [1, 1]} : vector<256x64xf32> to vector<16x64xf32>
    %587 = arith.mulf %586, %580 : vector<16x64xf32>
    %588 = vector.extract_strided_slice %485 {offsets = [176, 0], sizes = [16, 64], strides = [1, 1]} : vector<256x64xf32> to vector<16x64xf32>
    %589 = arith.addf %587, %588 : vector<16x64xf32>
    %590 = vector.extract_strided_slice %483 {offsets = [176, 0], sizes = [16, 1], strides = [1, 1]} : vector<256x1xf32> to vector<16x1xf32>
    %591 = vector.broadcast %590 : vector<16x1xf32> to vector<16x64xf32>
    %592 = arith.mulf %589, %591 : vector<16x64xf32>
    %cst_118 = arith.constant dense<0.000000e+00> : vector<64xf32>
    %593 = vector.multi_reduction <add>, %592, %cst_118 [0] : vector<16x64xf32> to vector<64xf32>
    %594 = vector.shape_cast %593 : vector<64xf32> to vector<1x64xf32>
    %595 = vector.extract_strided_slice %475 {offsets = [192, 0], sizes = [16, 64], strides = [1, 1]} : vector<256x64xf32> to vector<16x64xf32>
    %596 = arith.mulf %595, %589 : vector<16x64xf32>
    %597 = vector.extract_strided_slice %485 {offsets = [192, 0], sizes = [16, 64], strides = [1, 1]} : vector<256x64xf32> to vector<16x64xf32>
    %598 = arith.addf %596, %597 : vector<16x64xf32>
    %599 = vector.extract_strided_slice %483 {offsets = [192, 0], sizes = [16, 1], strides = [1, 1]} : vector<256x1xf32> to vector<16x1xf32>
    %600 = vector.broadcast %599 : vector<16x1xf32> to vector<16x64xf32>
    %601 = arith.mulf %598, %600 : vector<16x64xf32>
    %cst_119 = arith.constant dense<0.000000e+00> : vector<64xf32>
    %602 = vector.multi_reduction <add>, %601, %cst_119 [0] : vector<16x64xf32> to vector<64xf32>
    %603 = vector.shape_cast %602 : vector<64xf32> to vector<1x64xf32>
    %604 = vector.extract_strided_slice %475 {offsets = [208, 0], sizes = [16, 64], strides = [1, 1]} : vector<256x64xf32> to vector<16x64xf32>
    %605 = arith.mulf %604, %598 : vector<16x64xf32>
    %606 = vector.extract_strided_slice %485 {offsets = [208, 0], sizes = [16, 64], strides = [1, 1]} : vector<256x64xf32> to vector<16x64xf32>
    %607 = arith.addf %605, %606 : vector<16x64xf32>
    %608 = vector.extract_strided_slice %483 {offsets = [208, 0], sizes = [16, 1], strides = [1, 1]} : vector<256x1xf32> to vector<16x1xf32>
    %609 = vector.broadcast %608 : vector<16x1xf32> to vector<16x64xf32>
    %610 = arith.mulf %607, %609 : vector<16x64xf32>
    %cst_120 = arith.constant dense<0.000000e+00> : vector<64xf32>
    %611 = vector.multi_reduction <add>, %610, %cst_120 [0] : vector<16x64xf32> to vector<64xf32>
    %612 = vector.shape_cast %611 : vector<64xf32> to vector<1x64xf32>
    %613 = vector.extract_strided_slice %475 {offsets = [224, 0], sizes = [16, 64], strides = [1, 1]} : vector<256x64xf32> to vector<16x64xf32>
    %614 = arith.mulf %613, %607 : vector<16x64xf32>
    %615 = vector.extract_strided_slice %485 {offsets = [224, 0], sizes = [16, 64], strides = [1, 1]} : vector<256x64xf32> to vector<16x64xf32>
    %616 = arith.addf %614, %615 : vector<16x64xf32>
    %617 = vector.extract_strided_slice %483 {offsets = [224, 0], sizes = [16, 1], strides = [1, 1]} : vector<256x1xf32> to vector<16x1xf32>
    %618 = vector.broadcast %617 : vector<16x1xf32> to vector<16x64xf32>
    %619 = arith.mulf %616, %618 : vector<16x64xf32>
    %cst_121 = arith.constant dense<0.000000e+00> : vector<64xf32>
    %620 = vector.multi_reduction <add>, %619, %cst_121 [0] : vector<16x64xf32> to vector<64xf32>
    %621 = vector.shape_cast %620 : vector<64xf32> to vector<1x64xf32>
    %622 = vector.extract_strided_slice %475 {offsets = [240, 0], sizes = [16, 64], strides = [1, 1]} : vector<256x64xf32> to vector<16x64xf32>
    %623 = arith.mulf %622, %616 : vector<16x64xf32>
    %624 = vector.extract_strided_slice %485 {offsets = [240, 0], sizes = [16, 64], strides = [1, 1]} : vector<256x64xf32> to vector<16x64xf32>
    %625 = arith.addf %623, %624 : vector<16x64xf32>
    %626 = vector.extract_strided_slice %483 {offsets = [240, 0], sizes = [16, 1], strides = [1, 1]} : vector<256x1xf32> to vector<16x1xf32>
    %627 = vector.broadcast %626 : vector<16x1xf32> to vector<16x64xf32>
    %628 = arith.mulf %625, %627 : vector<16x64xf32>
    %cst_122 = arith.constant dense<0.000000e+00> : vector<64xf32>
    %629 = vector.multi_reduction <add>, %628, %cst_122 [0] : vector<16x64xf32> to vector<64xf32>
    %630 = vector.shape_cast %629 : vector<64xf32> to vector<1x64xf32>
    %631 = tpu.concatenate %495, %504, %513, %522, %531, %540, %549, %558, %567, %576, %585, %594, %603, %612, %621, %630 in 0 : vector<1x64xf32>, vector<1x64xf32>, vector<1x64xf32>, vector<1x64xf32>, vector<1x64xf32>, vector<1x64xf32>, vector<1x64xf32>, vector<1x64xf32>, vector<1x64xf32>, vector<1x64xf32>, vector<1x64xf32>, vector<1x64xf32>, vector<1x64xf32>, vector<1x64xf32>, vector<1x64xf32>, vector<1x64xf32> -> vector<16x64xf32>
    %632 = vector.extract_strided_slice %340 {offsets = [6, 0], sizes = [1, 64], strides = [1, 1]} : vector<7x64xf32> to vector<1x64xf32>
    %633 = vector.shape_cast %632 : vector<1x64xf32> to vector<64xf32>
    %634 = vector.shape_cast %633 : vector<64xf32> to vector<1x64xf32>
    %635 = vector.broadcast %634 : vector<1x64xf32> to vector<16x64xf32>
    %636 = arith.mulf %635, %426 : vector<16x64xf32>
    %637 = arith.addf %631, %636 : vector<16x64xf32>
    %638 = arith.negf %383 : vector<16x64xf32>
    %639 = math.exp %638 : vector<16x64xf32>
    %cst_123 = arith.constant 1.000000e+00 : f32
    %640 = vector.broadcast %cst_123 : f32 to vector<16x64xf32>
    %641 = arith.addf %640, %639 : vector<16x64xf32>
    %642 = arith.divf %640, %641 : vector<16x64xf32>
    %643 = arith.mulf %383, %642 : vector<16x64xf32>
    %644 = arith.mulf %637, %643 : vector<16x64xf32>
    %645 = arith.truncf %644 : vector<16x64xf32> to vector<16x64xbf16>
    %cst_124 = arith.constant dense<0.000000e+00> : vector<16x32xf32>
    %646 = tpu.matmul %645, %353, %cst_124 {dimension_numbers = #tpu.dot_dimension_numbers<[1], [0], [0], [1], [0, 0, 1, 1], [], []>} : vector<16x64xbf16>, vector<64x32xbf16>, vector<16x32xf32> -> vector<16x32xf32>
    %647 = arith.addf %646, %336 : vector<16x32xf32>
    %c2 = arith.constant 2 : index
    %c0_125 = arith.constant 0 : index
    %c0_126 = arith.constant 0 : index
    %648 = vector.load %arg2[%c2, %c0_125, %c0_126] : memref<3x2x32xf32, #tpu.memory_space<vmem>>, vector<1x2x32xf32>
    %649 = vector.shape_cast %648 : vector<1x2x32xf32> to vector<2x32xf32>
    %650 = vector.extract_strided_slice %649 {offsets = [0, 0], sizes = [1, 32], strides = [1, 1]} : vector<2x32xf32> to vector<1x32xf32>
    %651 = vector.shape_cast %650 : vector<1x32xf32> to vector<32xf32>
    %652 = vector.extract_strided_slice %649 {offsets = [1, 0], sizes = [1, 32], strides = [1, 1]} : vector<2x32xf32> to vector<1x32xf32>
    %653 = vector.shape_cast %652 : vector<1x32xf32> to vector<32xf32>
    %cst_127 = arith.constant dense<0.000000e+00> : vector<16xf32>
    %654 = vector.multi_reduction <add>, %647, %cst_127 [1] : vector<16x32xf32> to vector<16xf32>
    %655 = vector.shape_cast %654 : vector<16xf32> to vector<16x1xf32>
    %cst_128 = arith.constant 3.200000e+01 : f32
    %656 = vector.broadcast %cst_128 : f32 to vector<16x1xf32>
    %657 = arith.divf %655, %656 : vector<16x1xf32>
    %658 = vector.broadcast %657 : vector<16x1xf32> to vector<16x32xf32>
    %659 = arith.subf %647, %658 : vector<16x32xf32>
    %660 = arith.mulf %659, %659 : vector<16x32xf32>
    %cst_129 = arith.constant dense<0.000000e+00> : vector<16xf32>
    %661 = vector.multi_reduction <add>, %660, %cst_129 [1] : vector<16x32xf32> to vector<16xf32>
    %662 = vector.shape_cast %661 : vector<16xf32> to vector<16x1xf32>
    %cst_130 = arith.constant 3.200000e+01 : f32
    %663 = vector.broadcast %cst_130 : f32 to vector<16x1xf32>
    %664 = arith.divf %662, %663 : vector<16x1xf32>
    %cst_131 = arith.constant 9.99999974E-6 : f32
    %665 = vector.broadcast %cst_131 : f32 to vector<16x1xf32>
    %666 = arith.addf %664, %665 : vector<16x1xf32>
    %667 = math.rsqrt %666 : vector<16x1xf32>
    %668 = vector.broadcast %667 : vector<16x1xf32> to vector<16x32xf32>
    %669 = arith.mulf %659, %668 : vector<16x32xf32>
    %670 = vector.shape_cast %651 : vector<32xf32> to vector<1x32xf32>
    %671 = vector.broadcast %670 : vector<1x32xf32> to vector<16x32xf32>
    %672 = arith.mulf %669, %671 : vector<16x32xf32>
    %673 = vector.shape_cast %653 : vector<32xf32> to vector<1x32xf32>
    %674 = vector.broadcast %673 : vector<1x32xf32> to vector<16x32xf32>
    %675 = arith.addf %672, %674 : vector<16x32xf32>
    %c0_132 = arith.constant 0 : index
    %c0_133 = arith.constant 0 : index
    %c0_134 = arith.constant 0 : index
    %676 = vector.load %arg9[%c0_132, %c0_133, %c0_134] : memref<1x16x32xf32, #tpu.memory_space<vmem>>, vector<1x16x32xf32>
    %677 = vector.shape_cast %676 : vector<1x16x32xf32> to vector<16x32xf32>
    %678 = vector.shape_cast %675 : vector<16x32xf32> to vector<1x16x32xf32>
    tpu.vector_store %arg9[%c0_132, %c0_133, %c0_134], %678 {strides = array<i32>} : memref<1x16x32xf32, #tpu.memory_space<vmem>>, vector<1x16x32xf32>,
    return
  }
  func.func @transform_0(%arg0: i32) -> (i32, i32, i32) {
    %c0_i32 = arith.constant 0 : i32
    %c0_i32_0 = arith.constant 0 : i32
    %c0_i32_1 = arith.constant 0 : i32
    return %arg0, %c0_i32, %c0_i32_0 : i32, i32, i32
  }
  func.func @transform_1(%arg0: i32) -> (i32, i32, i32) {
    %c0_i32 = arith.constant 0 : i32
    %c0_i32_0 = arith.constant 0 : i32
    %c0_i32_1 = arith.constant 0 : i32
    %c0_i32_2 = arith.constant 0 : i32
    return %c0_i32, %c0_i32_0, %c0_i32_1 : i32, i32, i32
  }
  func.func @transform_2(%arg0: i32) -> (i32, i32, i32) {
    %c0_i32 = arith.constant 0 : i32
    %c0_i32_0 = arith.constant 0 : i32
    %c0_i32_1 = arith.constant 0 : i32
    %c0_i32_2 = arith.constant 0 : i32
    return %c0_i32, %c0_i32_0, %c0_i32_1 : i32, i32, i32
  }
  func.func @transform_3(%arg0: i32) -> (i32, i32, i32) {
    %c0_i32 = arith.constant 0 : i32
    %c0_i32_0 = arith.constant 0 : i32
    %c0_i32_1 = arith.constant 0 : i32
    %c0_i32_2 = arith.constant 0 : i32
    return %c0_i32, %c0_i32_0, %c0_i32_1 : i32, i32, i32
  }
  func.func @transform_4(%arg0: i32) -> (i32, i32, i32) {
    %c0_i32 = arith.constant 0 : i32
    %c0_i32_0 = arith.constant 0 : i32
    %c0_i32_1 = arith.constant 0 : i32
    %c0_i32_2 = arith.constant 0 : i32
    return %c0_i32, %c0_i32_0, %c0_i32_1 : i32, i32, i32
  }
  func.func @transform_5(%arg0: i32) -> (i32, i32, i32) {
    %c0_i32 = arith.constant 0 : i32
    %c0_i32_0 = arith.constant 0 : i32
    %c0_i32_1 = arith.constant 0 : i32
    %c0_i32_2 = arith.constant 0 : i32
    return %c0_i32, %c0_i32_0, %c0_i32_1 : i32, i32, i32
  }
  func.func @transform_6(%arg0: i32) -> (i32, i32, i32) {
    %c0_i32 = arith.constant 0 : i32
    %c0_i32_0 = arith.constant 0 : i32
    %c0_i32_1 = arith.constant 0 : i32
    %c0_i32_2 = arith.constant 0 : i32
    return %c0_i32, %c0_i32_0, %c0_i32_1 : i32, i32, i32
  }
  func.func @transform_7(%arg0: i32) -> (i32, i32, i32) {
    %c0_i32 = arith.constant 0 : i32
    %c0_i32_0 = arith.constant 0 : i32
    %c0_i32_1 = arith.constant 0 : i32
    %c0_i32_2 = arith.constant 0 : i32
    return %c0_i32, %c0_i32_0, %c0_i32_1 : i32, i32, i32
  }
  func.func @transform_8(%arg0: i32) -> (i32, i32, i32) {
    %c0_i32 = arith.constant 0 : i32
    %c0_i32_0 = arith.constant 0 : i32
    %c0_i32_1 = arith.constant 0 : i32
    return %arg0, %c0_i32, %c0_i32_0 : i32, i32, i32
  }
}

</mosaic_0001>

<llo_original>
// kernel: mamba_backbone.1
$region0: #{mamba_backbone.1}
  #allocation0 [shape = 'u32[]', space=smem, size = 0x4, offset = 0x4, fixed_abs, tag = 'smem constant byte address 0x4 - core index']
  #allocation1 [shape = 'u32[72,128]{1,0:T(1,128)}', space=vmem, size = 0x9000, scoped, tag = 'internal scratch']
  %s0 = inlined_call_operand.hbm [shape: f32[2,16,32], index: 0, kind: input, shape index: {}, may-alias: {0,8}]
  %s1 = inlined_call_operand.vmem [shape: f32[3,2,32], index: 1, kind: input, shape index: {}]
  %s2 = inlined_call_operand.vmem [shape: f32[2,7,64], index: 2, kind: input, shape index: {}]
  %s3 = inlined_call_operand.vmem [shape: f32[2,32,128], index: 3, kind: input, shape index: {}]
  %s4 = inlined_call_operand.vmem [shape: f32[2,64,34], index: 4, kind: input, shape index: {}]
  %s5 = inlined_call_operand.vmem [shape: f32[2,2,64], index: 5, kind: input, shape index: {}]
  %s6 = inlined_call_operand.vmem [shape: f32[2,16,64], index: 6, kind: input, shape index: {}]
  %s7 = inlined_call_operand.vmem [shape: f32[2,64,32], index: 7, kind: input, shape index: {}]
  %s8 = inlined_call_operand.hbm [shape: f32[2,16,32], index: 8, kind: output, shape index: {}, may-alias: {0,8}]
  %s9 = sld [smem:[#allocation0]]
  $region69: #{mamba_backbone.1} parent=0
    _
  %s11 = ssub.s32 1, %s9
  %s12 = scalar_select 0, %s11, %s9
  $region1: #{mamba_backbone.1} parent=0
    #allocation2 [shape = 'u8[16384]{0}', space=vmem, size = 0x4000, scoped, tag = 'input window, operand 0']
    #allocation3 [shape = 's32[2]{0}', space=sflag, size = 0x8, scoped, tag = 'scoped memory for mamba_backbone.1']
    #allocation4 [shape = 's32[2]{0}', space=sflag, size = 0x8, scoped, tag = 'scoped memory for mamba_backbone.1']
    #allocation5 [shape = 'u8[16384]{0}', space=vmem, size = 0x4000, scoped, tag = 'output window, operand 0']
    %13 = vsyncpa [#allocation3], 0
    %s14 = scalar_lea.sflag [#allocation3], 1
    %15 = vsyncpa %s14, 0
    %16 = vsyncpa [#allocation4], 0
    %s17 = scalar_lea.sflag [#allocation4], 1
    %18 = vsyncpa %s17, 0
    loop: start=0, step=1, limit=4
    $region2: #{mamba_backbone.1} parent=1 // loop_pre_header
      _
    $region3: #{mamba_backbone.1} parent=1 // loop_header
      %s20 = sphi 0, %s24
      %p21 = scmp.ge.s32.totalorder %s20, 4
      %s30 = sphi 0, %s32
      %s33 = sphi 0, %s30
      %s34 = sphi 0, %s33
      %s50 = sphi 0, %s34
      %s54 = sphi 0, %s54
      %s56 = sphi 0, %s54
      %s57 = sphi 0, %s56
      %s71 = sphi 0, %s57
      %s75 = sphi 0, %s75
      %s77 = sphi 0, %s75
      %s78 = sphi 0, %s77
      %s92 = sphi 0, %s78
      %s96 = sphi 0, %s96
      %s98 = sphi 0, %s96
      %s99 = sphi 0, %s98
      %s113 = sphi 0, %s99
      %s117 = sphi 0, %s117
      %s119 = sphi 0, %s117
      %s120 = sphi 0, %s119
      %s134 = sphi 0, %s120
      %s138 = sphi 0, %s138
      %s140 = sphi 0, %s138
      %s141 = sphi 0, %s140
      %s155 = sphi 0, %s141
      %s159 = sphi 0, %s159
      %s161 = sphi 0, %s159
      %s162 = sphi 0, %s161
      %s176 = sphi 0, %s162
      %s180 = sphi 0, %s180
      %s182 = sphi 0, %s180
      %s183 = sphi 0, %s182
      %s197 = sphi 0, %s183
      %s203 = sphi 0, %s205
      %s206 = sphi 0, %s203
      %s207 = sphi 0, %s206
      %s223 = sphi 0, %s207
    $region4: #{mamba_backbone.1} parent=1 // loop_header_branch
      %23 = sbr.rel (%p21) target = $region8
    $region5: #{mamba_backbone.1} parent=1 // loop_body
      %s25 = ssub.s32 %s20, 1
      %s26 = ssub.s32 %s20, 2
      %s27 = sadd.s32 %s20, 1
      %s28 = ssub.s32 %s20, %s27
      %p29 = scmp.eq.s32.totalorder %s28, 0
      %s31 = sadd.s32 %s30, 1
      %s32 = scalar_select %p29, %s30, %s31
      %p35 = pneg %p29
      %p36 = scmp.eq.s32.totalorder %s20, 1
      %p37 = por %p35, %p36
      %p38 = scmp.ne.s32.totalorder %s30, %s33
      %p39 = scmp.eq.s32.totalorder %s20, 0
      %p40 = por %p38, %p39
      %p41 = scmp.ne.s32.totalorder %s30, %s33
      %p42 = scmp.eq.s32.totalorder %s25, 1
      %p43 = por %p41, %p42
      %p44 = scmp.ne.s32.totalorder %s33, %s34
      %p45 = scmp.eq.s32.totalorder %s25, 0
      %p46 = por %p44, %p45
      %p47 = scmp.ne.s32.totalorder %s33, %s34
      %p48 = scmp.eq.s32.totalorder %s26, 1
      %p49 = por %p47, %p48
      %p51 = scmp.ne.s32.totalorder %s34, %s50
      %p52 = scmp.eq.s32.totalorder %s26, 0
      %p53 = por %p51, %p52
      %s55 = sadd.s32 %s54, 1
      %p58 = scmp.eq.s32.totalorder %s20, 1
      %p59 = scmp.ne.s32.totalorder %s54, %s56
      %p60 = scmp.eq.s32.totalorder %s20, 0
      %p61 = por %p59, %p60
      %p62 = scmp.ne.s32.totalorder %s54, %s56
      %p63 = scmp.eq.s32.totalorder %s25, 1
      %p64 = por %p62, %p63
      %p65 = scmp.ne.s32.totalorder %s56, %s57
      %p66 = scmp.eq.s32.totalorder %s25, 0
      %p67 = por %p65, %p66
      %p68 = scmp.ne.s32.totalorder %s56, %s57
      %p69 = scmp.eq.s32.totalorder %s26, 1
      %p70 = por %p68, %p69
      %p72 = scmp.ne.s32.totalorder %s57, %s71
      %p73 = scmp.eq.s32.totalorder %s26, 0
      %p74 = por %p72, %p73
      %s76 = sadd.s32 %s75, 1
      %p79 = scmp.eq.s32.totalorder %s20, 1
      %p80 = scmp.ne.s32.totalorder %s75, %s77
      %p81 = scmp.eq.s32.totalorder %s20, 0
      %p82 = por %p80, %p81
      %p83 = scmp.ne.s32.totalorder %s75, %s77
      %p84 = scmp.eq.s32.totalorder %s25, 1
      %p85 = por %p83, %p84
      %p86 = scmp.ne.s32.totalorder %s77, %s78
      %p87 = scmp.eq.s32.totalorder %s25, 0
      %p88 = por %p86, %p87
      %p89 = scmp.ne.s32.totalorder %s77, %s78
      %p90 = scmp.eq.s32.totalorder %s26, 1
      %p91 = por %p89, %p90
      %p93 = scmp.ne.s32.totalorder %s78, %s92
      %p94 = scmp.eq.s32.totalorder %s26, 0
      %p95 = por %p93, %p94
      %s97 = sadd.s32 %s96, 1
      %p100 = scmp.eq.s32.totalorder %s20, 1
      %p101 = scmp.ne.s32.totalorder %s96, %s98
      %p102 = scmp.eq.s32.totalorder %s20, 0
      %p103 = por %p101, %p102
      %p104 = scmp.ne.s32.totalorder %s96, %s98
      %p105 = scmp.eq.s32.totalorder %s25, 1
      %p106 = por %p104, %p105
      %p107 = scmp.ne.s32.totalorder %s98, %s99
      %p108 = scmp.eq.s32.totalorder %s25, 0
      %p109 = por %p107, %p108
      %p110 = scmp.ne.s32.totalorder %s98, %s99
      %p111 = scmp.eq.s32.totalorder %s26, 1
      %p112 = por %p110, %p111
      %p114 = scmp.ne.s32.totalorder %s99, %s113
      %p115 = scmp.eq.s32.totalorder %s26, 0
      %p116 = por %p114, %p115
      %s118 = sadd.s32 %s117, 1
      %p121 = scmp.eq.s32.totalorder %s20, 1
      %p122 = scmp.ne.s32.totalorder %s117, %s119
      %p123 = scmp.eq.s32.totalorder %s20, 0
      %p124 = por %p122, %p123
      %p125 = scmp.ne.s32.totalorder %s117, %s119
      %p126 = scmp.eq.s32.totalorder %s25, 1
      %p127 = por %p125, %p126
      %p128 = scmp.ne.s32.totalorder %s119, %s120
      %p129 = scmp.eq.s32.totalorder %s25, 0
      %p130 = por %p128, %p129
      %p131 = scmp.ne.s32.totalorder %s119, %s120
      %p132 = scmp.eq.s32.totalorder %s26, 1
      %p133 = por %p131, %p132
      %p135 = scmp.ne.s32.totalorder %s120, %s134
      %p136 = scmp.eq.s32.totalorder %s26, 0
      %p137 = por %p135, %p136
      %s139 = sadd.s32 %s138, 1
      %p142 = scmp.eq.s32.totalorder %s20, 1
      %p143 = scmp.ne.s32.totalorder %s138, %s140
      %p144 = scmp.eq.s32.totalorder %s20, 0
      %p145 = por %p143, %p144
      %p146 = scmp.ne.s32.totalorder %s138, %s140
      %p147 = scmp.eq.s32.totalorder %s25, 1
      %p148 = por %p146, %p147
      %p149 = scmp.ne.s32.totalorder %s140, %s141
      %p150 = scmp.eq.s32.totalorder %s25, 0
      %p151 = por %p149, %p150
      %p152 = scmp.ne.s32.totalorder %s140, %s141
      %p153 = scmp.eq.s32.totalorder %s26, 1
      %p154 = por %p152, %p153
      %p156 = scmp.ne.s32.totalorder %s141, %s155
      %p157 = scmp.eq.s32.totalorder %s26, 0
      %p158 = por %p156, %p157
      %s160 = sadd.s32 %s159, 1
      %p163 = scmp.eq.s32.totalorder %s20, 1
      %p164 = scmp.ne.s32.totalorder %s159, %s161
      %p165 = scmp.eq.s32.totalorder %s20, 0
      %p166 = por %p164, %p165
      %p167 = scmp.ne.s32.totalorder %s159, %s161
      %p168 = scmp.eq.s32.totalorder %s25, 1
      %p169 = por %p167, %p168
      %p170 = scmp.ne.s32.totalorder %s161, %s162
      %p171 = scmp.eq.s32.totalorder %s25, 0
      %p172 = por %p170, %p171
      %p173 = scmp.ne.s32.totalorder %s161, %s162
      %p174 = scmp.eq.s32.totalorder %s26, 1
      %p175 = por %p173, %p174
      %p177 = scmp.ne.s32.totalorder %s162, %s176
      %p178 = scmp.eq.s32.totalorder %s26, 0
      %p179 = por %p177, %p178
      %s181 = sadd.s32 %s180, 1
      %p184 = scmp.eq.s32.totalorder %s20, 1
      %p185 = scmp.ne.s32.totalorder %s180, %s182
      %p186 = scmp.eq.s32.totalorder %s20, 0
      %p187 = por %p185, %p186
      %p188 = scmp.ne.s32.totalorder %s180, %s182
      %p189 = scmp.eq.s32.totalorder %s25, 1
      %p190 = por %p188, %p189
      %p191 = scmp.ne.s32.totalorder %s182, %s183
      %p192 = scmp.eq.s32.totalorder %s25, 0
      %p193 = por %p191, %p192
      %p194 = scmp.ne.s32.totalorder %s182, %s183
      %p195 = scmp.eq.s32.totalorder %s26, 1
      %p196 = por %p194, %p195
      %p198 = scmp.ne.s32.totalorder %s183, %s197
      %p199 = scmp.eq.s32.totalorder %s26, 0
      %p200 = por %p198, %p199
      %s201 = ssub.s32 %s20, %s27
      %p202 = scmp.eq.s32.totalorder %s201, 0
      %s204 = sadd.s32 %s203, 1
      %s205 = scalar_select %p202, %s203, %s204
      %p208 = pneg %p202
      %p209 = scmp.eq.s32.totalorder %s20, 1
      %p210 = por %p208, %p209
      %p211 = scmp.ne.s32.totalorder %s203, %s206
      %p212 = scmp.eq.s32.totalorder %s20, 0
      %p213 = por %p211, %p212
      %p214 = scmp.ne.s32.totalorder %s203, %s206
      %p215 = scmp.eq.s32.totalorder %s25, 1
      %p216 = por %p214, %p215
      %p217 = scmp.ne.s32.totalorder %s206, %s207
      %p218 = scmp.eq.s32.totalorder %s25, 0
      %p219 = por %p217, %p218
      %p220 = scmp.ne.s32.totalorder %s206, %s207
      %p221 = scmp.eq.s32.totalorder %s26, 1
      %p222 = por %p220, %p221
      %p224 = scmp.ne.s32.totalorder %s207, %s223
      %p225 = scmp.eq.s32.totalorder %s26, 0
      %p226 = por %p224, %p225
      %p227 = scmp.le.s32.totalorder 1, %s20
      %p228 = scmp.lt.s32.totalorder %s20, 3
      %p229 = pnand %p227, %p228
      %p230 = pneg %p229
      // Predicated region
      $region9: #{mamba_backbone.1} parent=5 // pred_check
        _
      $region10: #{mamba_backbone.1} parent=5 // pred_check_branch
        %232 = sbr.rel (%p229) target = $region12
      $region11: #{mamba_backbone.1} parent=5 // pred_region
        %s233 = ssub.s32 %s20, 1
        // Predicated region
        $region13: #{mamba_backbone.1} parent=11 // pred_check
          %p234 = pneg %p67
        $region14: #{mamba_backbone.1} parent=11 // pred_check_branch
          %236 = sbr.rel (%p234) target = $region16
        $region15: #{mamba_backbone.1} parent=11 // pred_region
          _
        $region16: #{mamba_backbone.1} parent=11 // pred_fallthru
          _
        // Predicated region
        $region17: #{mamba_backbone.1} parent=11 // pred_check
          %p237 = pneg %p88
        $region18: #{mamba_backbone.1} parent=11 // pred_check_branch
          %239 = sbr.rel (%p237) target = $region20
        $region19: #{mamba_backbone.1} parent=11 // pred_region
          _
        $region20: #{mamba_backbone.1} parent=11 // pred_fallthru
          _
        // Predicated region
        $region21: #{mamba_backbone.1} parent=11 // pred_check
          %p240 = pneg %p109
        $region22: #{mamba_backbone.1} parent=11 // pred_check_branch
          %242 = sbr.rel (%p240) target = $region24
        $region23: #{mamba_backbone.1} parent=11 // pred_region
          _
        $region24: #{mamba_backbone.1} parent=11 // pred_fallthru
          _
        // Predicated region
        $region25: #{mamba_backbone.1} parent=11 // pred_check
          %p243 = pneg %p130
        $region26: #{mamba_backbone.1} parent=11 // pred_check_branch
          %245 = sbr.rel (%p243) target = $region28
        $region27: #{mamba_backbone.1} parent=11 // pred_region
          _
        $region28: #{mamba_backbone.1} parent=11 // pred_fallthru
          _
        // Predicated region
        $region29: #{mamba_backbone.1} parent=11 // pred_check
          %p246 = pneg %p151
        $region30: #{mamba_backbone.1} parent=11 // pred_check_branch
          %248 = sbr.rel (%p246) target = $region32
        $region31: #{mamba_backbone.1} parent=11 // pred_region
          _
        $region32: #{mamba_backbone.1} parent=11 // pred_fallthru
          _
        // Predicated region
        $region33: #{mamba_backbone.1} parent=11 // pred_check
          %p249 = pneg %p172
        $region34: #{mamba_backbone.1} parent=11 // pred_check_branch
          %251 = sbr.rel (%p249) target = $region36
        $region35: #{mamba_backbone.1} parent=11 // pred_region
          _
        $region36: #{mamba_backbone.1} parent=11 // pred_fallthru
          _
        // Predicated region
        $region37: #{mamba_backbone.1} parent=11 // pred_check
          %p252 = pneg %p193
        $region38: #{mamba_backbone.1} parent=11 // pred_check_branch
          %254 = sbr.rel (%p252) target = $region40
        $region39: #{mamba_backbone.1} parent=11 // pred_region
          _
        $region40: #{mamba_backbone.1} parent=11 // pred_fallthru
          _
      $region12: #{mamba_backbone.1} parent=5 // pred_fallthru
        _
      %p255 = scmp.lt.s32.totalorder %s20, 2
      // Predicated region
      $region41: #{mamba_backbone.1} parent=5 // pred_check
        %p256 = pneg %p255
      $region42: #{mamba_backbone.1} parent=5 // pred_check_branch
        %258 = sbr.rel (%p256) target = $region44
      $region43: #{mamba_backbone.1} parent=5 // pred_region
        // Predicated region
        $region45: #{mamba_backbone.1} parent=43 // pred_check
          %p259 = pneg %p40
        $region46: #{mamba_backbone.1} parent=43 // pred_check_branch
          %261 = sbr.rel (%p259) target = $region48
        $region47: #{mamba_backbone.1} parent=43 // pred_region
          %s262 = sand.u32 %s30, 1
          %s263 = scalar_lea.sflag [#allocation3], %s262
          %s264 = sand.u32 %s30, 1
          %s265 = smul.addr %s264, 16
          %s266 = scalar_lea.vmem [#allocation2], %s265
          %268 = vsyncadd %s263, 0
          %s269 = smul.addr %s20, 2
          %s270 = smul.addr %s269, 8
          %s271 = scalar_lea.hbm %s0, %s270
          %s272 = sshll.u32 %s271, 4
          %s273 = int_to_ptr.hbm [resolvable:$true] %s272
          %s274 = sshll.u32 %s266, 4
          %s275 = int_to_ptr.vmem [resolvable:$true] %s274
          %280 = dma.hbm_to_vmem [thread:$0]  %s273, 256, %s275, %s263, 128, 128, 8
        $region48: #{mamba_backbone.1} parent=43 // pred_fallthru
          _
      $region44: #{mamba_backbone.1} parent=5 // pred_fallthru
        _
      %p281 = scmp.le.s32.totalorder 1, %s20
      %p282 = scmp.lt.s32.totalorder %s20, 3
      %p283 = pnand %p281, %p282
      %p284 = pneg %p283
      // Predicated region
      $region49: #{mamba_backbone.1} parent=5 // pred_check
        _
      $region50: #{mamba_backbone.1} parent=5 // pred_check_branch
        %286 = sbr.rel (%p283) target = $region52
      $region51: #{mamba_backbone.1} parent=5 // pred_region
        %s287 = ssub.s32 %s20, 1
        %s288 = sand.u32 %s33, 1
        %s289 = scalar_lea.sflag [#allocation3], %s288
        %s290 = sand.u32 %s33, 1
        %s291 = smul.addr %s290, 16
        %s292 = scalar_lea.vmem [#allocation2], %s291
        // Predicated region
        $region53: #{mamba_backbone.1} parent=51 // pred_check
          %p293 = pneg %p46
        $region54: #{mamba_backbone.1} parent=51 // pred_check_branch
          %295 = sbr.rel (%p293) target = $region56
        $region55: #{mamba_backbone.1} parent=51 // pred_region
          %297 = dma.done %s289, 256
        $region56: #{mamba_backbone.1} parent=51 // pred_fallthru
          _
        %s298 = sand.u32 %s33, 1
        %s299 = scalar_lea.sflag [#allocation3], %s298
        %s300 = sand.u32 %s33, 1
        %s301 = smul.addr %s300, 16
        %s302 = scalar_lea.vmem [#allocation2], %s301
        %p303 = pneg %p46
        %p304 = pneg %p43
        %p305 = pneg %p67
        %p306 = pneg %p64
        %p307 = pneg %p88
        %p308 = pneg %p85
        %p309 = pneg %p109
        %p310 = pneg %p106
        %p311 = pneg %p130
        %p312 = pneg %p127
        %p313 = pneg %p151
        %p314 = pneg %p148
        %p315 = pneg %p172
        %p316 = pneg %p169
        %p317 = pneg %p193
        %p318 = pneg %p190
        %p319 = pneg %p219
        %p320 = pneg %p216
        %s321 = sand.u32 %s206, 1
        %s322 = scalar_lea.sflag [#allocation4], %s321
        %s323 = sand.u32 %s206, 1
        %s324 = smul.addr %s323, 16
        %s325 = scalar_lea.vmem [#allocation5], %s324
        %v327 = vld [vmem:[%s292] sm:$0xff]
        %v328 = vld [vmem:[%s292 + $0x8] sm:$0xff]
        %v329 = vlaneseq
        %v330 = vshrl.u32 %v329, 7
        %v331 = vadd.s32 %v330, 8
        %v332 = vadd.s32 %v330, 16
        %v333 = vadd.s32 %v330, 24
        %v334 = vadd.s32 %v330, 32
        %v335 = vadd.s32 %v330, 40
        %v336 = vadd.s32 %v330, 48
        %v337 = vadd.s32 %v330, 56
        %v338 = vadd.s32 %v330, 64
        %v339 = vadd.s32 %v330, 72
        %v340 = vadd.s32 %v330, 80
        %v341 = vadd.s32 %v330, 88
        %v342 = vadd.s32 %v330, 96
        %v343 = vadd.s32 %v330, 104
        %v344 = vadd.s32 %v330, 112
        %v345 = vadd.s32 %v330, 120
        %v346 = vadd.s32 %v330, 128
        %v347 = vadd.s32 %v330, 136
        %v348 = vadd.s32 %v330, 144
        %v349 = vadd.s32 %v330, 152
        %v350 = vadd.s32 %v330, 160
        %v351 = vadd.s32 %v330, 168
        %v352 = vadd.s32 %v330, 176
        %v353 = vadd.s32 %v330, 184
        %v354 = vadd.s32 %v330, 192
        %v355 = vadd.s32 %v330, 200
        %v356 = vadd.s32 %v330, 208
        %v357 = vadd.s32 %v330, 216
        %v358 = vadd.s32 %v330, 224
        %v359 = vadd.s32 %v330, 232
        %v360 = vadd.s32 %v330, 240
        %v361 = vadd.s32 %v330, 248
        %v362 = vlaneseq
        %v363 = vand.u32 %v362, 127
        %v364 = vmul.u32 %v363, 16
        %v365 = vsub.s32 %v330, %v364
        %v366 = vsub.s32 %v331, %v364
        %v367 = vsub.s32 %v332, %v364
        %v368 = vsub.s32 %v333, %v364
        %v369 = vsub.s32 %v334, %v364
        %v370 = vsub.s32 %v335, %v364
        %v371 = vsub.s32 %v336, %v364
        %v372 = vsub.s32 %v337, %v364
        %v373 = vsub.s32 %v338, %v364
        %v374 = vsub.s32 %v339, %v364
        %v375 = vsub.s32 %v340, %v364
        %v376 = vsub.s32 %v341, %v364
        %v377 = vsub.s32 %v342, %v364
        %v378 = vsub.s32 %v343, %v364
        %v379 = vsub.s32 %v344, %v364
        %v380 = vsub.s32 %v345, %v364
        %v381 = vsub.s32 %v346, %v364
        %v382 = vsub.s32 %v347, %v364
        %v383 = vsub.s32 %v348, %v364
        %v384 = vsub.s32 %v349, %v364
        %v385 = vsub.s32 %v350, %v364
        %v386 = vsub.s32 %v351, %v364
        %v387 = vsub.s32 %v352, %v364
        %v388 = vsub.s32 %v353, %v364
        %v389 = vsub.s32 %v354, %v364
        %v390 = vsub.s32 %v355, %v364
        %v391 = vsub.s32 %v356, %v364
        %v392 = vsub.s32 %v357, %v364
        %v393 = vsub.s32 %v358, %v364
        %v394 = vsub.s32 %v359, %v364
        %v395 = vsub.s32 %v360, %v364
        %v396 = vsub.s32 %v361, %v364
        %vm397 = vcmp.ge.s32.totalorder %v365, 0
        %vm398 = vcmp.ge.s32.totalorder %v366, 0
        %vm399 = vcmp.ge.s32.totalorder %v367, 0
        %vm400 = vcmp.ge.s32.totalorder %v368, 0
        %vm401 = vcmp.ge.s32.totalorder %v369, 0
        %vm402 = vcmp.ge.s32.totalorder %v370, 0
        %vm403 = vcmp.ge.s32.totalorder %v371, 0
        %vm404 = vcmp.ge.s32.totalorder %v372, 0
        %vm405 = vcmp.ge.s32.totalorder %v373, 0
        %vm406 = vcmp.ge.s32.totalorder %v374, 0
        %vm407 = vcmp.ge.s32.totalorder %v375, 0
        %vm408 = vcmp.ge.s32.totalorder %v376, 0
        %vm409 = vcmp.ge.s32.totalorder %v377, 0
        %vm410 = vcmp.ge.s32.totalorder %v378, 0
        %vm411 = vcmp.ge.s32.totalorder %v379, 0
        %vm412 = vcmp.ge.s32.totalorder %v380, 0
        %vm413 = vcmp.ge.s32.totalorder %v381, 0
        %vm414 = vcmp.ge.s32.totalorder %v382, 0
        %vm415 = vcmp.ge.s32.totalorder %v383, 0
        %vm416 = vcmp.ge.s32.totalorder %v384, 0
        %vm417 = vcmp.ge.s32.totalorder %v385, 0
        %vm418 = vcmp.ge.s32.totalorder %v386, 0
        %vm419 = vcmp.ge.s32.totalorder %v387, 0
        %vm420 = vcmp.ge.s32.totalorder %v388, 0
        %vm421 = vcmp.ge.s32.totalorder %v389, 0
        %vm422 = vcmp.ge.s32.totalorder %v390, 0
        %vm423 = vcmp.ge.s32.totalorder %v391, 0
        %vm424 = vcmp.ge.s32.totalorder %v392, 0
        %vm425 = vcmp.ge.s32.totalorder %v393, 0
        %vm426 = vcmp.ge.s32.totalorder %v394, 0
        %vm427 = vcmp.ge.s32.totalorder %v395, 0
        %vm428 = vcmp.ge.s32.totalorder %v396, 0
        %vm429 = vcmp.lt.s32.totalorder %v365, 16
        %vm430 = vcmp.lt.s32.totalorder %v366, 16
        %vm431 = vcmp.lt.s32.totalorder %v367, 16
        %vm432 = vcmp.lt.s32.totalorder %v368, 16
        %vm433 = vcmp.lt.s32.totalorder %v369, 16
        %vm434 = vcmp.lt.s32.totalorder %v370, 16
        %vm435 = vcmp.lt.s32.totalorder %v371, 16
        %vm436 = vcmp.lt.s32.totalorder %v372, 16
        %vm437 = vcmp.lt.s32.totalorder %v373, 16
        %vm438 = vcmp.lt.s32.totalorder %v374, 16
        %vm439 = vcmp.lt.s32.totalorder %v375, 16
        %vm440 = vcmp.lt.s32.totalorder %v376, 16
        %vm441 = vcmp.lt.s32.totalorder %v377, 16
        %vm442 = vcmp.lt.s32.totalorder %v378, 16
        %vm443 = vcmp.lt.s32.totalorder %v379, 16
        %vm444 = vcmp.lt.s32.totalorder %v380, 16
        %vm445 = vcmp.lt.s32.totalorder %v381, 16
        %vm446 = vcmp.lt.s32.totalorder %v382, 16
        %vm447 = vcmp.lt.s32.totalorder %v383, 16
        %vm448 = vcmp.lt.s32.totalorder %v384, 16
        %vm449 = vcmp.lt.s32.totalorder %v385, 16
        %vm450 = vcmp.lt.s32.totalorder %v386, 16
        %vm451 = vcmp.lt.s32.totalorder %v387, 16
        %vm452 = vcmp.lt.s32.totalorder %v388, 16
        %vm453 = vcmp.lt.s32.totalorder %v389, 16
        %vm454 = vcmp.lt.s32.totalorder %v390, 16
        %vm455 = vcmp.lt.s32.totalorder %v391, 16
        %vm456 = vcmp.lt.s32.totalorder %v392, 16
        %vm457 = vcmp.lt.s32.totalorder %v393, 16
        %vm458 = vcmp.lt.s32.totalorder %v394, 16
        %vm459 = vcmp.lt.s32.totalorder %v395, 16
        %vm460 = vcmp.lt.s32.totalorder %v396, 16
        %vm461 = vmand %vm397, %vm429
        %vm462 = vmand %vm398, %vm430
        %vm463 = vmand %vm399, %vm431
        %vm464 = vmand %vm400, %vm432
        %vm465 = vmand %vm401, %vm433
        %vm466 = vmand %vm402, %vm434
        %vm467 = vmand %vm403, %vm435
        %vm468 = vmand %vm404, %vm436
        %vm469 = vmand %vm405, %vm437
        %vm470 = vmand %vm406, %vm438
        %vm471 = vmand %vm407, %vm439
        %vm472 = vmand %vm408, %vm440
        %vm473 = vmand %vm409, %vm441
        %vm474 = vmand %vm410, %vm442
        %vm475 = vmand %vm411, %vm443
        %vm476 = vmand %vm412, %vm444
        %vm477 = vmand %vm413, %vm445
        %vm478 = vmand %vm414, %vm446
        %vm479 = vmand %vm415, %vm447
        %vm480 = vmand %vm416, %vm448
        %vm481 = vmand %vm417, %vm449
        %vm482 = vmand %vm418, %vm450
        %vm483 = vmand %vm419, %vm451
        %vm484 = vmand %vm420, %vm452
        %vm485 = vmand %vm421, %vm453
        %vm486 = vmand %vm422, %vm454
        %vm487 = vmand %vm423, %vm455
        %vm488 = vmand %vm424, %vm456
        %vm489 = vmand %vm425, %vm457
        %vm490 = vmand %vm426, %vm458
        %vm491 = vmand %vm427, %vm459
        %vm492 = vmand %vm428, %vm460
        %v493 = vsel %vm461, 1, 0
        %v494 = vsel %vm462, 1, 0
        %v495 = vsel %vm463, 1, 0
        %v496 = vsel %vm464, 1, 0
        %v497 = vsel %vm465, 1, 0
        %v498 = vsel %vm466, 1, 0
        %v499 = vsel %vm467, 1, 0
        %v500 = vsel %vm468, 1, 0
        %v501 = vsel %vm469, 1, 0
        %v502 = vsel %vm470, 1, 0
        %v503 = vsel %vm471, 1, 0
        %v504 = vsel %vm472, 1, 0
        %v505 = vsel %vm473, 1, 0
        %v506 = vsel %vm474, 1, 0
        %v507 = vsel %vm475, 1, 0
        %v508 = vsel %vm476, 1, 0
        %v509 = vsel %vm477, 1, 0
        %v510 = vsel %vm478, 1, 0
        %v511 = vsel %vm479, 1, 0
        %v512 = vsel %vm480, 1, 0
        %v513 = vsel %vm481, 1, 0
        %v514 = vsel %vm482, 1, 0
        %v515 = vsel %vm483, 1, 0
        %v516 = vsel %vm484, 1, 0
        %v517 = vsel %vm485, 1, 0
        %v518 = vsel %vm486, 1, 0
        %v519 = vsel %vm487, 1, 0
        %v520 = vsel %vm488, 1, 0
        %v521 = vsel %vm489, 1, 0
        %v522 = vsel %vm490, 1, 0
        %v523 = vsel %vm491, 1, 0
        %v524 = vsel %vm492, 1, 0
        %v525 = vcvt.s32.f32 %v493
        %v526 = vcvt.s32.f32 %v494
        %v527 = vcvt.s32.f32 %v495
        %v528 = vcvt.s32.f32 %v496
        %v529 = vcvt.s32.f32 %v497
        %v530 = vcvt.s32.f32 %v498
        %v531 = vcvt.s32.f32 %v499
        %v532 = vcvt.s32.f32 %v500
        %v533 = vcvt.s32.f32 %v501
        %v534 = vcvt.s32.f32 %v502
        %v535 = vcvt.s32.f32 %v503
        %v536 = vcvt.s32.f32 %v504
        %v537 = vcvt.s32.f32 %v505
        %v538 = vcvt.s32.f32 %v506
        %v539 = vcvt.s32.f32 %v507
        %v540 = vcvt.s32.f32 %v508
        %v541 = vcvt.s32.f32 %v509
        %v542 = vcvt.s32.f32 %v510
        %v543 = vcvt.s32.f32 %v511
        %v544 = vcvt.s32.f32 %v512
        %v545 = vcvt.s32.f32 %v513
        %v546 = vcvt.s32.f32 %v514
        %v547 = vcvt.s32.f32 %v515
        %v548 = vcvt.s32.f32 %v516
        %v549 = vcvt.s32.f32 %v517
        %v550 = vcvt.s32.f32 %v518
        %v551 = vcvt.s32.f32 %v519
        %v552 = vcvt.s32.f32 %v520
        %v553 = vcvt.s32.f32 %v521
        %v554 = vcvt.s32.f32 %v522
        %v555 = vcvt.s32.f32 %v523
        %v556 = vcvt.s32.f32 %v524
        %v557 = vsub.s32 %v330, %v363
        %v558 = vsub.s32 %v331, %v363
        %v559 = vsub.s32 %v332, %v363
        %v560 = vsub.s32 %v333, %v363
        %v561 = vsub.s32 %v334, %v363
        %v562 = vsub.s32 %v335, %v363
        %v563 = vsub.s32 %v336, %v363
        %v564 = vsub.s32 %v337, %v363
        %v565 = vsub.s32 %v338, %v363
        %v566 = vsub.s32 %v339, %v363
        %v567 = vsub.s32 %v340, %v363
        %v568 = vsub.s32 %v341, %v363
        %v569 = vsub.s32 %v342, %v363
        %v570 = vsub.s32 %v343, %v363
        %v571 = vsub.s32 %v344, %v363
        %v572 = vsub.s32 %v345, %v363
        %v573 = vsub.s32 %v346, %v363
        %v574 = vsub.s32 %v347, %v363
        %v575 = vsub.s32 %v348, %v363
        %v576 = vsub.s32 %v349, %v363
        %v577 = vsub.s32 %v350, %v363
        %v578 = vsub.s32 %v351, %v363
        %v579 = vsub.s32 %v352, %v363
        %v580 = vsub.s32 %v353, %v363
        %v581 = vsub.s32 %v354, %v363
        %v582 = vsub.s32 %v355, %v363
        %v583 = vsub.s32 %v356, %v363
        %v584 = vsub.s32 %v357, %v363
        %v585 = vsub.s32 %v358, %v363
        %v586 = vsub.s32 %v359, %v363
        %v587 = vsub.s32 %v360, %v363
        %v588 = vsub.s32 %v361, %v363
        %v589 = vand.u32 %v557, 15
        %v590 = vand.u32 %v558, 15
        %v591 = vand.u32 %v559, 15
        %v592 = vand.u32 %v560, 15
        %v593 = vand.u32 %v561, 15
        %v594 = vand.u32 %v562, 15
        %v595 = vand.u32 %v563, 15
        %v596 = vand.u32 %v564, 15
        %v597 = vand.u32 %v565, 15
        %v598 = vand.u32 %v566, 15
        %v599 = vand.u32 %v567, 15
        %v600 = vand.u32 %v568, 15
        %v601 = vand.u32 %v569, 15
        %v602 = vand.u32 %v570, 15
        %v603 = vand.u32 %v571, 15
        %v604 = vand.u32 %v572, 15
        %v605 = vand.u32 %v573, 15
        %v606 = vand.u32 %v574, 15
        %v607 = vand.u32 %v575, 15
        %v608 = vand.u32 %v576, 15
        %v609 = vand.u32 %v577, 15
        %v610 = vand.u32 %v578, 15
        %v611 = vand.u32 %v579, 15
        %v612 = vand.u32 %v580, 15
        %v613 = vand.u32 %v581, 15
        %v614 = vand.u32 %v582, 15
        %v615 = vand.u32 %v583, 15
        %v616 = vand.u32 %v584, 15
        %v617 = vand.u32 %v585, 15
        %v618 = vand.u32 %v586, 15
        %v619 = vand.u32 %v587, 15
        %v620 = vand.u32 %v588, 15
        %vm621 = vcmp.eq.s32.totalorder %v589, 0
        %vm622 = vcmp.eq.s32.totalorder %v590, 0
        %vm623 = vcmp.eq.s32.totalorder %v591, 0
        %vm624 = vcmp.eq.s32.totalorder %v592, 0
        %vm625 = vcmp.eq.s32.totalorder %v593, 0
        %vm626 = vcmp.eq.s32.totalorder %v594, 0
        %vm627 = vcmp.eq.s32.totalorder %v595, 0
        %vm628 = vcmp.eq.s32.totalorder %v596, 0
        %vm629 = vcmp.eq.s32.totalorder %v597, 0
        %vm630 = vcmp.eq.s32.totalorder %v598, 0
        %vm631 = vcmp.eq.s32.totalorder %v599, 0
        %vm632 = vcmp.eq.s32.totalorder %v600, 0
        %vm633 = vcmp.eq.s32.totalorder %v601, 0
        %vm634 = vcmp.eq.s32.totalorder %v602, 0
        %vm635 = vcmp.eq.s32.totalorder %v603, 0
        %vm636 = vcmp.eq.s32.totalorder %v604, 0
        %vm637 = vcmp.eq.s32.totalorder %v605, 0
        %vm638 = vcmp.eq.s32.totalorder %v606, 0
        %vm639 = vcmp.eq.s32.totalorder %v607, 0
        %vm640 = vcmp.eq.s32.totalorder %v608, 0
        %vm641 = vcmp.eq.s32.totalorder %v609, 0
        %vm642 = vcmp.eq.s32.totalorder %v610, 0
        %vm643 = vcmp.eq.s32.totalorder %v611, 0
        %vm644 = vcmp.eq.s32.totalorder %v612, 0
        %vm645 = vcmp.eq.s32.totalorder %v613, 0
        %vm646 = vcmp.eq.s32.totalorder %v614, 0
        %vm647 = vcmp.eq.s32.totalorder %v615, 0
        %vm648 = vcmp.eq.s32.totalorder %v616, 0
        %vm649 = vcmp.eq.s32.totalorder %v617, 0
        %vm650 = vcmp.eq.s32.totalorder %v618, 0
        %vm651 = vcmp.eq.s32.totalorder %v619, 0
        %vm652 = vcmp.eq.s32.totalorder %v620, 0
        %vm653 = vcmp.ge.s32.totalorder %v557, 0
        %vm654 = vcmp.ge.s32.totalorder %v558, 0
        %vm655 = vcmp.ge.s32.totalorder %v559, 0
        %vm656 = vcmp.ge.s32.totalorder %v560, 0
        %vm657 = vcmp.ge.s32.totalorder %v561, 0
        %vm658 = vcmp.ge.s32.totalorder %v562, 0
        %vm659 = vcmp.ge.s32.totalorder %v563, 0
        %vm660 = vcmp.ge.s32.totalorder %v564, 0
        %vm661 = vcmp.ge.s32.totalorder %v565, 0
        %vm662 = vcmp.ge.s32.totalorder %v566, 0
        %vm663 = vcmp.ge.s32.totalorder %v567, 0
        %vm664 = vcmp.ge.s32.totalorder %v568, 0
        %vm665 = vcmp.ge.s32.totalorder %v569, 0
        %vm666 = vcmp.ge.s32.totalorder %v570, 0
        %vm667 = vcmp.ge.s32.totalorder %v571, 0
        %vm668 = vcmp.ge.s32.totalorder %v572, 0
        %vm669 = vcmp.ge.s32.totalorder %v573, 0
        %vm670 = vcmp.ge.s32.totalorder %v574, 0
        %vm671 = vcmp.ge.s32.totalorder %v575, 0
        %vm672 = vcmp.ge.s32.totalorder %v576, 0
        %vm673 = vcmp.ge.s32.totalorder %v577, 0
        %vm674 = vcmp.ge.s32.totalorder %v578, 0
        %vm675 = vcmp.ge.s32.totalorder %v579, 0
        %vm676 = vcmp.ge.s32.totalorder %v580, 0
        %vm677 = vcmp.ge.s32.totalorder %v581, 0
        %vm678 = vcmp.ge.s32.totalorder %v582, 0
        %vm679 = vcmp.ge.s32.totalorder %v583, 0
        %vm680 = vcmp.ge.s32.totalorder %v584, 0
        %vm681 = vcmp.ge.s32.totalorder %v585, 0
        %vm682 = vcmp.ge.s32.totalorder %v586, 0
        %vm683 = vcmp.ge.s32.totalorder %v587, 0
        %vm684 = vcmp.ge.s32.totalorder %v588, 0
        %vm685 = vmand %vm621, %vm653
        %vm686 = vmand %vm622, %vm654
        %vm687 = vmand %vm623, %vm655
        %vm688 = vmand %vm624, %vm656
        %vm689 = vmand %vm625, %vm657
        %vm690 = vmand %vm626, %vm658
        %vm691 = vmand %vm627, %vm659
        %vm692 = vmand %vm628, %vm660
        %vm693 = vmand %vm629, %vm661
        %vm694 = vmand %vm630, %vm662
        %vm695 = vmand %vm631, %vm663
        %vm696 = vmand %vm632, %vm664
        %vm697 = vmand %vm633, %vm665
        %vm698 = vmand %vm634, %vm666
        %vm699 = vmand %vm635, %vm667
        %vm700 = vmand %vm636, %vm668
        %vm701 = vmand %vm637, %vm669
        %vm702 = vmand %vm638, %vm670
        %vm703 = vmand %vm639, %vm671
        %vm704 = vmand %vm640, %vm672
        %vm705 = vmand %vm641, %vm673
        %vm706 = vmand %vm642, %vm674
        %vm707 = vmand %vm643, %vm675
        %vm708 = vmand %vm644, %vm676
        %vm709 = vmand %vm645, %vm677
        %vm710 = vmand %vm646, %vm678
        %vm711 = vmand %vm647, %vm679
        %vm712 = vmand %vm648, %vm680
        %vm713 = vmand %vm649, %vm681
        %vm714 = vmand %vm650, %vm682
        %vm715 = vmand %vm651, %vm683
        %vm716 = vmand %vm652, %vm684
        %v717 = vsel %vm685, 1, 0
        %v718 = vsel %vm686, 1, 0
        %v719 = vsel %vm687, 1, 0
        %v720 = vsel %vm688, 1, 0
        %v721 = vsel %vm689, 1, 0
        %v722 = vsel %vm690, 1, 0
        %v723 = vsel %vm691, 1, 0
        %v724 = vsel %vm692, 1, 0
        %v725 = vsel %vm693, 1, 0
        %v726 = vsel %vm694, 1, 0
        %v727 = vsel %vm695, 1, 0
        %v728 = vsel %vm696, 1, 0
        %v729 = vsel %vm697, 1, 0
        %v730 = vsel %vm698, 1, 0
        %v731 = vsel %vm699, 1, 0
        %v732 = vsel %vm700, 1, 0
        %v733 = vsel %vm701, 1, 0
        %v734 = vsel %vm702, 1, 0
        %v735 = vsel %vm703, 1, 0
        %v736 = vsel %vm704, 1, 0
        %v737 = vsel %vm705, 1, 0
        %v738 = vsel %vm706, 1, 0
        %v739 = vsel %vm707, 1, 0
        %v740 = vsel %vm708, 1, 0
        %v741 = vsel %vm709, 1, 0
        %v742 = vsel %vm710, 1, 0
        %v743 = vsel %vm711, 1, 0
        %v744 = vsel %vm712, 1, 0
        %v745 = vsel %vm713, 1, 0
        %v746 = vsel %vm714, 1, 0
        %v747 = vsel %vm715, 1, 0
        %v748 = vsel %vm716, 1, 0
        %v749 = vcvt.s32.f32 %v717
        %v750 = vcvt.s32.f32 %v718
        %v751 = vcvt.s32.f32 %v719
        %v752 = vcvt.s32.f32 %v720
        %v753 = vcvt.s32.f32 %v721
        %v754 = vcvt.s32.f32 %v722
        %v755 = vcvt.s32.f32 %v723
        %v756 = vcvt.s32.f32 %v724
        %v757 = vcvt.s32.f32 %v725
        %v758 = vcvt.s32.f32 %v726
        %v759 = vcvt.s32.f32 %v727
        %v760 = vcvt.s32.f32 %v728
        %v761 = vcvt.s32.f32 %v729
        %v762 = vcvt.s32.f32 %v730
        %v763 = vcvt.s32.f32 %v731
        %v764 = vcvt.s32.f32 %v732
        %v765 = vcvt.s32.f32 %v733
        %v766 = vcvt.s32.f32 %v734
        %v767 = vcvt.s32.f32 %v735
        %v768 = vcvt.s32.f32 %v736
        %v769 = vcvt.s32.f32 %v737
        %v770 = vcvt.s32.f32 %v738
        %v771 = vcvt.s32.f32 %v739
        %v772 = vcvt.s32.f32 %v740
        %v773 = vcvt.s32.f32 %v741
        %v774 = vcvt.s32.f32 %v742
        %v775 = vcvt.s32.f32 %v743
        %v776 = vcvt.s32.f32 %v744
        %v777 = vcvt.s32.f32 %v745
        %v778 = vcvt.s32.f32 %v746
        %v779 = vcvt.s32.f32 %v747
        %v780 = vcvt.s32.f32 %v748
        %v781 = vld [vmem:[%s1] sm:$0x3]
        %v782 = vld [vmem:[%s2] sm:$0x7f]
        %v783 = vld [vmem:[%s3] sm:$0xff]
        %v784 = vld [vmem:[%s3 + $0x8] sm:$0xff]
        %v785 = vld [vmem:[%s3 + $0x10] sm:$0xff]
        %v786 = vld [vmem:[%s3 + $0x18] sm:$0xff]
        %v787 = vpack.c.bf16 %v784, %v783
        %v788 = vpack.c.bf16 %v786, %v785
        %v789 = vld [vmem:[%s4] sm:$0xff]
        %v790 = vld [vmem:[%s4 + $0x8] sm:$0xff]
        %v791 = vld [vmem:[%s4 + $0x10] sm:$0xff]
        %v792 = vld [vmem:[%s4 + $0x18] sm:$0xff]
        %v793 = vld [vmem:[%s4 + $0x20] sm:$0xff]
        %v794 = vld [vmem:[%s4 + $0x28] sm:$0xff]
        %v795 = vld [vmem:[%s4 + $0x30] sm:$0xff]
        %v796 = vld [vmem:[%s4 + $0x38] sm:$0xff]
        %v797 = vpack.c.bf16 %v790, %v789
        %v798 = vpack.c.bf16 %v792, %v791
        %v799 = vpack.c.bf16 %v794, %v793
        %v800 = vpack.c.bf16 %v796, %v795
        %v801 = vld [vmem:[%s5] sm:$0x3]
        %v802 = vld [vmem:[%s6] sm:$0xff]
        %v803 = vld [vmem:[%s6 + $0x8] sm:$0xff]
        %v804 = vld [vmem:[%s7] sm:$0xff]
        %v805 = vld [vmem:[%s7 + $0x8] sm:$0xff]
        %v806 = vld [vmem:[%s7 + $0x10] sm:$0xff]
        %v807 = vld [vmem:[%s7 + $0x18] sm:$0xff]
        %v808 = vld [vmem:[%s7 + $0x20] sm:$0xff]
        %v809 = vld [vmem:[%s7 + $0x28] sm:$0xff]
        %v810 = vld [vmem:[%s7 + $0x30] sm:$0xff]
        %v811 = vld [vmem:[%s7 + $0x38] sm:$0xff]
        %v812 = vpack.c.bf16 %v805, %v804
        %v813 = vpack.c.bf16 %v807, %v806
        %v814 = vpack.c.bf16 %v809, %v808
        %v815 = vpack.c.bf16 %v811, %v810
        %vm816 = vcmask 261120
        %v817 = vsel %vm816, %v327, 0.0
        %818 = vadd.xlane.f32.xlu0 %v817
        %v819 = vpop.xlane.xlu0 %818
        %v820 = vsel %vm816, %v328, 0.0
        %821 = vadd.xlane.f32.xlu0 %v820
        %v822 = vpop.xlane.xlu0 %821
        %v823 = vrcp.pop 32.0
        %v824 = vmul.f32 32.0, %v823
        %v825 = vsub.f32 1.0, %v824
        %v826 = vmul.f32 %v823, %v825
        %v827 = vadd.f32 %v823, %v826
        %vm828 = vweird.f32 %v823
        %v829 = vsel %vm828, %v823, %v827
        %v830 = vmul.f32 %v819, %v829
        %v831 = vmul.f32 %v822, %v829
        %v832 = vsub.f32 %v327, %v830
        %v833 = vsub.f32 %v328, %v831
        %v834 = vmul.f32 %v832, %v832
        %v835 = vmul.f32 %v833, %v833
        %v836 = vsel %vm816, %v834, 0.0
        %837 = vadd.xlane.f32.xlu0 %v836
        %v838 = vpop.xlane.xlu0 %837
        %v839 = vsel %vm816, %v835, 0.0
        %840 = vadd.xlane.f32.xlu0 %v839
        %v841 = vpop.xlane.xlu0 %840
        %v842 = vmul.f32 %v838, %v829
        %v843 = vmul.f32 %v841, %v829
        %v844 = vadd.f32 %v842, 1e-05
        %v845 = vadd.f32 %v843, 1e-05
        %v846 = vrsqrt.pop %v844
        %v847 = vmul.f32 %v846, %v844
        %v848 = vmul.f32 %v847, %v846
        %v849 = vmul.f32 0.5, %v848
        %v850 = vsub.f32 1.5, %v849
        %v851 = vmul.f32 %v846, %v850
        %vm852 = vweird.f32 %v844
        %vm853 = vweird.f32 %v846
        %vm854 = vmor %vm852, %vm853
        %v855 = vsel %vm854, %v846, %v851
        %v856 = vrsqrt.pop %v845
        %v857 = vmul.f32 %v856, %v845
        %v858 = vmul.f32 %v857, %v856
        %v859 = vmul.f32 0.5, %v858
        %v860 = vsub.f32 1.5, %v859
        %v861 = vmul.f32 %v856, %v860
        %vm862 = vweird.f32 %v845
        %vm863 = vweird.f32 %v856
        %vm864 = vmor %vm862, %vm863
        %v865 = vsel %vm864, %v856, %v861
        %v866 = vmul.f32 %v832, %v855
        %v867 = vmul.f32 %v833, %v865
        %v868 = vperm.slane %v781, 0
        %v869 = vmul.f32 %v866, %v868
        %v870 = vmul.f32 %v867, %v868
        %v871 = vperm.slane %v781, 1
        %v872 = vadd.f32 %v869, %v871
        %v873 = vadd.f32 %v870, %v871
        %v874 = vpack.c.bf16 %v873, %v872
        %v876 = vsel %vm816, %v874, 0
        %878 = vmatpush.bf16.msra.mxu0 0
        %879 = vmatpush.bf16.msra.mxu0 0
        %880 = vmatpush.bf16.msra.mxu0 0
        %881 = vmatpush.bf16.msra.mxu0 0
        %882 = vmatpush.bf16.msra.mxu0 0
        %883 = vmatpush.bf16.msra.mxu0 0
        %884 = vmatpush.bf16.msra.mxu0 %v788
        %885 = vmatpush.bf16.msra.mxu0 %v787
        %886 = vmatmul.bf16.gmra.mxu0 %v876
        %v887 = vpop.f32.mrf.mxu0
        %v888 = vadd.f32 0.0, %v887
        %v889 = vpop.f32.mrf.mxu0
        %v890 = vadd.f32 0.0, %v889
        %891 = vdwg.mxu0
        %v892 = vperm.slane %v782, 3
        %v893 = vmul.f32 %v888, %v892
        %v894 = vmul.f32 %v890, %v892
        %v895 = vperm.slane %v782, 4
        %v896 = vadd.f32 %v893, %v895
        %v897 = vadd.f32 %v894, %v895
        %vm900 = vcmask 1042432
        %v901 = vrot.slane %v888, 5
        %v902 = vrot.slane %v890, 5
        %v903 = vsel %vm900, %v901, %v902
        %v906 = vsel %vm900, 0.0, %v901
        %v907 = vperm.slane %v782, 0
        %v908 = vmul.f32 %v906, %v907
        %v909 = vmul.f32 %v903, %v907
        %v910 = vadd.f32 %v896, %v908
        %v911 = vadd.f32 %v897, %v909
        %vm912 = vcmask 1041408
        %v913 = vrot.slane %v888, 6
        %v914 = vrot.slane %v890, 6
        %v915 = vsel %vm912, %v913, %v914
        %v918 = vsel %vm912, 0.0, %v913
        %v919 = vperm.slane %v782, 1
        %v920 = vmul.f32 %v918, %v919
        %v921 = vmul.f32 %v915, %v919
        %v922 = vadd.f32 %v910, %v920
        %v923 = vadd.f32 %v911, %v921
        %vm924 = vcmask 1040384
        %v925 = vrot.slane %v888, 7
        %v926 = vrot.slane %v890, 7
        %v927 = vsel %vm924, %v925, %v926
        %v930 = vsel %vm924, 0.0, %v925
        %v931 = vperm.slane %v782, 2
        %v932 = vmul.f32 %v930, %v931
        %v933 = vmul.f32 %v927, %v931
        %v934 = vadd.f32 %v922, %v932
        %v935 = vadd.f32 %v923, %v933
        %v936 = vxor.u32 %v934, 2147483648
        %v937 = vxor.u32 %v935, 2147483648
        %v938 = vmul.f32 %v936, 1.442695
        %v939 = vpow.pop %v938
        %v940 = vmul.f32 %v937, 1.442695
        %v941 = vpow.pop %v940
        %v942 = vadd.f32 %v939, 1.0
        %v943 = vadd.f32 %v941, 1.0
        %v944 = vrcp.pop %v942
        %v945 = vmul.f32 %v942, %v944
        %v946 = vsub.f32 1.0, %v945
        %v947 = vmul.f32 %v944, %v946
        %v948 = vadd.f32 %v944, %v947
        %vm949 = vweird.f32 %v942
        %vm950 = vweird.f32 %v944
        %vm951 = vmor %vm949, %vm950
        %v952 = vsel %vm951, %v944, %v948
        %v953 = vand.u32 2147483647, %v942
        %vm954 = vcmp.eq.f32.partialorder %v953, 8.507059e+37
        %v955 = vand.u32 %v942, 2147483648
        %v956 = vor.u32 1.1754944e-38, %v955
        %v957 = vsel %vm954, %v956, %v952
        %v958 = vmul.f32 1.0, %v957
        %v959 = vrcp.pop %v943
        %v960 = vmul.f32 %v943, %v959
        %v961 = vsub.f32 1.0, %v960
        %v962 = vmul.f32 %v959, %v961
        %v963 = vadd.f32 %v959, %v962
        %vm964 = vweird.f32 %v943
        %vm965 = vweird.f32 %v959
        %vm966 = vmor %vm964, %vm965
        %v967 = vsel %vm966, %v959, %v963
        %v968 = vand.u32 2147483647, %v943
        %vm969 = vcmp.eq.f32.partialorder %v968, 8.507059e+37
        %v970 = vand.u32 %v943, 2147483648
        %v971 = vor.u32 1.1754944e-38, %v970
        %v972 = vsel %vm969, %v971, %v967
        %v973 = vmul.f32 1.0, %v972
        %v974 = vmul.f32 %v934, %v958
        %v975 = vmul.f32 %v935, %v973
        %v976 = vpack.c.bf16 %v975, %v974
        %vm977 = vcmask 523264
        %v979 = vsel %vm977, %v976, 0
        %981 = vmatpush.bf16.msra.mxu0 0
        %982 = vmatpush.bf16.msra.mxu0 0
        %983 = vmatpush.bf16.msra.mxu0 0
        %984 = vmatpush.bf16.msra.mxu0 0
        %985 = vmatpush.bf16.msra.mxu0 %v800
        %986 = vmatpush.bf16.msra.mxu0 %v799
        %987 = vmatpush.bf16.msra.mxu0 %v798
        %988 = vmatpush.bf16.msra.mxu0 %v797
        %989 = vmatmul.bf16.gmra.mxu0 %v979
        %v990 = vpop.f32.mrf.mxu0
        %v991 = vadd.f32 0.0, %v990
        %v992 = vpop.f32.mrf.mxu0
        %v993 = vadd.f32 0.0, %v992
        %994 = vdwg.mxu0
        %v995 = vperm.slane %v782, 5
        %997 = vset.pattern.permute.xlu0 0
        %998 = vperm.xlu0 %997, %v991
        %v999 = vpop.permute.xlu0 %998
        %1002 = vset.pattern.permute.xlu0 0
        %1003 = vperm.xlu0 %1002, %v993
        %v1004 = vpop.permute.xlu0 %1003
        %v1006 = vperm.slane %v801, 0
        %v1007 = vmul.f32 %v999, %v1006
        %v1008 = vmul.f32 %v1004, %v1006
        %v1009 = vadd.f32 %v995, %v1007
        %v1010 = vadd.f32 %v995, %v1008
        %1011 = vset.pattern.permute.xlu0 1
        %1012 = vperm.xlu0 %1011, %v991
        %v1013 = vpop.permute.xlu0 %1012
        %1015 = vset.pattern.permute.xlu0 1
        %1016 = vperm.xlu0 %1015, %v993
        %v1017 = vpop.permute.xlu0 %1016
        %v1019 = vperm.slane %v801, 1
        %v1020 = vmul.f32 %v1013, %v1019
        %v1021 = vmul.f32 %v1017, %v1019
        %v1022 = vadd.f32 %v1009, %v1020
        %v1023 = vadd.f32 %v1010, %v1021
        %v1024 = vmax.f32 %v1022, 0.0
        %v1025 = vmax.f32 %v1023, 0.0
        %vm1026 = vcmp.ne.f32.partialorder %v1022, %v1022
        %vm1027 = vcmp.ne.f32.partialorder %v1023, %v1023
        %v1028 = vadd.f32 %v1022, 0.0
        %v1029 = vadd.f32 %v1023, 0.0
        %v1030 = vand.u32 2147483647, %v1022
        %v1031 = vand.u32 2147483647, %v1023
        %v1032 = vsub.f32 0.0, %v1030
        %v1033 = vsub.f32 0.0, %v1031
        %v1034 = vmul.f32 %v1032, 1.442695
        %v1035 = vpow.pop %v1034
        %v1036 = vmul.f32 %v1033, 1.442695
        %v1037 = vpow.pop %v1036
        %v1038 = vadd.f32 %v1035, 1.0
        %v1039 = vlog2.pop %v1038
        %v1040 = vmul.f32 %v1039, 0.6931472
        %v1041 = vmul.f32 -0.5, %v1035
        %v1042 = vadd.f32 %v1041, 1.0
        %v1043 = vmul.f32 %v1042, %v1035
        %v1044 = vand.u32 2147483647, %v1035
        %vm1045 = vcmp.lt.f32.partialorder %v1044, 0.0004427343
        %v1046 = vsel %vm1045, %v1043, %v1040
        %v1047 = vadd.f32 %v1037, 1.0
        %v1048 = vlog2.pop %v1047
        %v1049 = vmul.f32 %v1048, 0.6931472
        %v1050 = vmul.f32 -0.5, %v1037
        %v1051 = vadd.f32 %v1050, 1.0
        %v1052 = vmul.f32 %v1051, %v1037
        %v1053 = vand.u32 2147483647, %v1037
        %vm1054 = vcmp.lt.f32.partialorder %v1053, 0.0004427343
        %v1055 = vsel %vm1054, %v1052, %v1049
        %v1056 = vadd.f32 %v1024, %v1046
        %v1057 = vadd.f32 %v1025, %v1055
        %v1058 = vsel %vm1026, %v1028, %v1056
        %v1059 = vsel %vm1027, %v1029, %v1057
        %v1060 = vmul.f32 %v802, 1.442695
        %v1061 = vpow.pop %v1060
        %v1062 = vmul.f32 %v803, 1.442695
        %v1063 = vpow.pop %v1062
        %v1064 = vsub.f32 0.0, %v1061
        %v1065 = vsub.f32 0.0, %v1063
        %vm1066 = vcmask 130048
        %v1068 = vsel %vm1066, %v525, 0
        %v1071 = vsel %vm1066, %v526, 0
        %v1074 = vsel %vm1066, %v527, 0
        %v1077 = vsel %vm1066, %v528, 0
        %v1080 = vsel %vm1066, %v529, 0
        %v1083 = vsel %vm1066, %v530, 0
        %v1086 = vsel %vm1066, %v531, 0
        %v1089 = vsel %vm1066, %v532, 0
        %v1092 = vsel %vm1066, %v533, 0
        %v1095 = vsel %vm1066, %v534, 0
        %v1098 = vsel %vm1066, %v535, 0
        %v1101 = vsel %vm1066, %v536, 0
        %v1104 = vsel %vm1066, %v537, 0
        %v1107 = vsel %vm1066, %v538, 0
        %v1110 = vsel %vm1066, %v539, 0
        %v1113 = vsel %vm1066, %v540, 0
        %v1116 = vsel %vm1066, %v541, 0
        %v1119 = vsel %vm1066, %v542, 0
        %v1122 = vsel %vm1066, %v543, 0
        %v1125 = vsel %vm1066, %v544, 0
        %v1128 = vsel %vm1066, %v545, 0
        %v1131 = vsel %vm1066, %v546, 0
        %v1134 = vsel %vm1066, %v547, 0
        %v1137 = vsel %vm1066, %v548, 0
        %v1140 = vsel %vm1066, %v549, 0
        %v1143 = vsel %vm1066, %v550, 0
        %v1146 = vsel %vm1066, %v551, 0
        %v1149 = vsel %vm1066, %v552, 0
        %v1152 = vsel %vm1066, %v553, 0
        %v1155 = vsel %vm1066, %v554, 0
        %v1158 = vsel %vm1066, %v555, 0
        %v1161 = vsel %vm1066, %v556, 0
        %1163 = vmatpush.msra.mxu0 0.0
        %1164 = vmatpush.msra.mxu0 0.0
        %1165 = vmatpush.msra.mxu0 0.0
        %1166 = vmatpush.msra.mxu0 0.0
        %1167 = vmatpush.msra.mxu0 0.0
        %1168 = vmatpush.msra.mxu0 0.0
        %1169 = vmatpush.msra.mxu0 0.0
        %1170 = vmatpush.msra.mxu0 0.0
        %1171 = vmatpush.msra.mxu0 0.0
        %1172 = vmatpush.msra.mxu0 0.0
        %1173 = vmatpush.msra.mxu0 0.0
        %1174 = vmatpush.msra.mxu0 0.0
        %1175 = vmatpush.msra.mxu0 0.0
        %1176 = vmatpush.msra.mxu0 0.0
        %1177 = vmatpush.msra.mxu0 %v1059
        %1178 = vmatpush.msra.mxu0 %v1058
        %1179 = vmatmul.f32.gmra.mxu0 %v1068
        %v1180 = vpop.f32.mrf.mxu0
        %v1181 = vadd.f32 0.0, %v1180
        %1182 = vmatmul.f32.gmra.mxu0 %v1071
        %v1183 = vpop.f32.mrf.mxu0
        %v1184 = vadd.f32 0.0, %v1183
        %1185 = vmatmul.f32.gmra.mxu0 %v1074
        %v1186 = vpop.f32.mrf.mxu0
        %v1187 = vadd.f32 0.0, %v1186
        %1188 = vmatmul.f32.gmra.mxu0 %v1077
        %v1189 = vpop.f32.mrf.mxu0
        %v1190 = vadd.f32 0.0, %v1189
        %1191 = vmatmul.f32.gmra.mxu0 %v1080
        %v1192 = vpop.f32.mrf.mxu0
        %v1193 = vadd.f32 0.0, %v1192
        %1194 = vmatmul.f32.gmra.mxu0 %v1083
        %v1195 = vpop.f32.mrf.mxu0
        %v1196 = vadd.f32 0.0, %v1195
        %1197 = vmatmul.f32.gmra.mxu0 %v1086
        %v1198 = vpop.f32.mrf.mxu0
        %v1199 = vadd.f32 0.0, %v1198
        %1200 = vmatmul.f32.gmra.mxu0 %v1089
        %v1201 = vpop.f32.mrf.mxu0
        %v1202 = vadd.f32 0.0, %v1201
        %1203 = vmatmul.f32.gmra.mxu0 %v1092
        %v1204 = vpop.f32.mrf.mxu0
        %v1205 = vadd.f32 0.0, %v1204
        %1206 = vmatmul.f32.gmra.mxu0 %v1095
        %v1207 = vpop.f32.mrf.mxu0
        %v1208 = vadd.f32 0.0, %v1207
        %1209 = vmatmul.f32.gmra.mxu0 %v1098
        %v1210 = vpop.f32.mrf.mxu0
        %v1211 = vadd.f32 0.0, %v1210
        %1212 = vmatmul.f32.gmra.mxu0 %v1101
        %v1213 = vpop.f32.mrf.mxu0
        %v1214 = vadd.f32 0.0, %v1213
        %1215 = vmatmul.f32.gmra.mxu0 %v1104
        %v1216 = vpop.f32.mrf.mxu0
        %v1217 = vadd.f32 0.0, %v1216
        %1218 = vmatmul.f32.gmra.mxu0 %v1107
        %v1219 = vpop.f32.mrf.mxu0
        %v1220 = vadd.f32 0.0, %v1219
        %1221 = vmatmul.f32.gmra.mxu0 %v1110
        %v1222 = vpop.f32.mrf.mxu0
        %v1223 = vadd.f32 0.0, %v1222
        %1224 = vmatmul.f32.gmra.mxu0 %v1113
        %v1225 = vpop.f32.mrf.mxu0
        %v1226 = vadd.f32 0.0, %v1225
        %1227 = vmatmul.f32.gmra.mxu0 %v1116
        %v1228 = vpop.f32.mrf.mxu0
        %v1229 = vadd.f32 0.0, %v1228
        %1230 = vmatmul.f32.gmra.mxu0 %v1119
        %v1231 = vpop.f32.mrf.mxu0
        %v1232 = vadd.f32 0.0, %v1231
        %1233 = vmatmul.f32.gmra.mxu0 %v1122
        %v1234 = vpop.f32.mrf.mxu0
        %v1235 = vadd.f32 0.0, %v1234
        %1236 = vmatmul.f32.gmra.mxu0 %v1125
        %v1237 = vpop.f32.mrf.mxu0
        %v1238 = vadd.f32 0.0, %v1237
        %1239 = vmatmul.f32.gmra.mxu0 %v1128
        %v1240 = vpop.f32.mrf.mxu0
        %v1241 = vadd.f32 0.0, %v1240
        %1242 = vmatmul.f32.gmra.mxu0 %v1131
        %v1243 = vpop.f32.mrf.mxu0
        %v1244 = vadd.f32 0.0, %v1243
        %1245 = vmatmul.f32.gmra.mxu0 %v1134
        %v1246 = vpop.f32.mrf.mxu0
        %v1247 = vadd.f32 0.0, %v1246
        %1248 = vmatmul.f32.gmra.mxu0 %v1137
        %v1249 = vpop.f32.mrf.mxu0
        %v1250 = vadd.f32 0.0, %v1249
        %1251 = vmatmul.f32.gmra.mxu0 %v1140
        %v1252 = vpop.f32.mrf.mxu0
        %v1253 = vadd.f32 0.0, %v1252
        %1254 = vmatmul.f32.gmra.mxu0 %v1143
        %v1255 = vpop.f32.mrf.mxu0
        %v1256 = vadd.f32 0.0, %v1255
        %1257 = vmatmul.f32.gmra.mxu0 %v1146
        %v1258 = vpop.f32.mrf.mxu0
        %v1259 = vadd.f32 0.0, %v1258
        %1260 = vmatmul.f32.gmra.mxu0 %v1149
        %v1261 = vpop.f32.mrf.mxu0
        %v1262 = vadd.f32 0.0, %v1261
        %1263 = vmatmul.f32.gmra.mxu0 %v1152
        %v1264 = vpop.f32.mrf.mxu0
        %v1265 = vadd.f32 0.0, %v1264
        %1266 = vmatmul.f32.gmra.mxu0 %v1155
        %v1267 = vpop.f32.mrf.mxu0
        %v1268 = vadd.f32 0.0, %v1267
        %1269 = vmatmul.f32.gmra.mxu0 %v1158
        %v1270 = vpop.f32.mrf.mxu0
        %v1271 = vadd.f32 0.0, %v1270
        %1272 = vmatmul.f32.gmra.mxu0 %v1161
        %v1273 = vpop.f32.mrf.mxu0
        %v1274 = vadd.f32 0.0, %v1273
        %1275 = vdwg.mxu0
        %v1276 = vmul.f32 %v1058, %v974
        %v1277 = vmul.f32 %v1059, %v975
        %1278 = vmatpush.msra.mxu0 0.0
        %1279 = vmatpush.msra.mxu0 0.0
        %1280 = vmatpush.msra.mxu0 0.0
        %1281 = vmatpush.msra.mxu0 0.0
        %1282 = vmatpush.msra.mxu0 0.0
        %1283 = vmatpush.msra.mxu0 0.0
        %1284 = vmatpush.msra.mxu0 0.0
        %1285 = vmatpush.msra.mxu0 0.0
        %1286 = vmatpush.msra.mxu0 0.0
        %1287 = vmatpush.msra.mxu0 0.0
        %1288 = vmatpush.msra.mxu0 0.0
        %1289 = vmatpush.msra.mxu0 0.0
        %1290 = vmatpush.msra.mxu0 0.0
        %1291 = vmatpush.msra.mxu0 0.0
        %1292 = vmatpush.msra.mxu0 %v1277
        %1293 = vmatpush.msra.mxu0 %v1276
        %1294 = vmatmul.f32.gmra.mxu0 %v1068
        %v1295 = vpop.f32.mrf.mxu0
        %v1296 = vadd.f32 0.0, %v1295
        %1297 = vmatmul.f32.gmra.mxu0 %v1071
        %v1298 = vpop.f32.mrf.mxu0
        %v1299 = vadd.f32 0.0, %v1298
        %1300 = vmatmul.f32.gmra.mxu0 %v1074
        %v1301 = vpop.f32.mrf.mxu0
        %v1302 = vadd.f32 0.0, %v1301
        %1303 = vmatmul.f32.gmra.mxu0 %v1077
        %v1304 = vpop.f32.mrf.mxu0
        %v1305 = vadd.f32 0.0, %v1304
        %1306 = vmatmul.f32.gmra.mxu0 %v1080
        %v1307 = vpop.f32.mrf.mxu0
        %v1308 = vadd.f32 0.0, %v1307
        %1309 = vmatmul.f32.gmra.mxu0 %v1083
        %v1310 = vpop.f32.mrf.mxu0
        %v1311 = vadd.f32 0.0, %v1310
        %1312 = vmatmul.f32.gmra.mxu0 %v1086
        %v1313 = vpop.f32.mrf.mxu0
        %v1314 = vadd.f32 0.0, %v1313
        %1315 = vmatmul.f32.gmra.mxu0 %v1089
        %v1316 = vpop.f32.mrf.mxu0
        %v1317 = vadd.f32 0.0, %v1316
        %1318 = vmatmul.f32.gmra.mxu0 %v1092
        %v1319 = vpop.f32.mrf.mxu0
        %v1320 = vadd.f32 0.0, %v1319
        %1321 = vmatmul.f32.gmra.mxu0 %v1095
        %v1322 = vpop.f32.mrf.mxu0
        %v1323 = vadd.f32 0.0, %v1322
        %1324 = vmatmul.f32.gmra.mxu0 %v1098
        %v1325 = vpop.f32.mrf.mxu0
        %v1326 = vadd.f32 0.0, %v1325
        %1327 = vmatmul.f32.gmra.mxu0 %v1101
        %v1328 = vpop.f32.mrf.mxu0
        %v1329 = vadd.f32 0.0, %v1328
        %1330 = vmatmul.f32.gmra.mxu0 %v1104
        %v1331 = vpop.f32.mrf.mxu0
        %v1332 = vadd.f32 0.0, %v1331
        %1333 = vmatmul.f32.gmra.mxu0 %v1107
        %v1334 = vpop.f32.mrf.mxu0
        %v1335 = vadd.f32 0.0, %v1334
        %1336 = vmatmul.f32.gmra.mxu0 %v1110
        %v1337 = vpop.f32.mrf.mxu0
        %v1338 = vadd.f32 0.0, %v1337
        %1339 = vmatmul.f32.gmra.mxu0 %v1113
        %v1340 = vpop.f32.mrf.mxu0
        %v1341 = vadd.f32 0.0, %v1340
        %1342 = vmatmul.f32.gmra.mxu0 %v1116
        %v1343 = vpop.f32.mrf.mxu0
        %v1344 = vadd.f32 0.0, %v1343
        %1345 = vmatmul.f32.gmra.mxu0 %v1119
        %v1346 = vpop.f32.mrf.mxu0
        %v1347 = vadd.f32 0.0, %v1346
        %1348 = vmatmul.f32.gmra.mxu0 %v1122
        %v1349 = vpop.f32.mrf.mxu0
        %v1350 = vadd.f32 0.0, %v1349
        %1351 = vmatmul.f32.gmra.mxu0 %v1125
        %v1352 = vpop.f32.mrf.mxu0
        %v1353 = vadd.f32 0.0, %v1352
        %1354 = vmatmul.f32.gmra.mxu0 %v1128
        %v1355 = vpop.f32.mrf.mxu0
        %v1356 = vadd.f32 0.0, %v1355
        %1357 = vmatmul.f32.gmra.mxu0 %v1131
        %v1358 = vpop.f32.mrf.mxu0
        %v1359 = vadd.f32 0.0, %v1358
        %1360 = vmatmul.f32.gmra.mxu0 %v1134
        %v1361 = vpop.f32.mrf.mxu0
        %v1362 = vadd.f32 0.0, %v1361
        %1363 = vmatmul.f32.gmra.mxu0 %v1137
        %v1364 = vpop.f32.mrf.mxu0
        %v1365 = vadd.f32 0.0, %v1364
        %1366 = vmatmul.f32.gmra.mxu0 %v1140
        %v1367 = vpop.f32.mrf.mxu0
        %v1368 = vadd.f32 0.0, %v1367
        %1369 = vmatmul.f32.gmra.mxu0 %v1143
        %v1370 = vpop.f32.mrf.mxu0
        %v1371 = vadd.f32 0.0, %v1370
        %1372 = vmatmul.f32.gmra.mxu0 %v1146
        %v1373 = vpop.f32.mrf.mxu0
        %v1374 = vadd.f32 0.0, %v1373
        %1375 = vmatmul.f32.gmra.mxu0 %v1149
        %v1376 = vpop.f32.mrf.mxu0
        %v1377 = vadd.f32 0.0, %v1376
        %1378 = vmatmul.f32.gmra.mxu0 %v1152
        %v1379 = vpop.f32.mrf.mxu0
        %v1380 = vadd.f32 0.0, %v1379
        %1381 = vmatmul.f32.gmra.mxu0 %v1155
        %v1382 = vpop.f32.mrf.mxu0
        %v1383 = vadd.f32 0.0, %v1382
        %1384 = vmatmul.f32.gmra.mxu0 %v1158
        %v1385 = vpop.f32.mrf.mxu0
        %v1386 = vadd.f32 0.0, %v1385
        %1387 = vmatmul.f32.gmra.mxu0 %v1161
        %v1388 = vpop.f32.mrf.mxu0
        %v1389 = vadd.f32 0.0, %v1388
        %1390 = vdwg.mxu0
        %v1392 = vsel %vm1066, %v749, 0
        %v1395 = vsel %vm1066, %v750, 0
        %v1398 = vsel %vm1066, %v751, 0
        %v1401 = vsel %vm1066, %v752, 0
        %v1404 = vsel %vm1066, %v753, 0
        %v1407 = vsel %vm1066, %v754, 0
        %v1410 = vsel %vm1066, %v755, 0
        %v1413 = vsel %vm1066, %v756, 0
        %v1416 = vsel %vm1066, %v757, 0
        %v1419 = vsel %vm1066, %v758, 0
        %v1422 = vsel %vm1066, %v759, 0
        %v1425 = vsel %vm1066, %v760, 0
        %v1428 = vsel %vm1066, %v761, 0
        %v1431 = vsel %vm1066, %v762, 0
        %v1434 = vsel %vm1066, %v763, 0
        %v1437 = vsel %vm1066, %v764, 0
        %v1440 = vsel %vm1066, %v765, 0
        %v1443 = vsel %vm1066, %v766, 0
        %v1446 = vsel %vm1066, %v767, 0
        %v1449 = vsel %vm1066, %v768, 0
        %v1452 = vsel %vm1066, %v769, 0
        %v1455 = vsel %vm1066, %v770, 0
        %v1458 = vsel %vm1066, %v771, 0
        %v1461 = vsel %vm1066, %v772, 0
        %v1464 = vsel %vm1066, %v773, 0
        %v1467 = vsel %vm1066, %v774, 0
        %v1470 = vsel %vm1066, %v775, 0
        %v1473 = vsel %vm1066, %v776, 0
        %v1476 = vsel %vm1066, %v777, 0
        %v1479 = vsel %vm1066, %v778, 0
        %v1482 = vsel %vm1066, %v779, 0
        %v1485 = vsel %vm1066, %v780, 0
        %1487 = vmatpush.msra.mxu0 0.0
        %1488 = vmatpush.msra.mxu0 0.0
        %1489 = vmatpush.msra.mxu0 0.0
        %1490 = vmatpush.msra.mxu0 0.0
        %1491 = vmatpush.msra.mxu0 0.0
        %1492 = vmatpush.msra.mxu0 0.0
        %1493 = vmatpush.msra.mxu0 0.0
        %1494 = vmatpush.msra.mxu0 0.0
        %1495 = vmatpush.msra.mxu0 0.0
        %1496 = vmatpush.msra.mxu0 0.0
        %1497 = vmatpush.msra.mxu0 0.0
        %1498 = vmatpush.msra.mxu0 0.0
        %1499 = vmatpush.msra.mxu0 0.0
        %1500 = vmatpush.msra.mxu0 0.0
        %1501 = vmatpush.msra.mxu0 %v1065
        %1502 = vmatpush.msra.mxu0 %v1064
        %1503 = vmatmul.f32.gmra.mxu0 %v1392
        %v1504 = vpop.f32.mrf.mxu0
        %v1505 = vadd.f32 0.0, %v1504
        %1506 = vmatmul.f32.gmra.mxu0 %v1395
        %v1507 = vpop.f32.mrf.mxu0
        %v1508 = vadd.f32 0.0, %v1507
        %1509 = vmatmul.f32.gmra.mxu0 %v1398
        %v1510 = vpop.f32.mrf.mxu0
        %v1511 = vadd.f32 0.0, %v1510
        %1512 = vmatmul.f32.gmra.mxu0 %v1401
        %v1513 = vpop.f32.mrf.mxu0
        %v1514 = vadd.f32 0.0, %v1513
        %1515 = vmatmul.f32.gmra.mxu0 %v1404
        %v1516 = vpop.f32.mrf.mxu0
        %v1517 = vadd.f32 0.0, %v1516
        %1518 = vmatmul.f32.gmra.mxu0 %v1407
        %v1519 = vpop.f32.mrf.mxu0
        %v1520 = vadd.f32 0.0, %v1519
        %1521 = vmatmul.f32.gmra.mxu0 %v1410
        %v1522 = vpop.f32.mrf.mxu0
        %v1523 = vadd.f32 0.0, %v1522
        %1524 = vmatmul.f32.gmra.mxu0 %v1413
        %v1525 = vpop.f32.mrf.mxu0
        %v1526 = vadd.f32 0.0, %v1525
        %1527 = vmatmul.f32.gmra.mxu0 %v1416
        %v1528 = vpop.f32.mrf.mxu0
        %v1529 = vadd.f32 0.0, %v1528
        %1530 = vmatmul.f32.gmra.mxu0 %v1419
        %v1531 = vpop.f32.mrf.mxu0
        %v1532 = vadd.f32 0.0, %v1531
        %1533 = vmatmul.f32.gmra.mxu0 %v1422
        %v1534 = vpop.f32.mrf.mxu0
        %v1535 = vadd.f32 0.0, %v1534
        %1536 = vmatmul.f32.gmra.mxu0 %v1425
        %v1537 = vpop.f32.mrf.mxu0
        %v1538 = vadd.f32 0.0, %v1537
        %1539 = vmatmul.f32.gmra.mxu0 %v1428
        %v1540 = vpop.f32.mrf.mxu0
        %v1541 = vadd.f32 0.0, %v1540
        %1542 = vmatmul.f32.gmra.mxu0 %v1431
        %v1543 = vpop.f32.mrf.mxu0
        %v1544 = vadd.f32 0.0, %v1543
        %1545 = vmatmul.f32.gmra.mxu0 %v1434
        %v1546 = vpop.f32.mrf.mxu0
        %v1547 = vadd.f32 0.0, %v1546
        %1548 = vmatmul.f32.gmra.mxu0 %v1437
        %v1549 = vpop.f32.mrf.mxu0
        %v1550 = vadd.f32 0.0, %v1549
        %1551 = vmatmul.f32.gmra.mxu0 %v1440
        %v1552 = vpop.f32.mrf.mxu0
        %v1553 = vadd.f32 0.0, %v1552
        %1554 = vmatmul.f32.gmra.mxu0 %v1443
        %v1555 = vpop.f32.mrf.mxu0
        %v1556 = vadd.f32 0.0, %v1555
        %1557 = vmatmul.f32.gmra.mxu0 %v1446
        %v1558 = vpop.f32.mrf.mxu0
        %v1559 = vadd.f32 0.0, %v1558
        %1560 = vmatmul.f32.gmra.mxu0 %v1449
        %v1561 = vpop.f32.mrf.mxu0
        %v1562 = vadd.f32 0.0, %v1561
        %1563 = vmatmul.f32.gmra.mxu0 %v1452
        %v1564 = vpop.f32.mrf.mxu0
        %v1565 = vadd.f32 0.0, %v1564
        %1566 = vmatmul.f32.gmra.mxu0 %v1455
        %v1567 = vpop.f32.mrf.mxu0
        %v1568 = vadd.f32 0.0, %v1567
        %1569 = vmatmul.f32.gmra.mxu0 %v1458
        %v1570 = vpop.f32.mrf.mxu0
        %v1571 = vadd.f32 0.0, %v1570
        %1572 = vmatmul.f32.gmra.mxu0 %v1461
        %v1573 = vpop.f32.mrf.mxu0
        %v1574 = vadd.f32 0.0, %v1573
        %1575 = vmatmul.f32.gmra.mxu0 %v1464
        %v1576 = vpop.f32.mrf.mxu0
        %v1577 = vadd.f32 0.0, %v1576
        %1578 = vmatmul.f32.gmra.mxu0 %v1467
        %v1579 = vpop.f32.mrf.mxu0
        %v1580 = vadd.f32 0.0, %v1579
        %1581 = vmatmul.f32.gmra.mxu0 %v1470
        %v1582 = vpop.f32.mrf.mxu0
        %v1583 = vadd.f32 0.0, %v1582
        %1584 = vmatmul.f32.gmra.mxu0 %v1473
        %v1585 = vpop.f32.mrf.mxu0
        %v1586 = vadd.f32 0.0, %v1585
        %1587 = vmatmul.f32.gmra.mxu0 %v1476
        %v1588 = vpop.f32.mrf.mxu0
        %v1589 = vadd.f32 0.0, %v1588
        %1590 = vmatmul.f32.gmra.mxu0 %v1479
        %v1591 = vpop.f32.mrf.mxu0
        %v1592 = vadd.f32 0.0, %v1591
        %1593 = vmatmul.f32.gmra.mxu0 %v1482
        %v1594 = vpop.f32.mrf.mxu0
        %v1595 = vadd.f32 0.0, %v1594
        %1596 = vmatmul.f32.gmra.mxu0 %v1485
        %v1597 = vpop.f32.mrf.mxu0
        %v1598 = vadd.f32 0.0, %v1597
        %1599 = vdwg.mxu0
        %v1600 = vmul.f32 %v1181, %v1505
        %v1601 = vmul.f32 %v1184, %v1508
        %v1602 = vmul.f32 %v1187, %v1511
        %v1603 = vmul.f32 %v1190, %v1514
        %v1604 = vmul.f32 %v1193, %v1517
        %v1605 = vmul.f32 %v1196, %v1520
        %v1606 = vmul.f32 %v1199, %v1523
        %v1607 = vmul.f32 %v1202, %v1526
        %v1608 = vmul.f32 %v1205, %v1529
        %v1609 = vmul.f32 %v1208, %v1532
        %v1610 = vmul.f32 %v1211, %v1535
        %v1611 = vmul.f32 %v1214, %v1538
        %v1612 = vmul.f32 %v1217, %v1541
        %v1613 = vmul.f32 %v1220, %v1544
        %v1614 = vmul.f32 %v1223, %v1547
        %v1615 = vmul.f32 %v1226, %v1550
        %v1616 = vmul.f32 %v1229, %v1553
        %v1617 = vmul.f32 %v1232, %v1556
        %v1618 = vmul.f32 %v1235, %v1559
        %v1619 = vmul.f32 %v1238, %v1562
        %v1620 = vmul.f32 %v1241, %v1565
        %v1621 = vmul.f32 %v1244, %v1568
        %v1622 = vmul.f32 %v1247, %v1571
        %v1623 = vmul.f32 %v1250, %v1574
        %v1624 = vmul.f32 %v1253, %v1577
        %v1625 = vmul.f32 %v1256, %v1580
        %v1626 = vmul.f32 %v1259, %v1583
        %v1627 = vmul.f32 %v1262, %v1586
        %v1628 = vmul.f32 %v1265, %v1589
        %v1629 = vmul.f32 %v1268, %v1592
        %v1630 = vmul.f32 %v1271, %v1595
        %v1631 = vmul.f32 %v1274, %v1598
        %v1632 = vmul.f32 %v1600, 1.442695
        %v1633 = vpow.pop %v1632
        %v1634 = vmul.f32 %v1601, 1.442695
        %v1635 = vpow.pop %v1634
        %v1636 = vmul.f32 %v1602, 1.442695
        %v1637 = vpow.pop %v1636
        %v1638 = vmul.f32 %v1603, 1.442695
        %v1639 = vpow.pop %v1638
        %v1640 = vmul.f32 %v1604, 1.442695
        %v1641 = vpow.pop %v1640
        %v1642 = vmul.f32 %v1605, 1.442695
        %v1643 = vpow.pop %v1642
        %v1644 = vmul.f32 %v1606, 1.442695
        %v1645 = vpow.pop %v1644
        %v1646 = vmul.f32 %v1607, 1.442695
        %v1647 = vpow.pop %v1646
        %v1648 = vmul.f32 %v1608, 1.442695
        %v1649 = vpow.pop %v1648
        %v1650 = vmul.f32 %v1609, 1.442695
        %v1651 = vpow.pop %v1650
        %v1652 = vmul.f32 %v1610, 1.442695
        %v1653 = vpow.pop %v1652
        %v1654 = vmul.f32 %v1611, 1.442695
        %v1655 = vpow.pop %v1654
        %v1656 = vmul.f32 %v1612, 1.442695
        %v1657 = vpow.pop %v1656
        %v1658 = vmul.f32 %v1613, 1.442695
        %v1659 = vpow.pop %v1658
        %v1660 = vmul.f32 %v1614, 1.442695
        %v1661 = vpow.pop %v1660
        %v1662 = vmul.f32 %v1615, 1.442695
        %v1663 = vpow.pop %v1662
        %v1664 = vmul.f32 %v1616, 1.442695
        %v1665 = vpow.pop %v1664
        %v1666 = vmul.f32 %v1617, 1.442695
        %v1667 = vpow.pop %v1666
        %v1668 = vmul.f32 %v1618, 1.442695
        %v1669 = vpow.pop %v1668
        %v1670 = vmul.f32 %v1619, 1.442695
        %v1671 = vpow.pop %v1670
        %v1672 = vmul.f32 %v1620, 1.442695
        %v1673 = vpow.pop %v1672
        %v1674 = vmul.f32 %v1621, 1.442695
        %v1675 = vpow.pop %v1674
        %v1676 = vmul.f32 %v1622, 1.442695
        %v1677 = vpow.pop %v1676
        %v1678 = vmul.f32 %v1623, 1.442695
        %v1679 = vpow.pop %v1678
        %v1680 = vmul.f32 %v1624, 1.442695
        %v1681 = vpow.pop %v1680
        %v1682 = vmul.f32 %v1625, 1.442695
        %v1683 = vpow.pop %v1682
        %v1684 = vmul.f32 %v1626, 1.442695
        %v1685 = vpow.pop %v1684
        %v1686 = vmul.f32 %v1627, 1.442695
        %v1687 = vpow.pop %v1686
        %v1688 = vmul.f32 %v1628, 1.442695
        %v1689 = vpow.pop %v1688
        %v1690 = vmul.f32 %v1629, 1.442695
        %v1691 = vpow.pop %v1690
        %v1692 = vmul.f32 %v1630, 1.442695
        %v1693 = vpow.pop %v1692
        %v1694 = vmul.f32 %v1631, 1.442695
        %v1695 = vpow.pop %v1694
        %1696 = vrot.lane.b32.xlu0 %v991, 126
        %v1697 = vpop.permute.xlu0 %1696
        %1698 = vrot.lane.b32.xlu0 %v993, 126
        %v1699 = vpop.permute.xlu0 %1698
        %1702 = vmatpush.msra.mxu0 0.0
        %1703 = vmatpush.msra.mxu0 0.0
        %1704 = vmatpush.msra.mxu0 0.0
        %1705 = vmatpush.msra.mxu0 0.0
        %1706 = vmatpush.msra.mxu0 0.0
        %1707 = vmatpush.msra.mxu0 0.0
        %1708 = vmatpush.msra.mxu0 0.0
        %1709 = vmatpush.msra.mxu0 0.0
        %1710 = vmatpush.msra.mxu0 0.0
        %1711 = vmatpush.msra.mxu0 0.0
        %1712 = vmatpush.msra.mxu0 0.0
        %1713 = vmatpush.msra.mxu0 0.0
        %1714 = vmatpush.msra.mxu0 0.0
        %1715 = vmatpush.msra.mxu0 0.0
        %1716 = vmatpush.msra.mxu0 %v1699
        %1717 = vmatpush.msra.mxu0 %v1697
        %1718 = vmatmul.f32.gmra.mxu0 %v1068
        %v1719 = vpop.f32.mrf.mxu0
        %v1720 = vadd.f32 0.0, %v1719
        %1721 = vmatmul.f32.gmra.mxu0 %v1071
        %v1722 = vpop.f32.mrf.mxu0
        %v1723 = vadd.f32 0.0, %v1722
        %1724 = vmatmul.f32.gmra.mxu0 %v1074
        %v1725 = vpop.f32.mrf.mxu0
        %v1726 = vadd.f32 0.0, %v1725
        %1727 = vmatmul.f32.gmra.mxu0 %v1077
        %v1728 = vpop.f32.mrf.mxu0
        %v1729 = vadd.f32 0.0, %v1728
        %1730 = vmatmul.f32.gmra.mxu0 %v1080
        %v1731 = vpop.f32.mrf.mxu0
        %v1732 = vadd.f32 0.0, %v1731
        %1733 = vmatmul.f32.gmra.mxu0 %v1083
        %v1734 = vpop.f32.mrf.mxu0
        %v1735 = vadd.f32 0.0, %v1734
        %1736 = vmatmul.f32.gmra.mxu0 %v1086
        %v1737 = vpop.f32.mrf.mxu0
        %v1738 = vadd.f32 0.0, %v1737
        %1739 = vmatmul.f32.gmra.mxu0 %v1089
        %v1740 = vpop.f32.mrf.mxu0
        %v1741 = vadd.f32 0.0, %v1740
        %1742 = vmatmul.f32.gmra.mxu0 %v1092
        %v1743 = vpop.f32.mrf.mxu0
        %v1744 = vadd.f32 0.0, %v1743
        %1745 = vmatmul.f32.gmra.mxu0 %v1095
        %v1746 = vpop.f32.mrf.mxu0
        %v1747 = vadd.f32 0.0, %v1746
        %1748 = vmatmul.f32.gmra.mxu0 %v1098
        %v1749 = vpop.f32.mrf.mxu0
        %v1750 = vadd.f32 0.0, %v1749
        %1751 = vmatmul.f32.gmra.mxu0 %v1101
        %v1752 = vpop.f32.mrf.mxu0
        %v1753 = vadd.f32 0.0, %v1752
        %1754 = vmatmul.f32.gmra.mxu0 %v1104
        %v1755 = vpop.f32.mrf.mxu0
        %v1756 = vadd.f32 0.0, %v1755
        %1757 = vmatmul.f32.gmra.mxu0 %v1107
        %v1758 = vpop.f32.mrf.mxu0
        %v1759 = vadd.f32 0.0, %v1758
        %1760 = vmatmul.f32.gmra.mxu0 %v1110
        %v1761 = vpop.f32.mrf.mxu0
        %v1762 = vadd.f32 0.0, %v1761
        %1763 = vmatmul.f32.gmra.mxu0 %v1113
        %v1764 = vpop.f32.mrf.mxu0
        %v1765 = vadd.f32 0.0, %v1764
        %1766 = vmatmul.f32.gmra.mxu0 %v1116
        %v1767 = vpop.f32.mrf.mxu0
        %v1768 = vadd.f32 0.0, %v1767
        %1769 = vmatmul.f32.gmra.mxu0 %v1119
        %v1770 = vpop.f32.mrf.mxu0
        %v1771 = vadd.f32 0.0, %v1770
        %1772 = vmatmul.f32.gmra.mxu0 %v1122
        %v1773 = vpop.f32.mrf.mxu0
        %v1774 = vadd.f32 0.0, %v1773
        %1775 = vmatmul.f32.gmra.mxu0 %v1125
        %v1776 = vpop.f32.mrf.mxu0
        %v1777 = vadd.f32 0.0, %v1776
        %1778 = vmatmul.f32.gmra.mxu0 %v1128
        %v1779 = vpop.f32.mrf.mxu0
        %v1780 = vadd.f32 0.0, %v1779
        %1781 = vmatmul.f32.gmra.mxu0 %v1131
        %v1782 = vpop.f32.mrf.mxu0
        %v1783 = vadd.f32 0.0, %v1782
        %1784 = vmatmul.f32.gmra.mxu0 %v1134
        %v1785 = vpop.f32.mrf.mxu0
        %v1786 = vadd.f32 0.0, %v1785
        %1787 = vmatmul.f32.gmra.mxu0 %v1137
        %v1788 = vpop.f32.mrf.mxu0
        %v1789 = vadd.f32 0.0, %v1788
        %1790 = vmatmul.f32.gmra.mxu0 %v1140
        %v1791 = vpop.f32.mrf.mxu0
        %v1792 = vadd.f32 0.0, %v1791
        %1793 = vmatmul.f32.gmra.mxu0 %v1143
        %v1794 = vpop.f32.mrf.mxu0
        %v1795 = vadd.f32 0.0, %v1794
        %1796 = vmatmul.f32.gmra.mxu0 %v1146
        %v1797 = vpop.f32.mrf.mxu0
        %v1798 = vadd.f32 0.0, %v1797
        %1799 = vmatmul.f32.gmra.mxu0 %v1149
        %v1800 = vpop.f32.mrf.mxu0
        %v1801 = vadd.f32 0.0, %v1800
        %1802 = vmatmul.f32.gmra.mxu0 %v1152
        %v1803 = vpop.f32.mrf.mxu0
        %v1804 = vadd.f32 0.0, %v1803
        %1805 = vmatmul.f32.gmra.mxu0 %v1155
        %v1806 = vpop.f32.mrf.mxu0
        %v1807 = vadd.f32 0.0, %v1806
        %1808 = vmatmul.f32.gmra.mxu0 %v1158
        %v1809 = vpop.f32.mrf.mxu0
        %v1810 = vadd.f32 0.0, %v1809
        %1811 = vmatmul.f32.gmra.mxu0 %v1161
        %v1812 = vpop.f32.mrf.mxu0
        %v1813 = vadd.f32 0.0, %v1812
        %1814 = vdwg.mxu0
        %v1815 = vmul.f32 %v1720, %v749
        %v1816 = vmul.f32 %v1723, %v750
        %v1817 = vmul.f32 %v1726, %v751
        %v1818 = vmul.f32 %v1729, %v752
        %v1819 = vmul.f32 %v1732, %v753
        %v1820 = vmul.f32 %v1735, %v754
        %v1821 = vmul.f32 %v1738, %v755
        %v1822 = vmul.f32 %v1741, %v756
        %v1823 = vmul.f32 %v1744, %v757
        %v1824 = vmul.f32 %v1747, %v758
        %v1825 = vmul.f32 %v1750, %v759
        %v1826 = vmul.f32 %v1753, %v760
        %v1827 = vmul.f32 %v1756, %v761
        %v1828 = vmul.f32 %v1759, %v762
        %v1829 = vmul.f32 %v1762, %v763
        %v1830 = vmul.f32 %v1765, %v764
        %v1831 = vmul.f32 %v1768, %v765
        %v1832 = vmul.f32 %v1771, %v766
        %v1833 = vmul.f32 %v1774, %v767
        %v1834 = vmul.f32 %v1777, %v768
        %v1835 = vmul.f32 %v1780, %v769
        %v1836 = vmul.f32 %v1783, %v770
        %v1837 = vmul.f32 %v1786, %v771
        %v1838 = vmul.f32 %v1789, %v772
        %v1839 = vmul.f32 %v1792, %v773
        %v1840 = vmul.f32 %v1795, %v774
        %v1841 = vmul.f32 %v1798, %v775
        %v1842 = vmul.f32 %v1801, %v776
        %v1843 = vmul.f32 %v1804, %v777
        %v1844 = vmul.f32 %v1807, %v778
        %v1845 = vmul.f32 %v1810, %v779
        %v1846 = vmul.f32 %v1813, %v780
        %v1847 = vsel %vm1066, %v1815, 0.0
        %1848 = vadd.xlane.f32.xlu0 %v1847
        %v1849 = vpop.xlane.xlu0 %1848
        %v1850 = vsel %vm1066, %v1816, 0.0
        %1851 = vadd.xlane.f32.xlu0 %v1850
        %v1852 = vpop.xlane.xlu0 %1851
        %v1853 = vsel %vm1066, %v1817, 0.0
        %1854 = vadd.xlane.f32.xlu0 %v1853
        %v1855 = vpop.xlane.xlu0 %1854
        %v1856 = vsel %vm1066, %v1818, 0.0
        %1857 = vadd.xlane.f32.xlu0 %v1856
        %v1858 = vpop.xlane.xlu0 %1857
        %v1859 = vsel %vm1066, %v1819, 0.0
        %1860 = vadd.xlane.f32.xlu0 %v1859
        %v1861 = vpop.xlane.xlu0 %1860
        %v1862 = vsel %vm1066, %v1820, 0.0
        %1863 = vadd.xlane.f32.xlu0 %v1862
        %v1864 = vpop.xlane.xlu0 %1863
        %v1865 = vsel %vm1066, %v1821, 0.0
        %1866 = vadd.xlane.f32.xlu0 %v1865
        %v1867 = vpop.xlane.xlu0 %1866
        %v1868 = vsel %vm1066, %v1822, 0.0
        %1869 = vadd.xlane.f32.xlu0 %v1868
        %v1870 = vpop.xlane.xlu0 %1869
        %v1871 = vsel %vm1066, %v1823, 0.0
        %1872 = vadd.xlane.f32.xlu0 %v1871
        %v1873 = vpop.xlane.xlu0 %1872
        %v1874 = vsel %vm1066, %v1824, 0.0
        %1875 = vadd.xlane.f32.xlu0 %v1874
        %v1876 = vpop.xlane.xlu0 %1875
        %v1877 = vsel %vm1066, %v1825, 0.0
        %1878 = vadd.xlane.f32.xlu0 %v1877
        %v1879 = vpop.xlane.xlu0 %1878
        %v1880 = vsel %vm1066, %v1826, 0.0
        %1881 = vadd.xlane.f32.xlu0 %v1880
        %v1882 = vpop.xlane.xlu0 %1881
        %v1883 = vsel %vm1066, %v1827, 0.0
        %1884 = vadd.xlane.f32.xlu0 %v1883
        %v1885 = vpop.xlane.xlu0 %1884
        %v1886 = vsel %vm1066, %v1828, 0.0
        %1887 = vadd.xlane.f32.xlu0 %v1886
        %v1888 = vpop.xlane.xlu0 %1887
        %v1889 = vsel %vm1066, %v1829, 0.0
        %1890 = vadd.xlane.f32.xlu0 %v1889
        %v1891 = vpop.xlane.xlu0 %1890
        %v1892 = vsel %vm1066, %v1830, 0.0
        %1893 = vadd.xlane.f32.xlu0 %v1892
        %v1894 = vpop.xlane.xlu0 %1893
        %v1895 = vsel %vm1066, %v1831, 0.0
        %1896 = vadd.xlane.f32.xlu0 %v1895
        %v1897 = vpop.xlane.xlu0 %1896
        %v1898 = vsel %vm1066, %v1832, 0.0
        %1899 = vadd.xlane.f32.xlu0 %v1898
        %v1900 = vpop.xlane.xlu0 %1899
        %v1901 = vsel %vm1066, %v1833, 0.0
        %1902 = vadd.xlane.f32.xlu0 %v1901
        %v1903 = vpop.xlane.xlu0 %1902
        %v1904 = vsel %vm1066, %v1834, 0.0
        %1905 = vadd.xlane.f32.xlu0 %v1904
        %v1906 = vpop.xlane.xlu0 %1905
        %v1907 = vsel %vm1066, %v1835, 0.0
        %1908 = vadd.xlane.f32.xlu0 %v1907
        %v1909 = vpop.xlane.xlu0 %1908
        %v1910 = vsel %vm1066, %v1836, 0.0
        %1911 = vadd.xlane.f32.xlu0 %v1910
        %v1912 = vpop.xlane.xlu0 %1911
        %v1913 = vsel %vm1066, %v1837, 0.0
        %1914 = vadd.xlane.f32.xlu0 %v1913
        %v1915 = vpop.xlane.xlu0 %1914
        %v1916 = vsel %vm1066, %v1838, 0.0
        %1917 = vadd.xlane.f32.xlu0 %v1916
        %v1918 = vpop.xlane.xlu0 %1917
        %v1919 = vsel %vm1066, %v1839, 0.0
        %1920 = vadd.xlane.f32.xlu0 %v1919
        %v1921 = vpop.xlane.xlu0 %1920
        %v1922 = vsel %vm1066, %v1840, 0.0
        %1923 = vadd.xlane.f32.xlu0 %v1922
        %v1924 = vpop.xlane.xlu0 %1923
        %v1925 = vsel %vm1066, %v1841, 0.0
        %1926 = vadd.xlane.f32.xlu0 %v1925
        %v1927 = vpop.xlane.xlu0 %1926
        %v1928 = vsel %vm1066, %v1842, 0.0
        %1929 = vadd.xlane.f32.xlu0 %v1928
        %v1930 = vpop.xlane.xlu0 %1929
        %v1931 = vsel %vm1066, %v1843, 0.0
        %1932 = vadd.xlane.f32.xlu0 %v1931
        %v1933 = vpop.xlane.xlu0 %1932
        %v1934 = vsel %vm1066, %v1844, 0.0
        %1935 = vadd.xlane.f32.xlu0 %v1934
        %v1936 = vpop.xlane.xlu0 %1935
        %v1937 = vsel %vm1066, %v1845, 0.0
        %1938 = vadd.xlane.f32.xlu0 %v1937
        %v1939 = vpop.xlane.xlu0 %1938
        %v1940 = vsel %vm1066, %v1846, 0.0
        %1941 = vadd.xlane.f32.xlu0 %v1940
        %v1942 = vpop.xlane.xlu0 %1941
        %1943 = vrot.lane.b32.xlu0 %v991, 110
        %v1944 = vpop.permute.xlu0 %1943
        %1945 = vrot.lane.b32.xlu0 %v993, 110
        %v1946 = vpop.permute.xlu0 %1945
        %1949 = vmatpush.msra.mxu0 0.0
        %1950 = vmatpush.msra.mxu0 0.0
        %1951 = vmatpush.msra.mxu0 0.0
        %1952 = vmatpush.msra.mxu0 0.0
        %1953 = vmatpush.msra.mxu0 0.0
        %1954 = vmatpush.msra.mxu0 0.0
        %1955 = vmatpush.msra.mxu0 0.0
        %1956 = vmatpush.msra.mxu0 0.0
        %1957 = vmatpush.msra.mxu0 0.0
        %1958 = vmatpush.msra.mxu0 0.0
        %1959 = vmatpush.msra.mxu0 0.0
        %1960 = vmatpush.msra.mxu0 0.0
        %1961 = vmatpush.msra.mxu0 0.0
        %1962 = vmatpush.msra.mxu0 0.0
        %1963 = vmatpush.msra.mxu0 %v1946
        %1964 = vmatpush.msra.mxu0 %v1944
        %1965 = vmatmul.f32.gmra.mxu0 %v1068
        %v1966 = vpop.f32.mrf.mxu0
        %v1967 = vadd.f32 0.0, %v1966
        %1968 = vmatmul.f32.gmra.mxu0 %v1071
        %v1969 = vpop.f32.mrf.mxu0
        %v1970 = vadd.f32 0.0, %v1969
        %1971 = vmatmul.f32.gmra.mxu0 %v1074
        %v1972 = vpop.f32.mrf.mxu0
        %v1973 = vadd.f32 0.0, %v1972
        %1974 = vmatmul.f32.gmra.mxu0 %v1077
        %v1975 = vpop.f32.mrf.mxu0
        %v1976 = vadd.f32 0.0, %v1975
        %1977 = vmatmul.f32.gmra.mxu0 %v1080
        %v1978 = vpop.f32.mrf.mxu0
        %v1979 = vadd.f32 0.0, %v1978
        %1980 = vmatmul.f32.gmra.mxu0 %v1083
        %v1981 = vpop.f32.mrf.mxu0
        %v1982 = vadd.f32 0.0, %v1981
        %1983 = vmatmul.f32.gmra.mxu0 %v1086
        %v1984 = vpop.f32.mrf.mxu0
        %v1985 = vadd.f32 0.0, %v1984
        %1986 = vmatmul.f32.gmra.mxu0 %v1089
        %v1987 = vpop.f32.mrf.mxu0
        %v1988 = vadd.f32 0.0, %v1987
        %1989 = vmatmul.f32.gmra.mxu0 %v1092
        %v1990 = vpop.f32.mrf.mxu0
        %v1991 = vadd.f32 0.0, %v1990
        %1992 = vmatmul.f32.gmra.mxu0 %v1095
        %v1993 = vpop.f32.mrf.mxu0
        %v1994 = vadd.f32 0.0, %v1993
        %1995 = vmatmul.f32.gmra.mxu0 %v1098
        %v1996 = vpop.f32.mrf.mxu0
        %v1997 = vadd.f32 0.0, %v1996
        %1998 = vmatmul.f32.gmra.mxu0 %v1101
        %v1999 = vpop.f32.mrf.mxu0
        %v2000 = vadd.f32 0.0, %v1999
        %2001 = vmatmul.f32.gmra.mxu0 %v1104
        %v2002 = vpop.f32.mrf.mxu0
        %v2003 = vadd.f32 0.0, %v2002
        %2004 = vmatmul.f32.gmra.mxu0 %v1107
        %v2005 = vpop.f32.mrf.mxu0
        %v2006 = vadd.f32 0.0, %v2005
        %2007 = vmatmul.f32.gmra.mxu0 %v1110
        %v2008 = vpop.f32.mrf.mxu0
        %v2009 = vadd.f32 0.0, %v2008
        %2010 = vmatmul.f32.gmra.mxu0 %v1113
        %v2011 = vpop.f32.mrf.mxu0
        %v2012 = vadd.f32 0.0, %v2011
        %2013 = vmatmul.f32.gmra.mxu0 %v1116
        %v2014 = vpop.f32.mrf.mxu0
        %v2015 = vadd.f32 0.0, %v2014
        %2016 = vmatmul.f32.gmra.mxu0 %v1119
        %v2017 = vpop.f32.mrf.mxu0
        %v2018 = vadd.f32 0.0, %v2017
        %2019 = vmatmul.f32.gmra.mxu0 %v1122
        %v2020 = vpop.f32.mrf.mxu0
        %v2021 = vadd.f32 0.0, %v2020
        %2022 = vmatmul.f32.gmra.mxu0 %v1125
        %v2023 = vpop.f32.mrf.mxu0
        %v2024 = vadd.f32 0.0, %v2023
        %2025 = vmatmul.f32.gmra.mxu0 %v1128
        %v2026 = vpop.f32.mrf.mxu0
        %v2027 = vadd.f32 0.0, %v2026
        %2028 = vmatmul.f32.gmra.mxu0 %v1131
        %v2029 = vpop.f32.mrf.mxu0
        %v2030 = vadd.f32 0.0, %v2029
        %2031 = vmatmul.f32.gmra.mxu0 %v1134
        %v2032 = vpop.f32.mrf.mxu0
        %v2033 = vadd.f32 0.0, %v2032
        %2034 = vmatmul.f32.gmra.mxu0 %v1137
        %v2035 = vpop.f32.mrf.mxu0
        %v2036 = vadd.f32 0.0, %v2035
        %2037 = vmatmul.f32.gmra.mxu0 %v1140
        %v2038 = vpop.f32.mrf.mxu0
        %v2039 = vadd.f32 0.0, %v2038
        %2040 = vmatmul.f32.gmra.mxu0 %v1143
        %v2041 = vpop.f32.mrf.mxu0
        %v2042 = vadd.f32 0.0, %v2041
        %2043 = vmatmul.f32.gmra.mxu0 %v1146
        %v2044 = vpop.f32.mrf.mxu0
        %v2045 = vadd.f32 0.0, %v2044
        %2046 = vmatmul.f32.gmra.mxu0 %v1149
        %v2047 = vpop.f32.mrf.mxu0
        %v2048 = vadd.f32 0.0, %v2047
        %2049 = vmatmul.f32.gmra.mxu0 %v1152
        %v2050 = vpop.f32.mrf.mxu0
        %v2051 = vadd.f32 0.0, %v2050
        %2052 = vmatmul.f32.gmra.mxu0 %v1155
        %v2053 = vpop.f32.mrf.mxu0
        %v2054 = vadd.f32 0.0, %v2053
        %2055 = vmatmul.f32.gmra.mxu0 %v1158
        %v2056 = vpop.f32.mrf.mxu0
        %v2057 = vadd.f32 0.0, %v2056
        %2058 = vmatmul.f32.gmra.mxu0 %v1161
        %v2059 = vpop.f32.mrf.mxu0
        %v2060 = vadd.f32 0.0, %v2059
        %2061 = vdwg.mxu0
        %v2062 = vmul.f32 %v1967, %v749
        %v2063 = vmul.f32 %v1970, %v750
        %v2064 = vmul.f32 %v1973, %v751
        %v2065 = vmul.f32 %v1976, %v752
        %v2066 = vmul.f32 %v1979, %v753
        %v2067 = vmul.f32 %v1982, %v754
        %v2068 = vmul.f32 %v1985, %v755
        %v2069 = vmul.f32 %v1988, %v756
        %v2070 = vmul.f32 %v1991, %v757
        %v2071 = vmul.f32 %v1994, %v758
        %v2072 = vmul.f32 %v1997, %v759
        %v2073 = vmul.f32 %v2000, %v760
        %v2074 = vmul.f32 %v2003, %v761
        %v2075 = vmul.f32 %v2006, %v762
        %v2076 = vmul.f32 %v2009, %v763
        %v2077 = vmul.f32 %v2012, %v764
        %v2078 = vmul.f32 %v2015, %v765
        %v2079 = vmul.f32 %v2018, %v766
        %v2080 = vmul.f32 %v2021, %v767
        %v2081 = vmul.f32 %v2024, %v768
        %v2082 = vmul.f32 %v2027, %v769
        %v2083 = vmul.f32 %v2030, %v770
        %v2084 = vmul.f32 %v2033, %v771
        %v2085 = vmul.f32 %v2036, %v772
        %v2086 = vmul.f32 %v2039, %v773
        %v2087 = vmul.f32 %v2042, %v774
        %v2088 = vmul.f32 %v2045, %v775
        %v2089 = vmul.f32 %v2048, %v776
        %v2090 = vmul.f32 %v2051, %v777
        %v2091 = vmul.f32 %v2054, %v778
        %v2092 = vmul.f32 %v2057, %v779
        %v2093 = vmul.f32 %v2060, %v780
        %v2094 = vsel %vm1066, %v2062, 0.0
        %2095 = vadd.xlane.f32.xlu0 %v2094
        %v2096 = vpop.xlane.xlu0 %2095
        %v2097 = vsel %vm1066, %v2063, 0.0
        %2098 = vadd.xlane.f32.xlu0 %v2097
        %v2099 = vpop.xlane.xlu0 %2098
        %v2100 = vsel %vm1066, %v2064, 0.0
        %2101 = vadd.xlane.f32.xlu0 %v2100
        %v2102 = vpop.xlane.xlu0 %2101
        %v2103 = vsel %vm1066, %v2065, 0.0
        %2104 = vadd.xlane.f32.xlu0 %v2103
        %v2105 = vpop.xlane.xlu0 %2104
        %v2106 = vsel %vm1066, %v2066, 0.0
        %2107 = vadd.xlane.f32.xlu0 %v2106
        %v2108 = vpop.xlane.xlu0 %2107
        %v2109 = vsel %vm1066, %v2067, 0.0
        %2110 = vadd.xlane.f32.xlu0 %v2109
        %v2111 = vpop.xlane.xlu0 %2110
        %v2112 = vsel %vm1066, %v2068, 0.0
        %2113 = vadd.xlane.f32.xlu0 %v2112
        %v2114 = vpop.xlane.xlu0 %2113
        %v2115 = vsel %vm1066, %v2069, 0.0
        %2116 = vadd.xlane.f32.xlu0 %v2115
        %v2117 = vpop.xlane.xlu0 %2116
        %v2118 = vsel %vm1066, %v2070, 0.0
        %2119 = vadd.xlane.f32.xlu0 %v2118
        %v2120 = vpop.xlane.xlu0 %2119
        %v2121 = vsel %vm1066, %v2071, 0.0
        %2122 = vadd.xlane.f32.xlu0 %v2121
        %v2123 = vpop.xlane.xlu0 %2122
        %v2124 = vsel %vm1066, %v2072, 0.0
        %2125 = vadd.xlane.f32.xlu0 %v2124
        %v2126 = vpop.xlane.xlu0 %2125
        %v2127 = vsel %vm1066, %v2073, 0.0
        %2128 = vadd.xlane.f32.xlu0 %v2127
        %v2129 = vpop.xlane.xlu0 %2128
        %v2130 = vsel %vm1066, %v2074, 0.0
        %2131 = vadd.xlane.f32.xlu0 %v2130
        %v2132 = vpop.xlane.xlu0 %2131
        %v2133 = vsel %vm1066, %v2075, 0.0
        %2134 = vadd.xlane.f32.xlu0 %v2133
        %v2135 = vpop.xlane.xlu0 %2134
        %v2136 = vsel %vm1066, %v2076, 0.0
        %2137 = vadd.xlane.f32.xlu0 %v2136
        %v2138 = vpop.xlane.xlu0 %2137
        %v2139 = vsel %vm1066, %v2077, 0.0
        %2140 = vadd.xlane.f32.xlu0 %v2139
        %v2141 = vpop.xlane.xlu0 %2140
        %v2142 = vsel %vm1066, %v2078, 0.0
        %2143 = vadd.xlane.f32.xlu0 %v2142
        %v2144 = vpop.xlane.xlu0 %2143
        %v2145 = vsel %vm1066, %v2079, 0.0
        %2146 = vadd.xlane.f32.xlu0 %v2145
        %v2147 = vpop.xlane.xlu0 %2146
        %v2148 = vsel %vm1066, %v2080, 0.0
        %2149 = vadd.xlane.f32.xlu0 %v2148
        %v2150 = vpop.xlane.xlu0 %2149
        %v2151 = vsel %vm1066, %v2081, 0.0
        %2152 = vadd.xlane.f32.xlu0 %v2151
        %v2153 = vpop.xlane.xlu0 %2152
        %v2154 = vsel %vm1066, %v2082, 0.0
        %2155 = vadd.xlane.f32.xlu0 %v2154
        %v2156 = vpop.xlane.xlu0 %2155
        %v2157 = vsel %vm1066, %v2083, 0.0
        %2158 = vadd.xlane.f32.xlu0 %v2157
        %v2159 = vpop.xlane.xlu0 %2158
        %v2160 = vsel %vm1066, %v2084, 0.0
        %2161 = vadd.xlane.f32.xlu0 %v2160
        %v2162 = vpop.xlane.xlu0 %2161
        %v2163 = vsel %vm1066, %v2085, 0.0
        %2164 = vadd.xlane.f32.xlu0 %v2163
        %v2165 = vpop.xlane.xlu0 %2164
        %v2166 = vsel %vm1066, %v2086, 0.0
        %2167 = vadd.xlane.f32.xlu0 %v2166
        %v2168 = vpop.xlane.xlu0 %2167
        %v2169 = vsel %vm1066, %v2087, 0.0
        %2170 = vadd.xlane.f32.xlu0 %v2169
        %v2171 = vpop.xlane.xlu0 %2170
        %v2172 = vsel %vm1066, %v2088, 0.0
        %2173 = vadd.xlane.f32.xlu0 %v2172
        %v2174 = vpop.xlane.xlu0 %2173
        %v2175 = vsel %vm1066, %v2089, 0.0
        %2176 = vadd.xlane.f32.xlu0 %v2175
        %v2177 = vpop.xlane.xlu0 %2176
        %v2178 = vsel %vm1066, %v2090, 0.0
        %2179 = vadd.xlane.f32.xlu0 %v2178
        %v2180 = vpop.xlane.xlu0 %2179
        %v2181 = vsel %vm1066, %v2091, 0.0
        %2182 = vadd.xlane.f32.xlu0 %v2181
        %v2183 = vpop.xlane.xlu0 %2182
        %v2184 = vsel %vm1066, %v2092, 0.0
        %2185 = vadd.xlane.f32.xlu0 %v2184
        %v2186 = vpop.xlane.xlu0 %2185
        %v2187 = vsel %vm1066, %v2093, 0.0
        %2188 = vadd.xlane.f32.xlu0 %v2187
        %v2189 = vpop.xlane.xlu0 %2188
        %v2190 = vmul.f32 %v1296, %v1849
        %v2191 = vmul.f32 %v1299, %v1852
        %v2192 = vmul.f32 %v1302, %v1855
        %v2193 = vmul.f32 %v1305, %v1858
        %v2194 = vmul.f32 %v1308, %v1861
        %v2195 = vmul.f32 %v1311, %v1864
        %v2196 = vmul.f32 %v1314, %v1867
        %v2197 = vmul.f32 %v1317, %v1870
        %v2198 = vmul.f32 %v1320, %v1873
        %v2199 = vmul.f32 %v1323, %v1876
        %v2200 = vmul.f32 %v1326, %v1879
        %v2201 = vmul.f32 %v1329, %v1882
        %v2202 = vmul.f32 %v1332, %v1885
        %v2203 = vmul.f32 %v1335, %v1888
        %v2204 = vmul.f32 %v1338, %v1891
        %v2205 = vmul.f32 %v1341, %v1894
        %v2206 = vmul.f32 %v1344, %v1897
        %v2207 = vmul.f32 %v1347, %v1900
        %v2208 = vmul.f32 %v1350, %v1903
        %v2209 = vmul.f32 %v1353, %v1906
        %v2210 = vmul.f32 %v1356, %v1909
        %v2211 = vmul.f32 %v1359, %v1912
        %v2212 = vmul.f32 %v1362, %v1915
        %v2213 = vmul.f32 %v1365, %v1918
        %v2214 = vmul.f32 %v1368, %v1921
        %v2215 = vmul.f32 %v1371, %v1924
        %v2216 = vmul.f32 %v1374, %v1927
        %v2217 = vmul.f32 %v1377, %v1930
        %v2218 = vmul.f32 %v1380, %v1933
        %v2219 = vmul.f32 %v1383, %v1936
        %v2220 = vmul.f32 %v1386, %v1939
        %v2221 = vmul.f32 %v1389, %v1942
        %v2222 = vmul.f32 %v1633, 0.0
        %v2223 = vmul.f32 %v1635, 0.0
        %v2224 = vadd.f32 %v2222, %v2190
        %v2225 = vadd.f32 %v2223, %v2191
        %v2226 = vmul.f32 %v2224, %v2096
        %v2227 = vmul.f32 %v2225, %v2099
        %v2228 = vsel %vm977, %v2226, 0.0
        %v2229 = vsel %vm977, %v2227, 0.0
        %v2230 = vadd.f32 %v2228, %v2229
        %v2231 = vrot.slane %v2230, 4
        %v2232 = vadd.f32 %v2230, %v2231
        %v2233 = vrot.slane %v2232, 2
        %v2234 = vadd.f32 %v2232, %v2233
        %v2235 = vrot.slane %v2234, 1
        %v2236 = vadd.f32 %v2234, %v2235
        %v2237 = vmul.f32 %v1637, %v2224
        %v2238 = vmul.f32 %v1639, %v2225
        %v2239 = vadd.f32 %v2237, %v2192
        %v2240 = vadd.f32 %v2238, %v2193
        %v2241 = vmul.f32 %v2239, %v2102
        %v2242 = vmul.f32 %v2240, %v2105
        %v2243 = vsel %vm977, %v2241, 0.0
        %v2244 = vsel %vm977, %v2242, 0.0
        %v2245 = vadd.f32 %v2243, %v2244
        %v2246 = vrot.slane %v2245, 4
        %v2247 = vadd.f32 %v2245, %v2246
        %v2248 = vrot.slane %v2247, 2
        %v2249 = vadd.f32 %v2247, %v2248
        %v2250 = vrot.slane %v2249, 1
        %v2251 = vadd.f32 %v2249, %v2250
        %v2252 = vmul.f32 %v1641, %v2239
        %v2253 = vmul.f32 %v1643, %v2240
        %v2254 = vadd.f32 %v2252, %v2194
        %v2255 = vadd.f32 %v2253, %v2195
        %v2256 = vmul.f32 %v2254, %v2108
        %v2257 = vmul.f32 %v2255, %v2111
        %v2258 = vsel %vm977, %v2256, 0.0
        %v2259 = vsel %vm977, %v2257, 0.0
        %v2260 = vadd.f32 %v2258, %v2259
        %v2261 = vrot.slane %v2260, 4
        %v2262 = vadd.f32 %v2260, %v2261
        %v2263 = vrot.slane %v2262, 2
        %v2264 = vadd.f32 %v2262, %v2263
        %v2265 = vrot.slane %v2264, 1
        %v2266 = vadd.f32 %v2264, %v2265
        %v2267 = vmul.f32 %v1645, %v2254
        %v2268 = vmul.f32 %v1647, %v2255
        %v2269 = vadd.f32 %v2267, %v2196
        %v2270 = vadd.f32 %v2268, %v2197
        %v2271 = vmul.f32 %v2269, %v2114
        %v2272 = vmul.f32 %v2270, %v2117
        %v2273 = vsel %vm977, %v2271, 0.0
        %v2274 = vsel %vm977, %v2272, 0.0
        %v2275 = vadd.f32 %v2273, %v2274
        %v2276 = vrot.slane %v2275, 4
        %v2277 = vadd.f32 %v2275, %v2276
        %v2278 = vrot.slane %v2277, 2
        %v2279 = vadd.f32 %v2277, %v2278
        %v2280 = vrot.slane %v2279, 1
        %v2281 = vadd.f32 %v2279, %v2280
        %v2282 = vmul.f32 %v1649, %v2269
        %v2283 = vmul.f32 %v1651, %v2270
        %v2284 = vadd.f32 %v2282, %v2198
        %v2285 = vadd.f32 %v2283, %v2199
        %v2286 = vmul.f32 %v2284, %v2120
        %v2287 = vmul.f32 %v2285, %v2123
        %v2288 = vsel %vm977, %v2286, 0.0
        %v2289 = vsel %vm977, %v2287, 0.0
        %v2290 = vadd.f32 %v2288, %v2289
        %v2291 = vrot.slane %v2290, 4
        %v2292 = vadd.f32 %v2290, %v2291
        %v2293 = vrot.slane %v2292, 2
        %v2294 = vadd.f32 %v2292, %v2293
        %v2295 = vrot.slane %v2294, 1
        %v2296 = vadd.f32 %v2294, %v2295
        %v2297 = vmul.f32 %v1653, %v2284
        %v2298 = vmul.f32 %v1655, %v2285
        %v2299 = vadd.f32 %v2297, %v2200
        %v2300 = vadd.f32 %v2298, %v2201
        %v2301 = vmul.f32 %v2299, %v2126
        %v2302 = vmul.f32 %v2300, %v2129
        %v2303 = vsel %vm977, %v2301, 0.0
        %v2304 = vsel %vm977, %v2302, 0.0
        %v2305 = vadd.f32 %v2303, %v2304
        %v2306 = vrot.slane %v2305, 4
        %v2307 = vadd.f32 %v2305, %v2306
        %v2308 = vrot.slane %v2307, 2
        %v2309 = vadd.f32 %v2307, %v2308
        %v2310 = vrot.slane %v2309, 1
        %v2311 = vadd.f32 %v2309, %v2310
        %v2312 = vmul.f32 %v1657, %v2299
        %v2313 = vmul.f32 %v1659, %v2300
        %v2314 = vadd.f32 %v2312, %v2202
        %v2315 = vadd.f32 %v2313, %v2203
        %v2316 = vmul.f32 %v2314, %v2132
        %v2317 = vmul.f32 %v2315, %v2135
        %v2318 = vsel %vm977, %v2316, 0.0
        %v2319 = vsel %vm977, %v2317, 0.0
        %v2320 = vadd.f32 %v2318, %v2319
        %v2321 = vrot.slane %v2320, 4
        %v2322 = vadd.f32 %v2320, %v2321
        %v2323 = vrot.slane %v2322, 2
        %v2324 = vadd.f32 %v2322, %v2323
        %v2325 = vrot.slane %v2324, 1
        %v2326 = vadd.f32 %v2324, %v2325
        %v2327 = vmul.f32 %v1661, %v2314
        %v2328 = vmul.f32 %v1663, %v2315
        %v2329 = vadd.f32 %v2327, %v2204
        %v2330 = vadd.f32 %v2328, %v2205
        %v2331 = vmul.f32 %v2329, %v2138
        %v2332 = vmul.f32 %v2330, %v2141
        %v2333 = vsel %vm977, %v2331, 0.0
        %v2334 = vsel %vm977, %v2332, 0.0
        %v2335 = vadd.f32 %v2333, %v2334
        %v2336 = vrot.slane %v2335, 4
        %v2337 = vadd.f32 %v2335, %v2336
        %v2338 = vrot.slane %v2337, 2
        %v2339 = vadd.f32 %v2337, %v2338
        %v2340 = vrot.slane %v2339, 1
        %v2341 = vadd.f32 %v2339, %v2340
        %v2342 = vmul.f32 %v1665, %v2329
        %v2343 = vmul.f32 %v1667, %v2330
        %v2344 = vadd.f32 %v2342, %v2206
        %v2345 = vadd.f32 %v2343, %v2207
        %v2346 = vmul.f32 %v2344, %v2144
        %v2347 = vmul.f32 %v2345, %v2147
        %v2348 = vsel %vm977, %v2346, 0.0
        %v2349 = vsel %vm977, %v2347, 0.0
        %v2350 = vadd.f32 %v2348, %v2349
        %v2351 = vrot.slane %v2350, 4
        %v2352 = vadd.f32 %v2350, %v2351
        %v2353 = vrot.slane %v2352, 2
        %v2354 = vadd.f32 %v2352, %v2353
        %v2355 = vrot.slane %v2354, 1
        %v2356 = vadd.f32 %v2354, %v2355
        %v2357 = vmul.f32 %v1669, %v2344
        %v2358 = vmul.f32 %v1671, %v2345
        %v2359 = vadd.f32 %v2357, %v2208
        %v2360 = vadd.f32 %v2358, %v2209
        %v2361 = vmul.f32 %v2359, %v2150
        %v2362 = vmul.f32 %v2360, %v2153
        %v2363 = vsel %vm977, %v2361, 0.0
        %v2364 = vsel %vm977, %v2362, 0.0
        %v2365 = vadd.f32 %v2363, %v2364
        %v2366 = vrot.slane %v2365, 4
        %v2367 = vadd.f32 %v2365, %v2366
        %v2368 = vrot.slane %v2367, 2
        %v2369 = vadd.f32 %v2367, %v2368
        %v2370 = vrot.slane %v2369, 1
        %v2371 = vadd.f32 %v2369, %v2370
        %v2372 = vmul.f32 %v1673, %v2359
        %v2373 = vmul.f32 %v1675, %v2360
        %v2374 = vadd.f32 %v2372, %v2210
        %v2375 = vadd.f32 %v2373, %v2211
        %v2376 = vmul.f32 %v2374, %v2156
        %v2377 = vmul.f32 %v2375, %v2159
        %v2378 = vsel %vm977, %v2376, 0.0
        %v2379 = vsel %vm977, %v2377, 0.0
        %v2380 = vadd.f32 %v2378, %v2379
        %v2381 = vrot.slane %v2380, 4
        %v2382 = vadd.f32 %v2380, %v2381
        %v2383 = vrot.slane %v2382, 2
        %v2384 = vadd.f32 %v2382, %v2383
        %v2385 = vrot.slane %v2384, 1
        %v2386 = vadd.f32 %v2384, %v2385
        %v2387 = vmul.f32 %v1677, %v2374
        %v2388 = vmul.f32 %v1679, %v2375
        %v2389 = vadd.f32 %v2387, %v2212
        %v2390 = vadd.f32 %v2388, %v2213
        %v2391 = vmul.f32 %v2389, %v2162
        %v2392 = vmul.f32 %v2390, %v2165
        %v2393 = vsel %vm977, %v2391, 0.0
        %v2394 = vsel %vm977, %v2392, 0.0
        %v2395 = vadd.f32 %v2393, %v2394
        %v2396 = vrot.slane %v2395, 4
        %v2397 = vadd.f32 %v2395, %v2396
        %v2398 = vrot.slane %v2397, 2
        %v2399 = vadd.f32 %v2397, %v2398
        %v2400 = vrot.slane %v2399, 1
        %v2401 = vadd.f32 %v2399, %v2400
        %v2402 = vmul.f32 %v1681, %v2389
        %v2403 = vmul.f32 %v1683, %v2390
        %v2404 = vadd.f32 %v2402, %v2214
        %v2405 = vadd.f32 %v2403, %v2215
        %v2406 = vmul.f32 %v2404, %v2168
        %v2407 = vmul.f32 %v2405, %v2171
        %v2408 = vsel %vm977, %v2406, 0.0
        %v2409 = vsel %vm977, %v2407, 0.0
        %v2410 = vadd.f32 %v2408, %v2409
        %v2411 = vrot.slane %v2410, 4
        %v2412 = vadd.f32 %v2410, %v2411
        %v2413 = vrot.slane %v2412, 2
        %v2414 = vadd.f32 %v2412, %v2413
        %v2415 = vrot.slane %v2414, 1
        %v2416 = vadd.f32 %v2414, %v2415
        %v2417 = vmul.f32 %v1685, %v2404
        %v2418 = vmul.f32 %v1687, %v2405
        %v2419 = vadd.f32 %v2417, %v2216
        %v2420 = vadd.f32 %v2418, %v2217
        %v2421 = vmul.f32 %v2419, %v2174
        %v2422 = vmul.f32 %v2420, %v2177
        %v2423 = vsel %vm977, %v2421, 0.0
        %v2424 = vsel %vm977, %v2422, 0.0
        %v2425 = vadd.f32 %v2423, %v2424
        %v2426 = vrot.slane %v2425, 4
        %v2427 = vadd.f32 %v2425, %v2426
        %v2428 = vrot.slane %v2427, 2
        %v2429 = vadd.f32 %v2427, %v2428
        %v2430 = vrot.slane %v2429, 1
        %v2431 = vadd.f32 %v2429, %v2430
        %v2432 = vmul.f32 %v1689, %v2419
        %v2433 = vmul.f32 %v1691, %v2420
        %v2434 = vadd.f32 %v2432, %v2218
        %v2435 = vadd.f32 %v2433, %v2219
        %v2436 = vmul.f32 %v2434, %v2180
        %v2437 = vmul.f32 %v2435, %v2183
        %v2438 = vsel %vm977, %v2436, 0.0
        %v2439 = vsel %vm977, %v2437, 0.0
        %v2440 = vadd.f32 %v2438, %v2439
        %v2441 = vrot.slane %v2440, 4
        %v2442 = vadd.f32 %v2440, %v2441
        %v2443 = vrot.slane %v2442, 2
        %v2444 = vadd.f32 %v2442, %v2443
        %v2445 = vrot.slane %v2444, 1
        %v2446 = vadd.f32 %v2444, %v2445
        %v2447 = vmul.f32 %v1693, %v2434
        %v2448 = vmul.f32 %v1695, %v2435
        %v2449 = vadd.f32 %v2447, %v2220
        %v2450 = vadd.f32 %v2448, %v2221
        %v2451 = vmul.f32 %v2449, %v2186
        %v2452 = vmul.f32 %v2450, %v2189
        %v2453 = vsel %vm977, %v2451, 0.0
        %v2454 = vsel %vm977, %v2452, 0.0
        %v2455 = vadd.f32 %v2453, %v2454
        %v2456 = vrot.slane %v2455, 4
        %v2457 = vadd.f32 %v2455, %v2456
        %v2458 = vrot.slane %v2457, 2
        %v2459 = vadd.f32 %v2457, %v2458
        %v2460 = vrot.slane %v2459, 1
        %v2461 = vadd.f32 %v2459, %v2460
        %v2462 = vsel %vm924, %v2236, %v2251
        %v2463 = vsel %vm912, %v2462, %v2266
        %v2464 = vsel %vm900, %v2463, %v2281
        %vm2465 = vcmask 1043456
        %v2466 = vsel %vm2465, %v2464, %v2296
        %vm2467 = vcmask 1044480
        %v2468 = vsel %vm2467, %v2466, %v2311
        %vm2469 = vcmask 1045504
        %v2470 = vsel %vm2469, %v2468, %v2326
        %vm2471 = vcmask 1046528
        %v2472 = vsel %vm2471, %v2470, %v2341
        %v2473 = vsel %vm924, %v2356, %v2371
        %v2474 = vsel %vm912, %v2473, %v2386
        %v2475 = vsel %vm900, %v2474, %v2401
        %v2476 = vsel %vm2465, %v2475, %v2416
        %v2477 = vsel %vm2467, %v2476, %v2431
        %v2478 = vsel %vm2469, %v2477, %v2446
        %v2479 = vsel %vm2471, %v2478, %v2461
        %v2480 = vperm.slane %v782, 6
        %v2481 = vmul.f32 %v2480, %v974
        %v2482 = vmul.f32 %v2480, %v975
        %v2483 = vadd.f32 %v2472, %v2481
        %v2484 = vadd.f32 %v2479, %v2482
        %v2485 = vxor.u32 %v888, 2147483648
        %v2486 = vxor.u32 %v890, 2147483648
        %v2487 = vmul.f32 %v2485, 1.442695
        %v2488 = vpow.pop %v2487
        %v2489 = vmul.f32 %v2486, 1.442695
        %v2490 = vpow.pop %v2489
        %v2491 = vadd.f32 %v2488, 1.0
        %v2492 = vadd.f32 %v2490, 1.0
        %v2493 = vrcp.pop %v2491
        %v2494 = vmul.f32 %v2491, %v2493
        %v2495 = vsub.f32 1.0, %v2494
        %v2496 = vmul.f32 %v2493, %v2495
        %v2497 = vadd.f32 %v2493, %v2496
        %vm2498 = vweird.f32 %v2491
        %vm2499 = vweird.f32 %v2493
        %vm2500 = vmor %vm2498, %vm2499
        %v2501 = vsel %vm2500, %v2493, %v2497
        %v2502 = vand.u32 2147483647, %v2491
        %vm2503 = vcmp.eq.f32.partialorder %v2502, 8.507059e+37
        %v2504 = vand.u32 %v2491, 2147483648
        %v2505 = vor.u32 1.1754944e-38, %v2504
        %v2506 = vsel %vm2503, %v2505, %v2501
        %v2507 = vmul.f32 1.0, %v2506
        %v2508 = vrcp.pop %v2492
        %v2509 = vmul.f32 %v2492, %v2508
        %v2510 = vsub.f32 1.0, %v2509
        %v2511 = vmul.f32 %v2508, %v2510
        %v2512 = vadd.f32 %v2508, %v2511
        %vm2513 = vweird.f32 %v2492
        %vm2514 = vweird.f32 %v2508
        %vm2515 = vmor %vm2513, %vm2514
        %v2516 = vsel %vm2515, %v2508, %v2512
        %v2517 = vand.u32 2147483647, %v2492
        %vm2518 = vcmp.eq.f32.partialorder %v2517, 8.507059e+37
        %v2519 = vand.u32 %v2492, 2147483648
        %v2520 = vor.u32 1.1754944e-38, %v2519
        %v2521 = vsel %vm2518, %v2520, %v2516
        %v2522 = vmul.f32 1.0, %v2521
        %v2523 = vmul.f32 %v888, %v2507
        %v2524 = vmul.f32 %v890, %v2522
        %2527 = vrot.lane.b32.xlu0 %v2523, 64
        %v2528 = vpop.permute.xlu0 %2527
        %2529 = vrot.lane.b32.xlu0 %v2524, 64
        %v2530 = vpop.permute.xlu0 %2529
        %v2533 = vmul.f32 %v2483, %v2528
        %v2534 = vmul.f32 %v2484, %v2530
        %v2535 = vpack.c.bf16 %v2534, %v2533
        %v2537 = vsel %vm977, %v2535, 0
        %2539 = vmatpush.bf16.msra.mxu0 0
        %2540 = vmatpush.bf16.msra.mxu0 0
        %2541 = vmatpush.bf16.msra.mxu0 0
        %2542 = vmatpush.bf16.msra.mxu0 0
        %2543 = vmatpush.bf16.msra.mxu0 %v815
        %2544 = vmatpush.bf16.msra.mxu0 %v814
        %2545 = vmatpush.bf16.msra.mxu0 %v813
        %2546 = vmatpush.bf16.msra.mxu0 %v812
        %2547 = vmatmul.bf16.gmra.mxu0 %v2537
        %v2548 = vpop.f32.mrf.mxu0
        %v2549 = vadd.f32 %v327, %v2548
        %v2550 = vpop.f32.mrf.mxu0
        %v2551 = vadd.f32 %v328, %v2550
        %2552 = vdwg.mxu0
        %s2553 = scalar_lea.vmem %s1, 2
        %v2554 = vld [vmem:[%s2553] sm:$0x3]
        %s2555 = scalar_lea.vmem %s2, 8
        %v2556 = vld [vmem:[%s2555] sm:$0x7f]
        %s2557 = scalar_lea.vmem %s3, 32
        %v2558 = vld [vmem:[%s2557] sm:$0xff]
        %v2559 = vld [vmem:[%s2557 + $0x8] sm:$0xff]
        %v2560 = vld [vmem:[%s2557 + $0x10] sm:$0xff]
        %v2561 = vld [vmem:[%s2557 + $0x18] sm:$0xff]
        %v2562 = vpack.c.bf16 %v2559, %v2558
        %v2563 = vpack.c.bf16 %v2561, %v2560
        %s2564 = scalar_lea.vmem %s4, 64
        %v2565 = vld [vmem:[%s2564] sm:$0xff]
        %v2566 = vld [vmem:[%s2564 + $0x8] sm:$0xff]
        %v2567 = vld [vmem:[%s2564 + $0x10] sm:$0xff]
        %v2568 = vld [vmem:[%s2564 + $0x18] sm:$0xff]
        %v2569 = vld [vmem:[%s2564 + $0x20] sm:$0xff]
        %v2570 = vld [vmem:[%s2564 + $0x28] sm:$0xff]
        %v2571 = vld [vmem:[%s2564 + $0x30] sm:$0xff]
        %v2572 = vld [vmem:[%s2564 + $0x38] sm:$0xff]
        %v2573 = vpack.c.bf16 %v2566, %v2565
        %v2574 = vpack.c.bf16 %v2568, %v2567
        %v2575 = vpack.c.bf16 %v2570, %v2569
        %v2576 = vpack.c.bf16 %v2572, %v2571
        %s2577 = scalar_lea.vmem %s5, 2
        %v2578 = vld [vmem:[%s2577] sm:$0x3]
        %s2579 = scalar_lea.vmem %s6, 16
        %v2580 = vld [vmem:[%s2579] sm:$0xff]
        %v2581 = vld [vmem:[%s2579 + $0x8] sm:$0xff]
        %s2582 = scalar_lea.vmem %s7, 64
        %v2583 = vld [vmem:[%s2582] sm:$0xff]
        %v2584 = vld [vmem:[%s2582 + $0x8] sm:$0xff]
        %v2585 = vld [vmem:[%s2582 + $0x10] sm:$0xff]
        %v2586 = vld [vmem:[%s2582 + $0x18] sm:$0xff]
        %v2587 = vld [vmem:[%s2582 + $0x20] sm:$0xff]
        %v2588 = vld [vmem:[%s2582 + $0x28] sm:$0xff]
        %v2589 = vld [vmem:[%s2582 + $0x30] sm:$0xff]
        %v2590 = vld [vmem:[%s2582 + $0x38] sm:$0xff]
        %v2591 = vpack.c.bf16 %v2584, %v2583
        %v2592 = vpack.c.bf16 %v2586, %v2585
        %v2593 = vpack.c.bf16 %v2588, %v2587
        %v2594 = vpack.c.bf16 %v2590, %v2589
        %v2595 = vsel %vm816, %v2549, 0.0
        %2596 = vadd.xlane.f32.xlu0 %v2595
        %v2597 = vpop.xlane.xlu0 %2596
        %v2598 = vsel %vm816, %v2551, 0.0
        %2599 = vadd.xlane.f32.xlu0 %v2598
        %v2600 = vpop.xlane.xlu0 %2599
        %v2601 = vmul.f32 %v2597, %v829
        %v2602 = vmul.f32 %v2600, %v829
        %v2603 = vsub.f32 %v2549, %v2601
        %v2604 = vsub.f32 %v2551, %v2602
        %v2605 = vmul.f32 %v2603, %v2603
        %v2606 = vmul.f32 %v2604, %v2604
        %v2607 = vsel %vm816, %v2605, 0.0
        %2608 = vadd.xlane.f32.xlu0 %v2607
        %v2609 = vpop.xlane.xlu0 %2608
        %v2610 = vsel %vm816, %v2606, 0.0
        %2611 = vadd.xlane.f32.xlu0 %v2610
        %v2612 = vpop.xlane.xlu0 %2611
        %v2613 = vmul.f32 %v2609, %v829
        %v2614 = vmul.f32 %v2612, %v829
        %v2615 = vadd.f32 %v2613, 1e-05
        %v2616 = vadd.f32 %v2614, 1e-05
        %v2617 = vrsqrt.pop %v2615
        %v2618 = vmul.f32 %v2617, %v2615
        %v2619 = vmul.f32 %v2618, %v2617
        %v2620 = vmul.f32 0.5, %v2619
        %v2621 = vsub.f32 1.5, %v2620
        %v2622 = vmul.f32 %v2617, %v2621
        %vm2623 = vweird.f32 %v2615
        %vm2624 = vweird.f32 %v2617
        %vm2625 = vmor %vm2623, %vm2624
        %v2626 = vsel %vm2625, %v2617, %v2622
        %v2627 = vrsqrt.pop %v2616
        %v2628 = vmul.f32 %v2627, %v2616
        %v2629 = vmul.f32 %v2628, %v2627
        %v2630 = vmul.f32 0.5, %v2629
        %v2631 = vsub.f32 1.5, %v2630
        %v2632 = vmul.f32 %v2627, %v2631
        %vm2633 = vweird.f32 %v2616
        %vm2634 = vweird.f32 %v2627
        %vm2635 = vmor %vm2633, %vm2634
        %v2636 = vsel %vm2635, %v2627, %v2632
        %v2637 = vmul.f32 %v2603, %v2626
        %v2638 = vmul.f32 %v2604, %v2636
        %v2639 = vperm.slane %v2554, 0
        %v2640 = vmul.f32 %v2637, %v2639
        %v2641 = vmul.f32 %v2638, %v2639
        %v2642 = vperm.slane %v2554, 1
        %v2643 = vadd.f32 %v2640, %v2642
        %v2644 = vadd.f32 %v2641, %v2642
        %v2645 = vpack.c.bf16 %v2644, %v2643
        %v2647 = vsel %vm816, %v2645, 0
        %2649 = vmatpush.bf16.msra.mxu0 0
        %2650 = vmatpush.bf16.msra.mxu0 0
        %2651 = vmatpush.bf16.msra.mxu0 0
        %2652 = vmatpush.bf16.msra.mxu0 0
        %2653 = vmatpush.bf16.msra.mxu0 0
        %2654 = vmatpush.bf16.msra.mxu0 0
        %2655 = vmatpush.bf16.msra.mxu0 %v2563
        %2656 = vmatpush.bf16.msra.mxu0 %v2562
        %2657 = vmatmul.bf16.gmra.mxu0 %v2647
        %v2658 = vpop.f32.mrf.mxu0
        %v2659 = vadd.f32 0.0, %v2658
        %v2660 = vpop.f32.mrf.mxu0
        %v2661 = vadd.f32 0.0, %v2660
        %2662 = vdwg.mxu0
        %v2663 = vperm.slane %v2556, 3
        %v2664 = vmul.f32 %v2659, %v2663
        %v2665 = vmul.f32 %v2661, %v2663
        %v2666 = vperm.slane %v2556, 4
        %v2667 = vadd.f32 %v2664, %v2666
        %v2668 = vadd.f32 %v2665, %v2666
        %v2671 = vrot.slane %v2659, 5
        %v2672 = vrot.slane %v2661, 5
        %v2673 = vsel %vm900, %v2671, %v2672
        %v2676 = vsel %vm900, 0.0, %v2671
        %v2677 = vperm.slane %v2556, 0
        %v2678 = vmul.f32 %v2676, %v2677
        %v2679 = vmul.f32 %v2673, %v2677
        %v2680 = vadd.f32 %v2667, %v2678
        %v2681 = vadd.f32 %v2668, %v2679
        %v2682 = vrot.slane %v2659, 6
        %v2683 = vrot.slane %v2661, 6
        %v2684 = vsel %vm912, %v2682, %v2683
        %v2687 = vsel %vm912, 0.0, %v2682
        %v2688 = vperm.slane %v2556, 1
        %v2689 = vmul.f32 %v2687, %v2688
        %v2690 = vmul.f32 %v2684, %v2688
        %v2691 = vadd.f32 %v2680, %v2689
        %v2692 = vadd.f32 %v2681, %v2690
        %v2693 = vrot.slane %v2659, 7
        %v2694 = vrot.slane %v2661, 7
        %v2695 = vsel %vm924, %v2693, %v2694
        %v2698 = vsel %vm924, 0.0, %v2693
        %v2699 = vperm.slane %v2556, 2
        %v2700 = vmul.f32 %v2698, %v2699
        %v2701 = vmul.f32 %v2695, %v2699
        %v2702 = vadd.f32 %v2691, %v2700
        %v2703 = vadd.f32 %v2692, %v2701
        %v2704 = vxor.u32 %v2702, 2147483648
        %v2705 = vxor.u32 %v2703, 2147483648
        %v2706 = vmul.f32 %v2704, 1.442695
        %v2707 = vpow.pop %v2706
        %v2708 = vmul.f32 %v2705, 1.442695
        %v2709 = vpow.pop %v2708
        %v2710 = vadd.f32 %v2707, 1.0
        %v2711 = vadd.f32 %v2709, 1.0
        %v2712 = vrcp.pop %v2710
        %v2713 = vmul.f32 %v2710, %v2712
        %v2714 = vsub.f32 1.0, %v2713
        %v2715 = vmul.f32 %v2712, %v2714
        %v2716 = vadd.f32 %v2712, %v2715
        %vm2717 = vweird.f32 %v2710
        %vm2718 = vweird.f32 %v2712
        %vm2719 = vmor %vm2717, %vm2718
        %v2720 = vsel %vm2719, %v2712, %v2716
        %v2721 = vand.u32 2147483647, %v2710
        %vm2722 = vcmp.eq.f32.partialorder %v2721, 8.507059e+37
        %v2723 = vand.u32 %v2710, 2147483648
        %v2724 = vor.u32 1.1754944e-38, %v2723
        %v2725 = vsel %vm2722, %v2724, %v2720
        %v2726 = vmul.f32 1.0, %v2725
        %v2727 = vrcp.pop %v2711
        %v2728 = vmul.f32 %v2711, %v2727
        %v2729 = vsub.f32 1.0, %v2728
        %v2730 = vmul.f32 %v2727, %v2729
        %v2731 = vadd.f32 %v2727, %v2730
        %vm2732 = vweird.f32 %v2711
        %vm2733 = vweird.f32 %v2727
        %vm2734 = vmor %vm2732, %vm2733
        %v2735 = vsel %vm2734, %v2727, %v2731
        %v2736 = vand.u32 2147483647, %v2711
        %vm2737 = vcmp.eq.f32.partialorder %v2736, 8.507059e+37
        %v2738 = vand.u32 %v2711, 2147483648
        %v2739 = vor.u32 1.1754944e-38, %v2738
        %v2740 = vsel %vm2737, %v2739, %v2735
        %v2741 = vmul.f32 1.0, %v2740
        %v2742 = vmul.f32 %v2702, %v2726
        %v2743 = vmul.f32 %v2703, %v2741
        %v2744 = vpack.c.bf16 %v2743, %v2742
        %v2746 = vsel %vm977, %v2744, 0
        %2748 = vmatpush.bf16.msra.mxu0 0
        %2749 = vmatpush.bf16.msra.mxu0 0
        %2750 = vmatpush.bf16.msra.mxu0 0
        %2751 = vmatpush.bf16.msra.mxu0 0
        %2752 = vmatpush.bf16.msra.mxu0 %v2576
        %2753 = vmatpush.bf16.msra.mxu0 %v2575
        %2754 = vmatpush.bf16.msra.mxu0 %v2574
        %2755 = vmatpush.bf16.msra.mxu0 %v2573
        %2756 = vmatmul.bf16.gmra.mxu0 %v2746
        %v2757 = vpop.f32.mrf.mxu0
        %v2758 = vadd.f32 0.0, %v2757
        %v2759 = vpop.f32.mrf.mxu0
        %v2760 = vadd.f32 0.0, %v2759
        %2761 = vdwg.mxu0
        %v2762 = vperm.slane %v2556, 5
        %2764 = vset.pattern.permute.xlu0 0
        %2765 = vperm.xlu0 %2764, %v2758
        %v2766 = vpop.permute.xlu0 %2765
        %2769 = vset.pattern.permute.xlu0 0
        %2770 = vperm.xlu0 %2769, %v2760
        %v2771 = vpop.permute.xlu0 %2770
        %v2773 = vperm.slane %v2578, 0
        %v2774 = vmul.f32 %v2766, %v2773
        %v2775 = vmul.f32 %v2771, %v2773
        %v2776 = vadd.f32 %v2762, %v2774
        %v2777 = vadd.f32 %v2762, %v2775
        %2778 = vset.pattern.permute.xlu0 1
        %2779 = vperm.xlu0 %2778, %v2758
        %v2780 = vpop.permute.xlu0 %2779
        %2782 = vset.pattern.permute.xlu0 1
        %2783 = vperm.xlu0 %2782, %v2760
        %v2784 = vpop.permute.xlu0 %2783
        %v2786 = vperm.slane %v2578, 1
        %v2787 = vmul.f32 %v2780, %v2786
        %v2788 = vmul.f32 %v2784, %v2786
        %v2789 = vadd.f32 %v2776, %v2787
        %v2790 = vadd.f32 %v2777, %v2788
        %v2791 = vmax.f32 %v2789, 0.0
        %v2792 = vmax.f32 %v2790, 0.0
        %vm2793 = vcmp.ne.f32.partialorder %v2789, %v2789
        %vm2794 = vcmp.ne.f32.partialorder %v2790, %v2790
        %v2795 = vadd.f32 %v2789, 0.0
        %v2796 = vadd.f32 %v2790, 0.0
        %v2797 = vand.u32 2147483647, %v2789
        %v2798 = vand.u32 2147483647, %v2790
        %v2799 = vsub.f32 0.0, %v2797
        %v2800 = vsub.f32 0.0, %v2798
        %v2801 = vmul.f32 %v2799, 1.442695
        %v2802 = vpow.pop %v2801
        %v2803 = vmul.f32 %v2800, 1.442695
        %v2804 = vpow.pop %v2803
        %v2805 = vadd.f32 %v2802, 1.0
        %v2806 = vlog2.pop %v2805
        %v2807 = vmul.f32 %v2806, 0.6931472
        %v2808 = vmul.f32 -0.5, %v2802
        %v2809 = vadd.f32 %v2808, 1.0
        %v2810 = vmul.f32 %v2809, %v2802
        %v2811 = vand.u32 2147483647, %v2802
        %vm2812 = vcmp.lt.f32.partialorder %v2811, 0.0004427343
        %v2813 = vsel %vm2812, %v2810, %v2807
        %v2814 = vadd.f32 %v2804, 1.0
        %v2815 = vlog2.pop %v2814
        %v2816 = vmul.f32 %v2815, 0.6931472
        %v2817 = vmul.f32 -0.5, %v2804
        %v2818 = vadd.f32 %v2817, 1.0
        %v2819 = vmul.f32 %v2818, %v2804
        %v2820 = vand.u32 2147483647, %v2804
        %vm2821 = vcmp.lt.f32.partialorder %v2820, 0.0004427343
        %v2822 = vsel %vm2821, %v2819, %v2816
        %v2823 = vadd.f32 %v2791, %v2813
        %v2824 = vadd.f32 %v2792, %v2822
        %v2825 = vsel %vm2793, %v2795, %v2823
        %v2826 = vsel %vm2794, %v2796, %v2824
        %v2827 = vmul.f32 %v2580, 1.442695
        %v2828 = vpow.pop %v2827
        %v2829 = vmul.f32 %v2581, 1.442695
        %v2830 = vpow.pop %v2829
        %v2831 = vsub.f32 0.0, %v2828
        %v2832 = vsub.f32 0.0, %v2830
        %2833 = vmatpush.msra.mxu0 0.0
        %2834 = vmatpush.msra.mxu0 0.0
        %2835 = vmatpush.msra.mxu0 0.0
        %2836 = vmatpush.msra.mxu0 0.0
        %2837 = vmatpush.msra.mxu0 0.0
        %2838 = vmatpush.msra.mxu0 0.0
        %2839 = vmatpush.msra.mxu0 0.0
        %2840 = vmatpush.msra.mxu0 0.0
        %2841 = vmatpush.msra.mxu0 0.0
        %2842 = vmatpush.msra.mxu0 0.0
        %2843 = vmatpush.msra.mxu0 0.0
        %2844 = vmatpush.msra.mxu0 0.0
        %2845 = vmatpush.msra.mxu0 0.0
        %2846 = vmatpush.msra.mxu0 0.0
        %2847 = vmatpush.msra.mxu0 %v2826
        %2848 = vmatpush.msra.mxu0 %v2825
        %2849 = vmatmul.f32.gmra.mxu0 %v1068
        %v2850 = vpop.f32.mrf.mxu0
        %v2851 = vadd.f32 0.0, %v2850
        %2852 = vmatmul.f32.gmra.mxu0 %v1071
        %v2853 = vpop.f32.mrf.mxu0
        %v2854 = vadd.f32 0.0, %v2853
        %2855 = vmatmul.f32.gmra.mxu0 %v1074
        %v2856 = vpop.f32.mrf.mxu0
        %v2857 = vadd.f32 0.0, %v2856
        %2858 = vmatmul.f32.gmra.mxu0 %v1077
        %v2859 = vpop.f32.mrf.mxu0
        %v2860 = vadd.f32 0.0, %v2859
        %2861 = vmatmul.f32.gmra.mxu0 %v1080
        %v2862 = vpop.f32.mrf.mxu0
        %v2863 = vadd.f32 0.0, %v2862
        %2864 = vmatmul.f32.gmra.mxu0 %v1083
        %v2865 = vpop.f32.mrf.mxu0
        %v2866 = vadd.f32 0.0, %v2865
        %2867 = vmatmul.f32.gmra.mxu0 %v1086
        %v2868 = vpop.f32.mrf.mxu0
        %v2869 = vadd.f32 0.0, %v2868
        %2870 = vmatmul.f32.gmra.mxu0 %v1089
        %v2871 = vpop.f32.mrf.mxu0
        %v2872 = vadd.f32 0.0, %v2871
        %2873 = vmatmul.f32.gmra.mxu0 %v1092
        %v2874 = vpop.f32.mrf.mxu0
        %v2875 = vadd.f32 0.0, %v2874
        %2876 = vmatmul.f32.gmra.mxu0 %v1095
        %v2877 = vpop.f32.mrf.mxu0
        %v2878 = vadd.f32 0.0, %v2877
        %2879 = vmatmul.f32.gmra.mxu0 %v1098
        %v2880 = vpop.f32.mrf.mxu0
        %v2881 = vadd.f32 0.0, %v2880
        %2882 = vmatmul.f32.gmra.mxu0 %v1101
        %v2883 = vpop.f32.mrf.mxu0
        %v2884 = vadd.f32 0.0, %v2883
        %2885 = vmatmul.f32.gmra.mxu0 %v1104
        %v2886 = vpop.f32.mrf.mxu0
        %v2887 = vadd.f32 0.0, %v2886
        %2888 = vmatmul.f32.gmra.mxu0 %v1107
        %v2889 = vpop.f32.mrf.mxu0
        %v2890 = vadd.f32 0.0, %v2889
        %2891 = vmatmul.f32.gmra.mxu0 %v1110
        %v2892 = vpop.f32.mrf.mxu0
        %v2893 = vadd.f32 0.0, %v2892
        %2894 = vmatmul.f32.gmra.mxu0 %v1113
        %v2895 = vpop.f32.mrf.mxu0
        %v2896 = vadd.f32 0.0, %v2895
        %2897 = vmatmul.f32.gmra.mxu0 %v1116
        %v2898 = vpop.f32.mrf.mxu0
        %v2899 = vadd.f32 0.0, %v2898
        %2900 = vmatmul.f32.gmra.mxu0 %v1119
        %v2901 = vpop.f32.mrf.mxu0
        %v2902 = vadd.f32 0.0, %v2901
        %2903 = vmatmul.f32.gmra.mxu0 %v1122
        %v2904 = vpop.f32.mrf.mxu0
        %v2905 = vadd.f32 0.0, %v2904
        %2906 = vmatmul.f32.gmra.mxu0 %v1125
        %v2907 = vpop.f32.mrf.mxu0
        %v2908 = vadd.f32 0.0, %v2907
        %2909 = vmatmul.f32.gmra.mxu0 %v1128
        %v2910 = vpop.f32.mrf.mxu0
        %v2911 = vadd.f32 0.0, %v2910
        %2912 = vmatmul.f32.gmra.mxu0 %v1131
        %v2913 = vpop.f32.mrf.mxu0
        %v2914 = vadd.f32 0.0, %v2913
        %2915 = vmatmul.f32.gmra.mxu0 %v1134
        %v2916 = vpop.f32.mrf.mxu0
        %v2917 = vadd.f32 0.0, %v2916
        %2918 = vmatmul.f32.gmra.mxu0 %v1137
        %v2919 = vpop.f32.mrf.mxu0
        %v2920 = vadd.f32 0.0, %v2919
        %2921 = vmatmul.f32.gmra.mxu0 %v1140
        %v2922 = vpop.f32.mrf.mxu0
        %v2923 = vadd.f32 0.0, %v2922
        %2924 = vmatmul.f32.gmra.mxu0 %v1143
        %v2925 = vpop.f32.mrf.mxu0
        %v2926 = vadd.f32 0.0, %v2925
        %2927 = vmatmul.f32.gmra.mxu0 %v1146
        %v2928 = vpop.f32.mrf.mxu0
        %v2929 = vadd.f32 0.0, %v2928
        %2930 = vmatmul.f32.gmra.mxu0 %v1149
        %v2931 = vpop.f32.mrf.mxu0
        %v2932 = vadd.f32 0.0, %v2931
        %2933 = vmatmul.f32.gmra.mxu0 %v1152
        %v2934 = vpop.f32.mrf.mxu0
        %v2935 = vadd.f32 0.0, %v2934
        %2936 = vmatmul.f32.gmra.mxu0 %v1155
        %v2937 = vpop.f32.mrf.mxu0
        %v2938 = vadd.f32 0.0, %v2937
        %2939 = vmatmul.f32.gmra.mxu0 %v1158
        %v2940 = vpop.f32.mrf.mxu0
        %v2941 = vadd.f32 0.0, %v2940
        %2942 = vmatmul.f32.gmra.mxu0 %v1161
        %v2943 = vpop.f32.mrf.mxu0
        %v2944 = vadd.f32 0.0, %v2943
        %2945 = vdwg.mxu0
        %v2946 = vmul.f32 %v2825, %v2742
        %v2947 = vmul.f32 %v2826, %v2743
        %2948 = vmatpush.msra.mxu0 0.0
        %2949 = vmatpush.msra.mxu0 0.0
        %2950 = vmatpush.msra.mxu0 0.0
        %2951 = vmatpush.msra.mxu0 0.0
        %2952 = vmatpush.msra.mxu0 0.0
        %2953 = vmatpush.msra.mxu0 0.0
        %2954 = vmatpush.msra.mxu0 0.0
        %2955 = vmatpush.msra.mxu0 0.0
        %2956 = vmatpush.msra.mxu0 0.0
        %2957 = vmatpush.msra.mxu0 0.0
        %2958 = vmatpush.msra.mxu0 0.0
        %2959 = vmatpush.msra.mxu0 0.0
        %2960 = vmatpush.msra.mxu0 0.0
        %2961 = vmatpush.msra.mxu0 0.0
        %2962 = vmatpush.msra.mxu0 %v2947
        %2963 = vmatpush.msra.mxu0 %v2946
        %2964 = vmatmul.f32.gmra.mxu0 %v1068
        %v2965 = vpop.f32.mrf.mxu0
        %v2966 = vadd.f32 0.0, %v2965
        %2967 = vmatmul.f32.gmra.mxu0 %v1071
        %v2968 = vpop.f32.mrf.mxu0
        %v2969 = vadd.f32 0.0, %v2968
        %2970 = vmatmul.f32.gmra.mxu0 %v1074
        %v2971 = vpop.f32.mrf.mxu0
        %v2972 = vadd.f32 0.0, %v2971
        %2973 = vmatmul.f32.gmra.mxu0 %v1077
        %v2974 = vpop.f32.mrf.mxu0
        %v2975 = vadd.f32 0.0, %v2974
        %2976 = vmatmul.f32.gmra.mxu0 %v1080
        %v2977 = vpop.f32.mrf.mxu0
        %v2978 = vadd.f32 0.0, %v2977
        %2979 = vmatmul.f32.gmra.mxu0 %v1083
        %v2980 = vpop.f32.mrf.mxu0
        %v2981 = vadd.f32 0.0, %v2980
        %2982 = vmatmul.f32.gmra.mxu0 %v1086
        %v2983 = vpop.f32.mrf.mxu0
        %v2984 = vadd.f32 0.0, %v2983
        %2985 = vmatmul.f32.gmra.mxu0 %v1089
        %v2986 = vpop.f32.mrf.mxu0
        %v2987 = vadd.f32 0.0, %v2986
        %2988 = vmatmul.f32.gmra.mxu0 %v1092
        %v2989 = vpop.f32.mrf.mxu0
        %v2990 = vadd.f32 0.0, %v2989
        %2991 = vmatmul.f32.gmra.mxu0 %v1095
        %v2992 = vpop.f32.mrf.mxu0
        %v2993 = vadd.f32 0.0, %v2992
        %2994 = vmatmul.f32.gmra.mxu0 %v1098
        %v2995 = vpop.f32.mrf.mxu0
        %v2996 = vadd.f32 0.0, %v2995
        %2997 = vmatmul.f32.gmra.mxu0 %v1101
        %v2998 = vpop.f32.mrf.mxu0
        %v2999 = vadd.f32 0.0, %v2998
        %3000 = vmatmul.f32.gmra.mxu0 %v1104
        %v3001 = vpop.f32.mrf.mxu0
        %v3002 = vadd.f32 0.0, %v3001
        %3003 = vmatmul.f32.gmra.mxu0 %v1107
        %v3004 = vpop.f32.mrf.mxu0
        %v3005 = vadd.f32 0.0, %v3004
        %3006 = vmatmul.f32.gmra.mxu0 %v1110
        %v3007 = vpop.f32.mrf.mxu0
        %v3008 = vadd.f32 0.0, %v3007
        %3009 = vmatmul.f32.gmra.mxu0 %v1113
        %v3010 = vpop.f32.mrf.mxu0
        %v3011 = vadd.f32 0.0, %v3010
        %3012 = vmatmul.f32.gmra.mxu0 %v1116
        %v3013 = vpop.f32.mrf.mxu0
        %v3014 = vadd.f32 0.0, %v3013
        %3015 = vmatmul.f32.gmra.mxu0 %v1119
        %v3016 = vpop.f32.mrf.mxu0
        %v3017 = vadd.f32 0.0, %v3016
        %3018 = vmatmul.f32.gmra.mxu0 %v1122
        %v3019 = vpop.f32.mrf.mxu0
        %v3020 = vadd.f32 0.0, %v3019
        %3021 = vmatmul.f32.gmra.mxu0 %v1125
        %v3022 = vpop.f32.mrf.mxu0
        %v3023 = vadd.f32 0.0, %v3022
        %3024 = vmatmul.f32.gmra.mxu0 %v1128
        %v3025 = vpop.f32.mrf.mxu0
        %v3026 = vadd.f32 0.0, %v3025
        %3027 = vmatmul.f32.gmra.mxu0 %v1131
        %v3028 = vpop.f32.mrf.mxu0
        %v3029 = vadd.f32 0.0, %v3028
        %3030 = vmatmul.f32.gmra.mxu0 %v1134
        %v3031 = vpop.f32.mrf.mxu0
        %v3032 = vadd.f32 0.0, %v3031
        %3033 = vmatmul.f32.gmra.mxu0 %v1137
        %v3034 = vpop.f32.mrf.mxu0
        %v3035 = vadd.f32 0.0, %v3034
        %3036 = vmatmul.f32.gmra.mxu0 %v1140
        %v3037 = vpop.f32.mrf.mxu0
        %v3038 = vadd.f32 0.0, %v3037
        %3039 = vmatmul.f32.gmra.mxu0 %v1143
        %v3040 = vpop.f32.mrf.mxu0
        %v3041 = vadd.f32 0.0, %v3040
        %3042 = vmatmul.f32.gmra.mxu0 %v1146
        %v3043 = vpop.f32.mrf.mxu0
        %v3044 = vadd.f32 0.0, %v3043
        %3045 = vmatmul.f32.gmra.mxu0 %v1149
        %v3046 = vpop.f32.mrf.mxu0
        %v3047 = vadd.f32 0.0, %v3046
        %3048 = vmatmul.f32.gmra.mxu0 %v1152
        %v3049 = vpop.f32.mrf.mxu0
        %v3050 = vadd.f32 0.0, %v3049
        %3051 = vmatmul.f32.gmra.mxu0 %v1155
        %v3052 = vpop.f32.mrf.mxu0
        %v3053 = vadd.f32 0.0, %v3052
        %3054 = vmatmul.f32.gmra.mxu0 %v1158
        %v3055 = vpop.f32.mrf.mxu0
        %v3056 = vadd.f32 0.0, %v3055
        %3057 = vmatmul.f32.gmra.mxu0 %v1161
        %v3058 = vpop.f32.mrf.mxu0
        %v3059 = vadd.f32 0.0, %v3058
        %3060 = vdwg.mxu0
        %3061 = vmatpush.msra.mxu0 0.0
        %3062 = vmatpush.msra.mxu0 0.0
        %3063 = vmatpush.msra.mxu0 0.0
        %3064 = vmatpush.msra.mxu0 0.0
        %3065 = vmatpush.msra.mxu0 0.0
        %3066 = vmatpush.msra.mxu0 0.0
        %3067 = vmatpush.msra.mxu0 0.0
        %3068 = vmatpush.msra.mxu0 0.0
        %3069 = vmatpush.msra.mxu0 0.0
        %3070 = vmatpush.msra.mxu0 0.0
        %3071 = vmatpush.msra.mxu0 0.0
        %3072 = vmatpush.msra.mxu0 0.0
        %3073 = vmatpush.msra.mxu0 0.0
        %3074 = vmatpush.msra.mxu0 0.0
        %3075 = vmatpush.msra.mxu0 %v2832
        %3076 = vmatpush.msra.mxu0 %v2831
        %3077 = vmatmul.f32.gmra.mxu0 %v1392
        %v3078 = vpop.f32.mrf.mxu0
        %v3079 = vadd.f32 0.0, %v3078
        %3080 = vmatmul.f32.gmra.mxu0 %v1395
        %v3081 = vpop.f32.mrf.mxu0
        %v3082 = vadd.f32 0.0, %v3081
        %3083 = vmatmul.f32.gmra.mxu0 %v1398
        %v3084 = vpop.f32.mrf.mxu0
        %v3085 = vadd.f32 0.0, %v3084
        %3086 = vmatmul.f32.gmra.mxu0 %v1401
        %v3087 = vpop.f32.mrf.mxu0
        %v3088 = vadd.f32 0.0, %v3087
        %3089 = vmatmul.f32.gmra.mxu0 %v1404
        %v3090 = vpop.f32.mrf.mxu0
        %v3091 = vadd.f32 0.0, %v3090
        %3092 = vmatmul.f32.gmra.mxu0 %v1407
        %v3093 = vpop.f32.mrf.mxu0
        %v3094 = vadd.f32 0.0, %v3093
        %3095 = vmatmul.f32.gmra.mxu0 %v1410
        %v3096 = vpop.f32.mrf.mxu0
        %v3097 = vadd.f32 0.0, %v3096
        %3098 = vmatmul.f32.gmra.mxu0 %v1413
        %v3099 = vpop.f32.mrf.mxu0
        %v3100 = vadd.f32 0.0, %v3099
        %3101 = vmatmul.f32.gmra.mxu0 %v1416
        %v3102 = vpop.f32.mrf.mxu0
        %v3103 = vadd.f32 0.0, %v3102
        %3104 = vmatmul.f32.gmra.mxu0 %v1419
        %v3105 = vpop.f32.mrf.mxu0
        %v3106 = vadd.f32 0.0, %v3105
        %3107 = vmatmul.f32.gmra.mxu0 %v1422
        %v3108 = vpop.f32.mrf.mxu0
        %v3109 = vadd.f32 0.0, %v3108
        %3110 = vmatmul.f32.gmra.mxu0 %v1425
        %v3111 = vpop.f32.mrf.mxu0
        %v3112 = vadd.f32 0.0, %v3111
        %3113 = vmatmul.f32.gmra.mxu0 %v1428
        %v3114 = vpop.f32.mrf.mxu0
        %v3115 = vadd.f32 0.0, %v3114
        %3116 = vmatmul.f32.gmra.mxu0 %v1431
        %v3117 = vpop.f32.mrf.mxu0
        %v3118 = vadd.f32 0.0, %v3117
        %3119 = vmatmul.f32.gmra.mxu0 %v1434
        %v3120 = vpop.f32.mrf.mxu0
        %v3121 = vadd.f32 0.0, %v3120
        %3122 = vmatmul.f32.gmra.mxu0 %v1437
        %v3123 = vpop.f32.mrf.mxu0
        %v3124 = vadd.f32 0.0, %v3123
        %3125 = vmatmul.f32.gmra.mxu0 %v1440
        %v3126 = vpop.f32.mrf.mxu0
        %v3127 = vadd.f32 0.0, %v3126
        %3128 = vmatmul.f32.gmra.mxu0 %v1443
        %v3129 = vpop.f32.mrf.mxu0
        %v3130 = vadd.f32 0.0, %v3129
        %3131 = vmatmul.f32.gmra.mxu0 %v1446
        %v3132 = vpop.f32.mrf.mxu0
        %v3133 = vadd.f32 0.0, %v3132
        %3134 = vmatmul.f32.gmra.mxu0 %v1449
        %v3135 = vpop.f32.mrf.mxu0
        %v3136 = vadd.f32 0.0, %v3135
        %3137 = vmatmul.f32.gmra.mxu0 %v1452
        %v3138 = vpop.f32.mrf.mxu0
        %v3139 = vadd.f32 0.0, %v3138
        %3140 = vmatmul.f32.gmra.mxu0 %v1455
        %v3141 = vpop.f32.mrf.mxu0
        %v3142 = vadd.f32 0.0, %v3141
        %3143 = vmatmul.f32.gmra.mxu0 %v1458
        %v3144 = vpop.f32.mrf.mxu0
        %v3145 = vadd.f32 0.0, %v3144
        %3146 = vmatmul.f32.gmra.mxu0 %v1461
        %v3147 = vpop.f32.mrf.mxu0
        %v3148 = vadd.f32 0.0, %v3147
        %3149 = vmatmul.f32.gmra.mxu0 %v1464
        %v3150 = vpop.f32.mrf.mxu0
        %v3151 = vadd.f32 0.0, %v3150
        %3152 = vmatmul.f32.gmra.mxu0 %v1467
        %v3153 = vpop.f32.mrf.mxu0
        %v3154 = vadd.f32 0.0, %v3153
        %3155 = vmatmul.f32.gmra.mxu0 %v1470
        %v3156 = vpop.f32.mrf.mxu0
        %v3157 = vadd.f32 0.0, %v3156
        %3158 = vmatmul.f32.gmra.mxu0 %v1473
        %v3159 = vpop.f32.mrf.mxu0
        %v3160 = vadd.f32 0.0, %v3159
        %3161 = vmatmul.f32.gmra.mxu0 %v1476
        %v3162 = vpop.f32.mrf.mxu0
        %v3163 = vadd.f32 0.0, %v3162
        %3164 = vmatmul.f32.gmra.mxu0 %v1479
        %v3165 = vpop.f32.mrf.mxu0
        %v3166 = vadd.f32 0.0, %v3165
        %3167 = vmatmul.f32.gmra.mxu0 %v1482
        %v3168 = vpop.f32.mrf.mxu0
        %v3169 = vadd.f32 0.0, %v3168
        %3170 = vmatmul.f32.gmra.mxu0 %v1485
        %v3171 = vpop.f32.mrf.mxu0
        %v3172 = vadd.f32 0.0, %v3171
        %3173 = vdwg.mxu0
        %v3174 = vmul.f32 %v2851, %v3079
        %v3175 = vmul.f32 %v2854, %v3082
        %v3176 = vmul.f32 %v2857, %v3085
        %v3177 = vmul.f32 %v2860, %v3088
        %v3178 = vmul.f32 %v2863, %v3091
        %v3179 = vmul.f32 %v2866, %v3094
        %v3180 = vmul.f32 %v2869, %v3097
        %v3181 = vmul.f32 %v2872, %v3100
        %v3182 = vmul.f32 %v2875, %v3103
        %v3183 = vmul.f32 %v2878, %v3106
        %v3184 = vmul.f32 %v2881, %v3109
        %v3185 = vmul.f32 %v2884, %v3112
        %v3186 = vmul.f32 %v2887, %v3115
        %v3187 = vmul.f32 %v2890, %v3118
        %v3188 = vmul.f32 %v2893, %v3121
        %v3189 = vmul.f32 %v2896, %v3124
        %v3190 = vmul.f32 %v2899, %v3127
        %v3191 = vmul.f32 %v2902, %v3130
        %v3192 = vmul.f32 %v2905, %v3133
        %v3193 = vmul.f32 %v2908, %v3136
        %v3194 = vmul.f32 %v2911, %v3139
        %v3195 = vmul.f32 %v2914, %v3142
        %v3196 = vmul.f32 %v2917, %v3145
        %v3197 = vmul.f32 %v2920, %v3148
        %v3198 = vmul.f32 %v2923, %v3151
        %v3199 = vmul.f32 %v2926, %v3154
        %v3200 = vmul.f32 %v2929, %v3157
        %v3201 = vmul.f32 %v2932, %v3160
        %v3202 = vmul.f32 %v2935, %v3163
        %v3203 = vmul.f32 %v2938, %v3166
        %v3204 = vmul.f32 %v2941, %v3169
        %v3205 = vmul.f32 %v2944, %v3172
        %v3206 = vmul.f32 %v3174, 1.442695
        %v3207 = vpow.pop %v3206
        %v3208 = vmul.f32 %v3175, 1.442695
        %v3209 = vpow.pop %v3208
        %v3210 = vmul.f32 %v3176, 1.442695
        %v3211 = vpow.pop %v3210
        %v3212 = vmul.f32 %v3177, 1.442695
        %v3213 = vpow.pop %v3212
        %v3214 = vmul.f32 %v3178, 1.442695
        %v3215 = vpow.pop %v3214
        %v3216 = vmul.f32 %v3179, 1.442695
        %v3217 = vpow.pop %v3216
        %v3218 = vmul.f32 %v3180, 1.442695
        %v3219 = vpow.pop %v3218
        %v3220 = vmul.f32 %v3181, 1.442695
        %v3221 = vpow.pop %v3220
        %v3222 = vmul.f32 %v3182, 1.442695
        %v3223 = vpow.pop %v3222
        %v3224 = vmul.f32 %v3183, 1.442695
        %v3225 = vpow.pop %v3224
        %v3226 = vmul.f32 %v3184, 1.442695
        %v3227 = vpow.pop %v3226
        %v3228 = vmul.f32 %v3185, 1.442695
        %v3229 = vpow.pop %v3228
        %v3230 = vmul.f32 %v3186, 1.442695
        %v3231 = vpow.pop %v3230
        %v3232 = vmul.f32 %v3187, 1.442695
        %v3233 = vpow.pop %v3232
        %v3234 = vmul.f32 %v3188, 1.442695
        %v3235 = vpow.pop %v3234
        %v3236 = vmul.f32 %v3189, 1.442695
        %v3237 = vpow.pop %v3236
        %v3238 = vmul.f32 %v3190, 1.442695
        %v3239 = vpow.pop %v3238
        %v3240 = vmul.f32 %v3191, 1.442695
        %v3241 = vpow.pop %v3240
        %v3242 = vmul.f32 %v3192, 1.442695
        %v3243 = vpow.pop %v3242
        %v3244 = vmul.f32 %v3193, 1.442695
        %v3245 = vpow.pop %v3244
        %v3246 = vmul.f32 %v3194, 1.442695
        %v3247 = vpow.pop %v3246
        %v3248 = vmul.f32 %v3195, 1.442695
        %v3249 = vpow.pop %v3248
        %v3250 = vmul.f32 %v3196, 1.442695
        %v3251 = vpow.pop %v3250
        %v3252 = vmul.f32 %v3197, 1.442695
        %v3253 = vpow.pop %v3252
        %v3254 = vmul.f32 %v3198, 1.442695
        %v3255 = vpow.pop %v3254
        %v3256 = vmul.f32 %v3199, 1.442695
        %v3257 = vpow.pop %v3256
        %v3258 = vmul.f32 %v3200, 1.442695
        %v3259 = vpow.pop %v3258
        %v3260 = vmul.f32 %v3201, 1.442695
        %v3261 = vpow.pop %v3260
        %v3262 = vmul.f32 %v3202, 1.442695
        %v3263 = vpow.pop %v3262
        %v3264 = vmul.f32 %v3203, 1.442695
        %v3265 = vpow.pop %v3264
        %v3266 = vmul.f32 %v3204, 1.442695
        %v3267 = vpow.pop %v3266
        %v3268 = vmul.f32 %v3205, 1.442695
        %v3269 = vpow.pop %v3268
        %3270 = vrot.lane.b32.xlu0 %v2758, 126
        %v3271 = vpop.permute.xlu0 %3270
        %3272 = vrot.lane.b32.xlu0 %v2760, 126
        %v3273 = vpop.permute.xlu0 %3272
        %3276 = vmatpush.msra.mxu0 0.0
        %3277 = vmatpush.msra.mxu0 0.0
        %3278 = vmatpush.msra.mxu0 0.0
        %3279 = vmatpush.msra.mxu0 0.0
        %3280 = vmatpush.msra.mxu0 0.0
        %3281 = vmatpush.msra.mxu0 0.0
        %3282 = vmatpush.msra.mxu0 0.0
        %3283 = vmatpush.msra.mxu0 0.0
        %3284 = vmatpush.msra.mxu0 0.0
        %3285 = vmatpush.msra.mxu0 0.0
        %3286 = vmatpush.msra.mxu0 0.0
        %3287 = vmatpush.msra.mxu0 0.0
        %3288 = vmatpush.msra.mxu0 0.0
        %3289 = vmatpush.msra.mxu0 0.0
        %3290 = vmatpush.msra.mxu0 %v3273
        %3291 = vmatpush.msra.mxu0 %v3271
        %3292 = vmatmul.f32.gmra.mxu0 %v1068
        %v3293 = vpop.f32.mrf.mxu0
        %v3294 = vadd.f32 0.0, %v3293
        %3295 = vmatmul.f32.gmra.mxu0 %v1071
        %v3296 = vpop.f32.mrf.mxu0
        %v3297 = vadd.f32 0.0, %v3296
        %3298 = vmatmul.f32.gmra.mxu0 %v1074
        %v3299 = vpop.f32.mrf.mxu0
        %v3300 = vadd.f32 0.0, %v3299
        %3301 = vmatmul.f32.gmra.mxu0 %v1077
        %v3302 = vpop.f32.mrf.mxu0
        %v3303 = vadd.f32 0.0, %v3302
        %3304 = vmatmul.f32.gmra.mxu0 %v1080
        %v3305 = vpop.f32.mrf.mxu0
        %v3306 = vadd.f32 0.0, %v3305
        %3307 = vmatmul.f32.gmra.mxu0 %v1083
        %v3308 = vpop.f32.mrf.mxu0
        %v3309 = vadd.f32 0.0, %v3308
        %3310 = vmatmul.f32.gmra.mxu0 %v1086
        %v3311 = vpop.f32.mrf.mxu0
        %v3312 = vadd.f32 0.0, %v3311
        %3313 = vmatmul.f32.gmra.mxu0 %v1089
        %v3314 = vpop.f32.mrf.mxu0
        %v3315 = vadd.f32 0.0, %v3314
        %3316 = vmatmul.f32.gmra.mxu0 %v1092
        %v3317 = vpop.f32.mrf.mxu0
        %v3318 = vadd.f32 0.0, %v3317
        %3319 = vmatmul.f32.gmra.mxu0 %v1095
        %v3320 = vpop.f32.mrf.mxu0
        %v3321 = vadd.f32 0.0, %v3320
        %3322 = vmatmul.f32.gmra.mxu0 %v1098
        %v3323 = vpop.f32.mrf.mxu0
        %v3324 = vadd.f32 0.0, %v3323
        %3325 = vmatmul.f32.gmra.mxu0 %v1101
        %v3326 = vpop.f32.mrf.mxu0
        %v3327 = vadd.f32 0.0, %v3326
        %3328 = vmatmul.f32.gmra.mxu0 %v1104
        %v3329 = vpop.f32.mrf.mxu0
        %v3330 = vadd.f32 0.0, %v3329
        %3331 = vmatmul.f32.gmra.mxu0 %v1107
        %v3332 = vpop.f32.mrf.mxu0
        %v3333 = vadd.f32 0.0, %v3332
        %3334 = vmatmul.f32.gmra.mxu0 %v1110
        %v3335 = vpop.f32.mrf.mxu0
        %v3336 = vadd.f32 0.0, %v3335
        %3337 = vmatmul.f32.gmra.mxu0 %v1113
        %v3338 = vpop.f32.mrf.mxu0
        %v3339 = vadd.f32 0.0, %v3338
        %3340 = vmatmul.f32.gmra.mxu0 %v1116
        %v3341 = vpop.f32.mrf.mxu0
        %v3342 = vadd.f32 0.0, %v3341
        %3343 = vmatmul.f32.gmra.mxu0 %v1119
        %v3344 = vpop.f32.mrf.mxu0
        %v3345 = vadd.f32 0.0, %v3344
        %3346 = vmatmul.f32.gmra.mxu0 %v1122
        %v3347 = vpop.f32.mrf.mxu0
        %v3348 = vadd.f32 0.0, %v3347
        %3349 = vmatmul.f32.gmra.mxu0 %v1125
        %v3350 = vpop.f32.mrf.mxu0
        %v3351 = vadd.f32 0.0, %v3350
        %3352 = vmatmul.f32.gmra.mxu0 %v1128
        %v3353 = vpop.f32.mrf.mxu0
        %v3354 = vadd.f32 0.0, %v3353
        %3355 = vmatmul.f32.gmra.mxu0 %v1131
        %v3356 = vpop.f32.mrf.mxu0
        %v3357 = vadd.f32 0.0, %v3356
        %3358 = vmatmul.f32.gmra.mxu0 %v1134
        %v3359 = vpop.f32.mrf.mxu0
        %v3360 = vadd.f32 0.0, %v3359
        %3361 = vmatmul.f32.gmra.mxu0 %v1137
        %v3362 = vpop.f32.mrf.mxu0
        %v3363 = vadd.f32 0.0, %v3362
        %3364 = vmatmul.f32.gmra.mxu0 %v1140
        %v3365 = vpop.f32.mrf.mxu0
        %v3366 = vadd.f32 0.0, %v3365
        %3367 = vmatmul.f32.gmra.mxu0 %v1143
        %v3368 = vpop.f32.mrf.mxu0
        %v3369 = vadd.f32 0.0, %v3368
        %3370 = vmatmul.f32.gmra.mxu0 %v1146
        %v3371 = vpop.f32.mrf.mxu0
        %v3372 = vadd.f32 0.0, %v3371
        %3373 = vmatmul.f32.gmra.mxu0 %v1149
        %v3374 = vpop.f32.mrf.mxu0
        %v3375 = vadd.f32 0.0, %v3374
        %3376 = vmatmul.f32.gmra.mxu0 %v1152
        %v3377 = vpop.f32.mrf.mxu0
        %v3378 = vadd.f32 0.0, %v3377
        %3379 = vmatmul.f32.gmra.mxu0 %v1155
        %v3380 = vpop.f32.mrf.mxu0
        %v3381 = vadd.f32 0.0, %v3380
        %3382 = vmatmul.f32.gmra.mxu0 %v1158
        %v3383 = vpop.f32.mrf.mxu0
        %v3384 = vadd.f32 0.0, %v3383
        %3385 = vmatmul.f32.gmra.mxu0 %v1161
        %v3386 = vpop.f32.mrf.mxu0
        %v3387 = vadd.f32 0.0, %v3386
        %3388 = vdwg.mxu0
        %v3389 = vmul.f32 %v3294, %v749
        %v3390 = vmul.f32 %v3297, %v750
        %v3391 = vmul.f32 %v3300, %v751
        %v3392 = vmul.f32 %v3303, %v752
        %v3393 = vmul.f32 %v3306, %v753
        %v3394 = vmul.f32 %v3309, %v754
        %v3395 = vmul.f32 %v3312, %v755
        %v3396 = vmul.f32 %v3315, %v756
        %v3397 = vmul.f32 %v3318, %v757
        %v3398 = vmul.f32 %v3321, %v758
        %v3399 = vmul.f32 %v3324, %v759
        %v3400 = vmul.f32 %v3327, %v760
        %v3401 = vmul.f32 %v3330, %v761
        %v3402 = vmul.f32 %v3333, %v762
        %v3403 = vmul.f32 %v3336, %v763
        %v3404 = vmul.f32 %v3339, %v764
        %v3405 = vmul.f32 %v3342, %v765
        %v3406 = vmul.f32 %v3345, %v766
        %v3407 = vmul.f32 %v3348, %v767
        %v3408 = vmul.f32 %v3351, %v768
        %v3409 = vmul.f32 %v3354, %v769
        %v3410 = vmul.f32 %v3357, %v770
        %v3411 = vmul.f32 %v3360, %v771
        %v3412 = vmul.f32 %v3363, %v772
        %v3413 = vmul.f32 %v3366, %v773
        %v3414 = vmul.f32 %v3369, %v774
        %v3415 = vmul.f32 %v3372, %v775
        %v3416 = vmul.f32 %v3375, %v776
        %v3417 = vmul.f32 %v3378, %v777
        %v3418 = vmul.f32 %v3381, %v778
        %v3419 = vmul.f32 %v3384, %v779
        %v3420 = vmul.f32 %v3387, %v780
        %v3421 = vsel %vm1066, %v3389, 0.0
        %3422 = vadd.xlane.f32.xlu0 %v3421
        %v3423 = vpop.xlane.xlu0 %3422
        %v3424 = vsel %vm1066, %v3390, 0.0
        %3425 = vadd.xlane.f32.xlu0 %v3424
        %v3426 = vpop.xlane.xlu0 %3425
        %v3427 = vsel %vm1066, %v3391, 0.0
        %3428 = vadd.xlane.f32.xlu0 %v3427
        %v3429 = vpop.xlane.xlu0 %3428
        %v3430 = vsel %vm1066, %v3392, 0.0
        %3431 = vadd.xlane.f32.xlu0 %v3430
        %v3432 = vpop.xlane.xlu0 %3431
        %v3433 = vsel %vm1066, %v3393, 0.0
        %3434 = vadd.xlane.f32.xlu0 %v3433
        %v3435 = vpop.xlane.xlu0 %3434
        %v3436 = vsel %vm1066, %v3394, 0.0
        %3437 = vadd.xlane.f32.xlu0 %v3436
        %v3438 = vpop.xlane.xlu0 %3437
        %v3439 = vsel %vm1066, %v3395, 0.0
        %3440 = vadd.xlane.f32.xlu0 %v3439
        %v3441 = vpop.xlane.xlu0 %3440
        %v3442 = vsel %vm1066, %v3396, 0.0
        %3443 = vadd.xlane.f32.xlu0 %v3442
        %v3444 = vpop.xlane.xlu0 %3443
        %v3445 = vsel %vm1066, %v3397, 0.0
        %3446 = vadd.xlane.f32.xlu0 %v3445
        %v3447 = vpop.xlane.xlu0 %3446
        %v3448 = vsel %vm1066, %v3398, 0.0
        %3449 = vadd.xlane.f32.xlu0 %v3448
        %v3450 = vpop.xlane.xlu0 %3449
        %v3451 = vsel %vm1066, %v3399, 0.0
        %3452 = vadd.xlane.f32.xlu0 %v3451
        %v3453 = vpop.xlane.xlu0 %3452
        %v3454 = vsel %vm1066, %v3400, 0.0
        %3455 = vadd.xlane.f32.xlu0 %v3454
        %v3456 = vpop.xlane.xlu0 %3455
        %v3457 = vsel %vm1066, %v3401, 0.0
        %3458 = vadd.xlane.f32.xlu0 %v3457
        %v3459 = vpop.xlane.xlu0 %3458
        %v3460 = vsel %vm1066, %v3402, 0.0
        %3461 = vadd.xlane.f32.xlu0 %v3460
        %v3462 = vpop.xlane.xlu0 %3461
        %v3463 = vsel %vm1066, %v3403, 0.0
        %3464 = vadd.xlane.f32.xlu0 %v3463
        %v3465 = vpop.xlane.xlu0 %3464
        %v3466 = vsel %vm1066, %v3404, 0.0
        %3467 = vadd.xlane.f32.xlu0 %v3466
        %v3468 = vpop.xlane.xlu0 %3467
        %v3469 = vsel %vm1066, %v3405, 0.0
        %3470 = vadd.xlane.f32.xlu0 %v3469
        %v3471 = vpop.xlane.xlu0 %3470
        %v3472 = vsel %vm1066, %v3406, 0.0
        %3473 = vadd.xlane.f32.xlu0 %v3472
        %v3474 = vpop.xlane.xlu0 %3473
        %v3475 = vsel %vm1066, %v3407, 0.0
        %3476 = vadd.xlane.f32.xlu0 %v3475
        %v3477 = vpop.xlane.xlu0 %3476
        %v3478 = vsel %vm1066, %v3408, 0.0
        %3479 = vadd.xlane.f32.xlu0 %v3478
        %v3480 = vpop.xlane.xlu0 %3479
        %v3481 = vsel %vm1066, %v3409, 0.0
        %3482 = vadd.xlane.f32.xlu0 %v3481
        %v3483 = vpop.xlane.xlu0 %3482
        %v3484 = vsel %vm1066, %v3410, 0.0
        %3485 = vadd.xlane.f32.xlu0 %v3484
        %v3486 = vpop.xlane.xlu0 %3485
        %v3487 = vsel %vm1066, %v3411, 0.0
        %3488 = vadd.xlane.f32.xlu0 %v3487
        %v3489 = vpop.xlane.xlu0 %3488
        %v3490 = vsel %vm1066, %v3412, 0.0
        %3491 = vadd.xlane.f32.xlu0 %v3490
        %v3492 = vpop.xlane.xlu0 %3491
        %v3493 = vsel %vm1066, %v3413, 0.0
        %3494 = vadd.xlane.f32.xlu0 %v3493
        %v3495 = vpop.xlane.xlu0 %3494
        %v3496 = vsel %vm1066, %v3414, 0.0
        %3497 = vadd.xlane.f32.xlu0 %v3496
        %v3498 = vpop.xlane.xlu0 %3497
        %v3499 = vsel %vm1066, %v3415, 0.0
        %3500 = vadd.xlane.f32.xlu0 %v3499
        %v3501 = vpop.xlane.xlu0 %3500
        %v3502 = vsel %vm1066, %v3416, 0.0
        %3503 = vadd.xlane.f32.xlu0 %v3502
        %v3504 = vpop.xlane.xlu0 %3503
        %v3505 = vsel %vm1066, %v3417, 0.0
        %3506 = vadd.xlane.f32.xlu0 %v3505
        %v3507 = vpop.xlane.xlu0 %3506
        %v3508 = vsel %vm1066, %v3418, 0.0
        %3509 = vadd.xlane.f32.xlu0 %v3508
        %v3510 = vpop.xlane.xlu0 %3509
        %v3511 = vsel %vm1066, %v3419, 0.0
        %3512 = vadd.xlane.f32.xlu0 %v3511
        %v3513 = vpop.xlane.xlu0 %3512
        %v3514 = vsel %vm1066, %v3420, 0.0
        %3515 = vadd.xlane.f32.xlu0 %v3514
        %v3516 = vpop.xlane.xlu0 %3515
        %3517 = vrot.lane.b32.xlu0 %v2758, 110
        %v3518 = vpop.permute.xlu0 %3517
        %3519 = vrot.lane.b32.xlu0 %v2760, 110
        %v3520 = vpop.permute.xlu0 %3519
        %3523 = vmatpush.msra.mxu0 0.0
        %3524 = vmatpush.msra.mxu0 0.0
        %3525 = vmatpush.msra.mxu0 0.0
        %3526 = vmatpush.msra.mxu0 0.0
        %3527 = vmatpush.msra.mxu0 0.0
        %3528 = vmatpush.msra.mxu0 0.0
        %3529 = vmatpush.msra.mxu0 0.0
        %3530 = vmatpush.msra.mxu0 0.0
        %3531 = vmatpush.msra.mxu0 0.0
        %3532 = vmatpush.msra.mxu0 0.0
        %3533 = vmatpush.msra.mxu0 0.0
        %3534 = vmatpush.msra.mxu0 0.0
        %3535 = vmatpush.msra.mxu0 0.0
        %3536 = vmatpush.msra.mxu0 0.0
        %3537 = vmatpush.msra.mxu0 %v3520
        %3538 = vmatpush.msra.mxu0 %v3518
        %3539 = vmatmul.f32.gmra.mxu0 %v1068
        %v3540 = vpop.f32.mrf.mxu0
        %v3541 = vadd.f32 0.0, %v3540
        %3542 = vmatmul.f32.gmra.mxu0 %v1071
        %v3543 = vpop.f32.mrf.mxu0
        %v3544 = vadd.f32 0.0, %v3543
        %3545 = vmatmul.f32.gmra.mxu0 %v1074
        %v3546 = vpop.f32.mrf.mxu0
        %v3547 = vadd.f32 0.0, %v3546
        %3548 = vmatmul.f32.gmra.mxu0 %v1077
        %v3549 = vpop.f32.mrf.mxu0
        %v3550 = vadd.f32 0.0, %v3549
        %3551 = vmatmul.f32.gmra.mxu0 %v1080
        %v3552 = vpop.f32.mrf.mxu0
        %v3553 = vadd.f32 0.0, %v3552
        %3554 = vmatmul.f32.gmra.mxu0 %v1083
        %v3555 = vpop.f32.mrf.mxu0
        %v3556 = vadd.f32 0.0, %v3555
        %3557 = vmatmul.f32.gmra.mxu0 %v1086
        %v3558 = vpop.f32.mrf.mxu0
        %v3559 = vadd.f32 0.0, %v3558
        %3560 = vmatmul.f32.gmra.mxu0 %v1089
        %v3561 = vpop.f32.mrf.mxu0
        %v3562 = vadd.f32 0.0, %v3561
        %3563 = vmatmul.f32.gmra.mxu0 %v1092
        %v3564 = vpop.f32.mrf.mxu0
        %v3565 = vadd.f32 0.0, %v3564
        %3566 = vmatmul.f32.gmra.mxu0 %v1095
        %v3567 = vpop.f32.mrf.mxu0
        %v3568 = vadd.f32 0.0, %v3567
        %3569 = vmatmul.f32.gmra.mxu0 %v1098
        %v3570 = vpop.f32.mrf.mxu0
        %v3571 = vadd.f32 0.0, %v3570
        %3572 = vmatmul.f32.gmra.mxu0 %v1101
        %v3573 = vpop.f32.mrf.mxu0
        %v3574 = vadd.f32 0.0, %v3573
        %3575 = vmatmul.f32.gmra.mxu0 %v1104
        %v3576 = vpop.f32.mrf.mxu0
        %v3577 = vadd.f32 0.0, %v3576
        %3578 = vmatmul.f32.gmra.mxu0 %v1107
        %v3579 = vpop.f32.mrf.mxu0
        %v3580 = vadd.f32 0.0, %v3579
        %3581 = vmatmul.f32.gmra.mxu0 %v1110
        %v3582 = vpop.f32.mrf.mxu0
        %v3583 = vadd.f32 0.0, %v3582
        %3584 = vmatmul.f32.gmra.mxu0 %v1113
        %v3585 = vpop.f32.mrf.mxu0
        %v3586 = vadd.f32 0.0, %v3585
        %3587 = vmatmul.f32.gmra.mxu0 %v1116
        %v3588 = vpop.f32.mrf.mxu0
        %v3589 = vadd.f32 0.0, %v3588
        %3590 = vmatmul.f32.gmra.mxu0 %v1119
        %v3591 = vpop.f32.mrf.mxu0
        %v3592 = vadd.f32 0.0, %v3591
        %3593 = vmatmul.f32.gmra.mxu0 %v1122
        %v3594 = vpop.f32.mrf.mxu0
        %v3595 = vadd.f32 0.0, %v3594
        %3596 = vmatmul.f32.gmra.mxu0 %v1125
        %v3597 = vpop.f32.mrf.mxu0
        %v3598 = vadd.f32 0.0, %v3597
        %3599 = vmatmul.f32.gmra.mxu0 %v1128
        %v3600 = vpop.f32.mrf.mxu0
        %v3601 = vadd.f32 0.0, %v3600
        %3602 = vmatmul.f32.gmra.mxu0 %v1131
        %v3603 = vpop.f32.mrf.mxu0
        %v3604 = vadd.f32 0.0, %v3603
        %3605 = vmatmul.f32.gmra.mxu0 %v1134
        %v3606 = vpop.f32.mrf.mxu0
        %v3607 = vadd.f32 0.0, %v3606
        %3608 = vmatmul.f32.gmra.mxu0 %v1137
        %v3609 = vpop.f32.mrf.mxu0
        %v3610 = vadd.f32 0.0, %v3609
        %3611 = vmatmul.f32.gmra.mxu0 %v1140
        %v3612 = vpop.f32.mrf.mxu0
        %v3613 = vadd.f32 0.0, %v3612
        %3614 = vmatmul.f32.gmra.mxu0 %v1143
        %v3615 = vpop.f32.mrf.mxu0
        %v3616 = vadd.f32 0.0, %v3615
        %3617 = vmatmul.f32.gmra.mxu0 %v1146
        %v3618 = vpop.f32.mrf.mxu0
        %v3619 = vadd.f32 0.0, %v3618
        %3620 = vmatmul.f32.gmra.mxu0 %v1149
        %v3621 = vpop.f32.mrf.mxu0
        %v3622 = vadd.f32 0.0, %v3621
        %3623 = vmatmul.f32.gmra.mxu0 %v1152
        %v3624 = vpop.f32.mrf.mxu0
        %v3625 = vadd.f32 0.0, %v3624
        %3626 = vmatmul.f32.gmra.mxu0 %v1155
        %v3627 = vpop.f32.mrf.mxu0
        %v3628 = vadd.f32 0.0, %v3627
        %3629 = vmatmul.f32.gmra.mxu0 %v1158
        %v3630 = vpop.f32.mrf.mxu0
        %v3631 = vadd.f32 0.0, %v3630
        %3632 = vmatmul.f32.gmra.mxu0 %v1161
        %v3633 = vpop.f32.mrf.mxu0
        %v3634 = vadd.f32 0.0, %v3633
        %3635 = vdwg.mxu0
        %v3636 = vmul.f32 %v3541, %v749
        %v3637 = vmul.f32 %v3544, %v750
        %v3638 = vmul.f32 %v3547, %v751
        %v3639 = vmul.f32 %v3550, %v752
        %v3640 = vmul.f32 %v3553, %v753
        %v3641 = vmul.f32 %v3556, %v754
        %v3642 = vmul.f32 %v3559, %v755
        %v3643 = vmul.f32 %v3562, %v756
        %v3644 = vmul.f32 %v3565, %v757
        %v3645 = vmul.f32 %v3568, %v758
        %v3646 = vmul.f32 %v3571, %v759
        %v3647 = vmul.f32 %v3574, %v760
        %v3648 = vmul.f32 %v3577, %v761
        %v3649 = vmul.f32 %v3580, %v762
        %v3650 = vmul.f32 %v3583, %v763
        %v3651 = vmul.f32 %v3586, %v764
        %v3652 = vmul.f32 %v3589, %v765
        %v3653 = vmul.f32 %v3592, %v766
        %v3654 = vmul.f32 %v3595, %v767
        %v3655 = vmul.f32 %v3598, %v768
        %v3656 = vmul.f32 %v3601, %v769
        %v3657 = vmul.f32 %v3604, %v770
        %v3658 = vmul.f32 %v3607, %v771
        %v3659 = vmul.f32 %v3610, %v772
        %v3660 = vmul.f32 %v3613, %v773
        %v3661 = vmul.f32 %v3616, %v774
        %v3662 = vmul.f32 %v3619, %v775
        %v3663 = vmul.f32 %v3622, %v776
        %v3664 = vmul.f32 %v3625, %v777
        %v3665 = vmul.f32 %v3628, %v778
        %v3666 = vmul.f32 %v3631, %v779
        %v3667 = vmul.f32 %v3634, %v780
        %v3668 = vsel %vm1066, %v3636, 0.0
        %3669 = vadd.xlane.f32.xlu0 %v3668
        %v3670 = vpop.xlane.xlu0 %3669
        %v3671 = vsel %vm1066, %v3637, 0.0
        %3672 = vadd.xlane.f32.xlu0 %v3671
        %v3673 = vpop.xlane.xlu0 %3672
        %v3674 = vsel %vm1066, %v3638, 0.0
        %3675 = vadd.xlane.f32.xlu0 %v3674
        %v3676 = vpop.xlane.xlu0 %3675
        %v3677 = vsel %vm1066, %v3639, 0.0
        %3678 = vadd.xlane.f32.xlu0 %v3677
        %v3679 = vpop.xlane.xlu0 %3678
        %v3680 = vsel %vm1066, %v3640, 0.0
        %3681 = vadd.xlane.f32.xlu0 %v3680
        %v3682 = vpop.xlane.xlu0 %3681
        %v3683 = vsel %vm1066, %v3641, 0.0
        %3684 = vadd.xlane.f32.xlu0 %v3683
        %v3685 = vpop.xlane.xlu0 %3684
        %v3686 = vsel %vm1066, %v3642, 0.0
        %3687 = vadd.xlane.f32.xlu0 %v3686
        %v3688 = vpop.xlane.xlu0 %3687
        %v3689 = vsel %vm1066, %v3643, 0.0
        %3690 = vadd.xlane.f32.xlu0 %v3689
        %v3691 = vpop.xlane.xlu0 %3690
        %v3692 = vsel %vm1066, %v3644, 0.0
        %3693 = vadd.xlane.f32.xlu0 %v3692
        %v3694 = vpop.xlane.xlu0 %3693
        %v3695 = vsel %vm1066, %v3645, 0.0
        %3696 = vadd.xlane.f32.xlu0 %v3695
        %v3697 = vpop.xlane.xlu0 %3696
        %v3698 = vsel %vm1066, %v3646, 0.0
        %3699 = vadd.xlane.f32.xlu0 %v3698
        %v3700 = vpop.xlane.xlu0 %3699
        %v3701 = vsel %vm1066, %v3647, 0.0
        %3702 = vadd.xlane.f32.xlu0 %v3701
        %v3703 = vpop.xlane.xlu0 %3702
        %v3704 = vsel %vm1066, %v3648, 0.0
        %3705 = vadd.xlane.f32.xlu0 %v3704
        %v3706 = vpop.xlane.xlu0 %3705
        %v3707 = vsel %vm1066, %v3649, 0.0
        %3708 = vadd.xlane.f32.xlu0 %v3707
        %v3709 = vpop.xlane.xlu0 %3708
        %v3710 = vsel %vm1066, %v3650, 0.0
        %3711 = vadd.xlane.f32.xlu0 %v3710
        %v3712 = vpop.xlane.xlu0 %3711
        %v3713 = vsel %vm1066, %v3651, 0.0
        %3714 = vadd.xlane.f32.xlu0 %v3713
        %v3715 = vpop.xlane.xlu0 %3714
        %v3716 = vsel %vm1066, %v3652, 0.0
        %3717 = vadd.xlane.f32.xlu0 %v3716
        %v3718 = vpop.xlane.xlu0 %3717
        %v3719 = vsel %vm1066, %v3653, 0.0
        %3720 = vadd.xlane.f32.xlu0 %v3719
        %v3721 = vpop.xlane.xlu0 %3720
        %v3722 = vsel %vm1066, %v3654, 0.0
        %3723 = vadd.xlane.f32.xlu0 %v3722
        %v3724 = vpop.xlane.xlu0 %3723
        %v3725 = vsel %vm1066, %v3655, 0.0
        %3726 = vadd.xlane.f32.xlu0 %v3725
        %v3727 = vpop.xlane.xlu0 %3726
        %v3728 = vsel %vm1066, %v3656, 0.0
        %3729 = vadd.xlane.f32.xlu0 %v3728
        %v3730 = vpop.xlane.xlu0 %3729
        %v3731 = vsel %vm1066, %v3657, 0.0
        %3732 = vadd.xlane.f32.xlu0 %v3731
        %v3733 = vpop.xlane.xlu0 %3732
        %v3734 = vsel %vm1066, %v3658, 0.0
        %3735 = vadd.xlane.f32.xlu0 %v3734
        %v3736 = vpop.xlane.xlu0 %3735
        %v3737 = vsel %vm1066, %v3659, 0.0
        %3738 = vadd.xlane.f32.xlu0 %v3737
        %v3739 = vpop.xlane.xlu0 %3738
        %v3740 = vsel %vm1066, %v3660, 0.0
        %3741 = vadd.xlane.f32.xlu0 %v3740
        %v3742 = vpop.xlane.xlu0 %3741
        %v3743 = vsel %vm1066, %v3661, 0.0
        %3744 = vadd.xlane.f32.xlu0 %v3743
        %v3745 = vpop.xlane.xlu0 %3744
        %v3746 = vsel %vm1066, %v3662, 0.0
        %3747 = vadd.xlane.f32.xlu0 %v3746
        %v3748 = vpop.xlane.xlu0 %3747
        %v3749 = vsel %vm1066, %v3663, 0.0
        %3750 = vadd.xlane.f32.xlu0 %v3749
        %v3751 = vpop.xlane.xlu0 %3750
        %v3752 = vsel %vm1066, %v3664, 0.0
        %3753 = vadd.xlane.f32.xlu0 %v3752
        %v3754 = vpop.xlane.xlu0 %3753
        %v3755 = vsel %vm1066, %v3665, 0.0
        %3756 = vadd.xlane.f32.xlu0 %v3755
        %v3757 = vpop.xlane.xlu0 %3756
        %v3758 = vsel %vm1066, %v3666, 0.0
        %3759 = vadd.xlane.f32.xlu0 %v3758
        %v3760 = vpop.xlane.xlu0 %3759
        %v3761 = vsel %vm1066, %v3667, 0.0
        %3762 = vadd.xlane.f32.xlu0 %v3761
        %v3763 = vpop.xlane.xlu0 %3762
        %v3764 = vmul.f32 %v2966, %v3423
        %v3765 = vmul.f32 %v2969, %v3426
        %v3766 = vmul.f32 %v2972, %v3429
        %v3767 = vmul.f32 %v2975, %v3432
        %v3768 = vmul.f32 %v2978, %v3435
        %v3769 = vmul.f32 %v2981, %v3438
        %v3770 = vmul.f32 %v2984, %v3441
        %v3771 = vmul.f32 %v2987, %v3444
        %v3772 = vmul.f32 %v2990, %v3447
        %v3773 = vmul.f32 %v2993, %v3450
        %v3774 = vmul.f32 %v2996, %v3453
        %v3775 = vmul.f32 %v2999, %v3456
        %v3776 = vmul.f32 %v3002, %v3459
        %v3777 = vmul.f32 %v3005, %v3462
        %v3778 = vmul.f32 %v3008, %v3465
        %v3779 = vmul.f32 %v3011, %v3468
        %v3780 = vmul.f32 %v3014, %v3471
        %v3781 = vmul.f32 %v3017, %v3474
        %v3782 = vmul.f32 %v3020, %v3477
        %v3783 = vmul.f32 %v3023, %v3480
        %v3784 = vmul.f32 %v3026, %v3483
        %v3785 = vmul.f32 %v3029, %v3486
        %v3786 = vmul.f32 %v3032, %v3489
        %v3787 = vmul.f32 %v3035, %v3492
        %v3788 = vmul.f32 %v3038, %v3495
        %v3789 = vmul.f32 %v3041, %v3498
        %v3790 = vmul.f32 %v3044, %v3501
        %v3791 = vmul.f32 %v3047, %v3504
        %v3792 = vmul.f32 %v3050, %v3507
        %v3793 = vmul.f32 %v3053, %v3510
        %v3794 = vmul.f32 %v3056, %v3513
        %v3795 = vmul.f32 %v3059, %v3516
        %v3796 = vmul.f32 %v3207, 0.0
        %v3797 = vmul.f32 %v3209, 0.0
        %v3798 = vadd.f32 %v3796, %v3764
        %v3799 = vadd.f32 %v3797, %v3765
        %v3800 = vmul.f32 %v3798, %v3670
        %v3801 = vmul.f32 %v3799, %v3673
        %v3802 = vsel %vm977, %v3800, 0.0
        %v3803 = vsel %vm977, %v3801, 0.0
        %v3804 = vadd.f32 %v3802, %v3803
        %v3805 = vrot.slane %v3804, 4
        %v3806 = vadd.f32 %v3804, %v3805
        %v3807 = vrot.slane %v3806, 2
        %v3808 = vadd.f32 %v3806, %v3807
        %v3809 = vrot.slane %v3808, 1
        %v3810 = vadd.f32 %v3808, %v3809
        %v3811 = vmul.f32 %v3211, %v3798
        %v3812 = vmul.f32 %v3213, %v3799
        %v3813 = vadd.f32 %v3811, %v3766
        %v3814 = vadd.f32 %v3812, %v3767
        %v3815 = vmul.f32 %v3813, %v3676
        %v3816 = vmul.f32 %v3814, %v3679
        %v3817 = vsel %vm977, %v3815, 0.0
        %v3818 = vsel %vm977, %v3816, 0.0
        %v3819 = vadd.f32 %v3817, %v3818
        %v3820 = vrot.slane %v3819, 4
        %v3821 = vadd.f32 %v3819, %v3820
        %v3822 = vrot.slane %v3821, 2
        %v3823 = vadd.f32 %v3821, %v3822
        %v3824 = vrot.slane %v3823, 1
        %v3825 = vadd.f32 %v3823, %v3824
        %v3826 = vmul.f32 %v3215, %v3813
        %v3827 = vmul.f32 %v3217, %v3814
        %v3828 = vadd.f32 %v3826, %v3768
        %v3829 = vadd.f32 %v3827, %v3769
        %v3830 = vmul.f32 %v3828, %v3682
        %v3831 = vmul.f32 %v3829, %v3685
        %v3832 = vsel %vm977, %v3830, 0.0
        %v3833 = vsel %vm977, %v3831, 0.0
        %v3834 = vadd.f32 %v3832, %v3833
        %v3835 = vrot.slane %v3834, 4
        %v3836 = vadd.f32 %v3834, %v3835
        %v3837 = vrot.slane %v3836, 2
        %v3838 = vadd.f32 %v3836, %v3837
        %v3839 = vrot.slane %v3838, 1
        %v3840 = vadd.f32 %v3838, %v3839
        %v3841 = vmul.f32 %v3219, %v3828
        %v3842 = vmul.f32 %v3221, %v3829
        %v3843 = vadd.f32 %v3841, %v3770
        %v3844 = vadd.f32 %v3842, %v3771
        %v3845 = vmul.f32 %v3843, %v3688
        %v3846 = vmul.f32 %v3844, %v3691
        %v3847 = vsel %vm977, %v3845, 0.0
        %v3848 = vsel %vm977, %v3846, 0.0
        %v3849 = vadd.f32 %v3847, %v3848
        %v3850 = vrot.slane %v3849, 4
        %v3851 = vadd.f32 %v3849, %v3850
        %v3852 = vrot.slane %v3851, 2
        %v3853 = vadd.f32 %v3851, %v3852
        %v3854 = vrot.slane %v3853, 1
        %v3855 = vadd.f32 %v3853, %v3854
        %v3856 = vmul.f32 %v3223, %v3843
        %v3857 = vmul.f32 %v3225, %v3844
        %v3858 = vadd.f32 %v3856, %v3772
        %v3859 = vadd.f32 %v3857, %v3773
        %v3860 = vmul.f32 %v3858, %v3694
        %v3861 = vmul.f32 %v3859, %v3697
        %v3862 = vsel %vm977, %v3860, 0.0
        %v3863 = vsel %vm977, %v3861, 0.0
        %v3864 = vadd.f32 %v3862, %v3863
        %v3865 = vrot.slane %v3864, 4
        %v3866 = vadd.f32 %v3864, %v3865
        %v3867 = vrot.slane %v3866, 2
        %v3868 = vadd.f32 %v3866, %v3867
        %v3869 = vrot.slane %v3868, 1
        %v3870 = vadd.f32 %v3868, %v3869
        %v3871 = vmul.f32 %v3227, %v3858
        %v3872 = vmul.f32 %v3229, %v3859
        %v3873 = vadd.f32 %v3871, %v3774
        %v3874 = vadd.f32 %v3872, %v3775
        %v3875 = vmul.f32 %v3873, %v3700
        %v3876 = vmul.f32 %v3874, %v3703
        %v3877 = vsel %vm977, %v3875, 0.0
        %v3878 = vsel %vm977, %v3876, 0.0
        %v3879 = vadd.f32 %v3877, %v3878
        %v3880 = vrot.slane %v3879, 4
        %v3881 = vadd.f32 %v3879, %v3880
        %v3882 = vrot.slane %v3881, 2
        %v3883 = vadd.f32 %v3881, %v3882
        %v3884 = vrot.slane %v3883, 1
        %v3885 = vadd.f32 %v3883, %v3884
        %v3886 = vmul.f32 %v3231, %v3873
        %v3887 = vmul.f32 %v3233, %v3874
        %v3888 = vadd.f32 %v3886, %v3776
        %v3889 = vadd.f32 %v3887, %v3777
        %v3890 = vmul.f32 %v3888, %v3706
        %v3891 = vmul.f32 %v3889, %v3709
        %v3892 = vsel %vm977, %v3890, 0.0
        %v3893 = vsel %vm977, %v3891, 0.0
        %v3894 = vadd.f32 %v3892, %v3893
        %v3895 = vrot.slane %v3894, 4
        %v3896 = vadd.f32 %v3894, %v3895
        %v3897 = vrot.slane %v3896, 2
        %v3898 = vadd.f32 %v3896, %v3897
        %v3899 = vrot.slane %v3898, 1
        %v3900 = vadd.f32 %v3898, %v3899
        %v3901 = vmul.f32 %v3235, %v3888
        %v3902 = vmul.f32 %v3237, %v3889
        %v3903 = vadd.f32 %v3901, %v3778
        %v3904 = vadd.f32 %v3902, %v3779
        %v3905 = vmul.f32 %v3903, %v3712
        %v3906 = vmul.f32 %v3904, %v3715
        %v3907 = vsel %vm977, %v3905, 0.0
        %v3908 = vsel %vm977, %v3906, 0.0
        %v3909 = vadd.f32 %v3907, %v3908
        %v3910 = vrot.slane %v3909, 4
        %v3911 = vadd.f32 %v3909, %v3910
        %v3912 = vrot.slane %v3911, 2
        %v3913 = vadd.f32 %v3911, %v3912
        %v3914 = vrot.slane %v3913, 1
        %v3915 = vadd.f32 %v3913, %v3914
        %v3916 = vmul.f32 %v3239, %v3903
        %v3917 = vmul.f32 %v3241, %v3904
        %v3918 = vadd.f32 %v3916, %v3780
        %v3919 = vadd.f32 %v3917, %v3781
        %v3920 = vmul.f32 %v3918, %v3718
        %v3921 = vmul.f32 %v3919, %v3721
        %v3922 = vsel %vm977, %v3920, 0.0
        %v3923 = vsel %vm977, %v3921, 0.0
        %v3924 = vadd.f32 %v3922, %v3923
        %v3925 = vrot.slane %v3924, 4
        %v3926 = vadd.f32 %v3924, %v3925
        %v3927 = vrot.slane %v3926, 2
        %v3928 = vadd.f32 %v3926, %v3927
        %v3929 = vrot.slane %v3928, 1
        %v3930 = vadd.f32 %v3928, %v3929
        %v3931 = vmul.f32 %v3243, %v3918
        %v3932 = vmul.f32 %v3245, %v3919
        %v3933 = vadd.f32 %v3931, %v3782
        %v3934 = vadd.f32 %v3932, %v3783
        %v3935 = vmul.f32 %v3933, %v3724
        %v3936 = vmul.f32 %v3934, %v3727
        %v3937 = vsel %vm977, %v3935, 0.0
        %v3938 = vsel %vm977, %v3936, 0.0
        %v3939 = vadd.f32 %v3937, %v3938
        %v3940 = vrot.slane %v3939, 4
        %v3941 = vadd.f32 %v3939, %v3940
        %v3942 = vrot.slane %v3941, 2
        %v3943 = vadd.f32 %v3941, %v3942
        %v3944 = vrot.slane %v3943, 1
        %v3945 = vadd.f32 %v3943, %v3944
        %v3946 = vmul.f32 %v3247, %v3933
        %v3947 = vmul.f32 %v3249, %v3934
        %v3948 = vadd.f32 %v3946, %v3784
        %v3949 = vadd.f32 %v3947, %v3785
        %v3950 = vmul.f32 %v3948, %v3730
        %v3951 = vmul.f32 %v3949, %v3733
        %v3952 = vsel %vm977, %v3950, 0.0
        %v3953 = vsel %vm977, %v3951, 0.0
        %v3954 = vadd.f32 %v3952, %v3953
        %v3955 = vrot.slane %v3954, 4
        %v3956 = vadd.f32 %v3954, %v3955
        %v3957 = vrot.slane %v3956, 2
        %v3958 = vadd.f32 %v3956, %v3957
        %v3959 = vrot.slane %v3958, 1
        %v3960 = vadd.f32 %v3958, %v3959
        %v3961 = vmul.f32 %v3251, %v3948
        %v3962 = vmul.f32 %v3253, %v3949
        %v3963 = vadd.f32 %v3961, %v3786
        %v3964 = vadd.f32 %v3962, %v3787
        %v3965 = vmul.f32 %v3963, %v3736
        %v3966 = vmul.f32 %v3964, %v3739
        %v3967 = vsel %vm977, %v3965, 0.0
        %v3968 = vsel %vm977, %v3966, 0.0
        %v3969 = vadd.f32 %v3967, %v3968
        %v3970 = vrot.slane %v3969, 4
        %v3971 = vadd.f32 %v3969, %v3970
        %v3972 = vrot.slane %v3971, 2
        %v3973 = vadd.f32 %v3971, %v3972
        %v3974 = vrot.slane %v3973, 1
        %v3975 = vadd.f32 %v3973, %v3974
        %v3976 = vmul.f32 %v3255, %v3963
        %v3977 = vmul.f32 %v3257, %v3964
        %v3978 = vadd.f32 %v3976, %v3788
        %v3979 = vadd.f32 %v3977, %v3789
        %v3980 = vmul.f32 %v3978, %v3742
        %v3981 = vmul.f32 %v3979, %v3745
        %v3982 = vsel %vm977, %v3980, 0.0
        %v3983 = vsel %vm977, %v3981, 0.0
        %v3984 = vadd.f32 %v3982, %v3983
        %v3985 = vrot.slane %v3984, 4
        %v3986 = vadd.f32 %v3984, %v3985
        %v3987 = vrot.slane %v3986, 2
        %v3988 = vadd.f32 %v3986, %v3987
        %v3989 = vrot.slane %v3988, 1
        %v3990 = vadd.f32 %v3988, %v3989
        %v3991 = vmul.f32 %v3259, %v3978
        %v3992 = vmul.f32 %v3261, %v3979
        %v3993 = vadd.f32 %v3991, %v3790
        %v3994 = vadd.f32 %v3992, %v3791
        %v3995 = vmul.f32 %v3993, %v3748
        %v3996 = vmul.f32 %v3994, %v3751
        %v3997 = vsel %vm977, %v3995, 0.0
        %v3998 = vsel %vm977, %v3996, 0.0
        %v3999 = vadd.f32 %v3997, %v3998
        %v4000 = vrot.slane %v3999, 4
        %v4001 = vadd.f32 %v3999, %v4000
        %v4002 = vrot.slane %v4001, 2
        %v4003 = vadd.f32 %v4001, %v4002
        %v4004 = vrot.slane %v4003, 1
        %v4005 = vadd.f32 %v4003, %v4004
        %v4006 = vmul.f32 %v3263, %v3993
        %v4007 = vmul.f32 %v3265, %v3994
        %v4008 = vadd.f32 %v4006, %v3792
        %v4009 = vadd.f32 %v4007, %v3793
        %v4010 = vmul.f32 %v4008, %v3754
        %v4011 = vmul.f32 %v4009, %v3757
        %v4012 = vsel %vm977, %v4010, 0.0
        %v4013 = vsel %vm977, %v4011, 0.0
        %v4014 = vadd.f32 %v4012, %v4013
        %v4015 = vrot.slane %v4014, 4
        %v4016 = vadd.f32 %v4014, %v4015
        %v4017 = vrot.slane %v4016, 2
        %v4018 = vadd.f32 %v4016, %v4017
        %v4019 = vrot.slane %v4018, 1
        %v4020 = vadd.f32 %v4018, %v4019
        %v4021 = vmul.f32 %v3267, %v4008
        %v4022 = vmul.f32 %v3269, %v4009
        %v4023 = vadd.f32 %v4021, %v3794
        %v4024 = vadd.f32 %v4022, %v3795
        %v4025 = vmul.f32 %v4023, %v3760
        %v4026 = vmul.f32 %v4024, %v3763
        %v4027 = vsel %vm977, %v4025, 0.0
        %v4028 = vsel %vm977, %v4026, 0.0
        %v4029 = vadd.f32 %v4027, %v4028
        %v4030 = vrot.slane %v4029, 4
        %v4031 = vadd.f32 %v4029, %v4030
        %v4032 = vrot.slane %v4031, 2
        %v4033 = vadd.f32 %v4031, %v4032
        %v4034 = vrot.slane %v4033, 1
        %v4035 = vadd.f32 %v4033, %v4034
        %v4036 = vsel %vm924, %v3810, %v3825
        %v4037 = vsel %vm912, %v4036, %v3840
        %v4038 = vsel %vm900, %v4037, %v3855
        %v4039 = vsel %vm2465, %v4038, %v3870
        %v4040 = vsel %vm2467, %v4039, %v3885
        %v4041 = vsel %vm2469, %v4040, %v3900
        %v4042 = vsel %vm2471, %v4041, %v3915
        %v4043 = vsel %vm924, %v3930, %v3945
        %v4044 = vsel %vm912, %v4043, %v3960
        %v4045 = vsel %vm900, %v4044, %v3975
        %v4046 = vsel %vm2465, %v4045, %v3990
        %v4047 = vsel %vm2467, %v4046, %v4005
        %v4048 = vsel %vm2469, %v4047, %v4020
        %v4049 = vsel %vm2471, %v4048, %v4035
        %v4050 = vperm.slane %v2556, 6
        %v4051 = vmul.f32 %v4050, %v2742
        %v4052 = vmul.f32 %v4050, %v2743
        %v4053 = vadd.f32 %v4042, %v4051
        %v4054 = vadd.f32 %v4049, %v4052
        %v4055 = vxor.u32 %v2659, 2147483648
        %v4056 = vxor.u32 %v2661, 2147483648
        %v4057 = vmul.f32 %v4055, 1.442695
        %v4058 = vpow.pop %v4057
        %v4059 = vmul.f32 %v4056, 1.442695
        %v4060 = vpow.pop %v4059
        %v4061 = vadd.f32 %v4058, 1.0
        %v4062 = vadd.f32 %v4060, 1.0
        %v4063 = vrcp.pop %v4061
        %v4064 = vmul.f32 %v4061, %v4063
        %v4065 = vsub.f32 1.0, %v4064
        %v4066 = vmul.f32 %v4063, %v4065
        %v4067 = vadd.f32 %v4063, %v4066
        %vm4068 = vweird.f32 %v4061
        %vm4069 = vweird.f32 %v4063
        %vm4070 = vmor %vm4068, %vm4069
        %v4071 = vsel %vm4070, %v4063, %v4067
        %v4072 = vand.u32 2147483647, %v4061
        %vm4073 = vcmp.eq.f32.partialorder %v4072, 8.507059e+37
        %v4074 = vand.u32 %v4061, 2147483648
        %v4075 = vor.u32 1.1754944e-38, %v4074
        %v4076 = vsel %vm4073, %v4075, %v4071
        %v4077 = vmul.f32 1.0, %v4076
        %v4078 = vrcp.pop %v4062
        %v4079 = vmul.f32 %v4062, %v4078
        %v4080 = vsub.f32 1.0, %v4079
        %v4081 = vmul.f32 %v4078, %v4080
        %v4082 = vadd.f32 %v4078, %v4081
        %vm4083 = vweird.f32 %v4062
        %vm4084 = vweird.f32 %v4078
        %vm4085 = vmor %vm4083, %vm4084
        %v4086 = vsel %vm4085, %v4078, %v4082
        %v4087 = vand.u32 2147483647, %v4062
        %vm4088 = vcmp.eq.f32.partialorder %v4087, 8.507059e+37
        %v4089 = vand.u32 %v4062, 2147483648
        %v4090 = vor.u32 1.1754944e-38, %v4089
        %v4091 = vsel %vm4088, %v4090, %v4086
        %v4092 = vmul.f32 1.0, %v4091
        %v4093 = vmul.f32 %v2659, %v4077
        %v4094 = vmul.f32 %v2661, %v4092
        %4097 = vrot.lane.b32.xlu0 %v4093, 64
        %v4098 = vpop.permute.xlu0 %4097
        %4099 = vrot.lane.b32.xlu0 %v4094, 64
        %v4100 = vpop.permute.xlu0 %4099
        %v4103 = vmul.f32 %v4053, %v4098
        %v4104 = vmul.f32 %v4054, %v4100
        %v4105 = vpack.c.bf16 %v4104, %v4103
        %v4107 = vsel %vm977, %v4105, 0
        %4109 = vmatpush.bf16.msra.mxu0 0
        %4110 = vmatpush.bf16.msra.mxu0 0
        %4111 = vmatpush.bf16.msra.mxu0 0
        %4112 = vmatpush.bf16.msra.mxu0 0
        %4113 = vmatpush.bf16.msra.mxu0 %v2594
        %4114 = vmatpush.bf16.msra.mxu0 %v2593
        %4115 = vmatpush.bf16.msra.mxu0 %v2592
        %4116 = vmatpush.bf16.msra.mxu0 %v2591
        %4117 = vmatmul.bf16.gmra.mxu0 %v4107
        %v4118 = vpop.f32.mrf.mxu0
        %v4119 = vadd.f32 %v2549, %v4118
        %v4120 = vpop.f32.mrf.mxu0
        %v4121 = vadd.f32 %v2551, %v4120
        %4122 = vdwg.mxu0
        %s4123 = scalar_lea.vmem %s1, 4
        %v4124 = vld [vmem:[%s4123] sm:$0x3]
        %v4125 = vsel %vm816, %v4119, 0.0
        %4126 = vadd.xlane.f32.xlu0 %v4125
        %v4127 = vpop.xlane.xlu0 %4126
        %v4128 = vsel %vm816, %v4121, 0.0
        %4129 = vadd.xlane.f32.xlu0 %v4128
        %v4130 = vpop.xlane.xlu0 %4129
        %v4131 = vmul.f32 %v4127, %v829
        %v4132 = vmul.f32 %v4130, %v829
        %v4133 = vsub.f32 %v4119, %v4131
        %v4134 = vsub.f32 %v4121, %v4132
        %v4135 = vmul.f32 %v4133, %v4133
        %v4136 = vmul.f32 %v4134, %v4134
        %v4137 = vsel %vm816, %v4135, 0.0
        %4138 = vadd.xlane.f32.xlu0 %v4137
        %v4139 = vpop.xlane.xlu0 %4138
        %v4140 = vsel %vm816, %v4136, 0.0
        %4141 = vadd.xlane.f32.xlu0 %v4140
        %v4142 = vpop.xlane.xlu0 %4141
        %v4143 = vmul.f32 %v4139, %v829
        %v4144 = vmul.f32 %v4142, %v829
        %v4145 = vadd.f32 %v4143, 1e-05
        %v4146 = vadd.f32 %v4144, 1e-05
        %v4147 = vrsqrt.pop %v4145
        %v4148 = vmul.f32 %v4147, %v4145
        %v4149 = vmul.f32 %v4148, %v4147
        %v4150 = vmul.f32 0.5, %v4149
        %v4151 = vsub.f32 1.5, %v4150
        %v4152 = vmul.f32 %v4147, %v4151
        %vm4153 = vweird.f32 %v4145
        %vm4154 = vweird.f32 %v4147
        %vm4155 = vmor %vm4153, %vm4154
        %v4156 = vsel %vm4155, %v4147, %v4152
        %v4157 = vrsqrt.pop %v4146
        %v4158 = vmul.f32 %v4157, %v4146
        %v4159 = vmul.f32 %v4158, %v4157
        %v4160 = vmul.f32 0.5, %v4159
        %v4161 = vsub.f32 1.5, %v4160
        %v4162 = vmul.f32 %v4157, %v4161
        %vm4163 = vweird.f32 %v4146
        %vm4164 = vweird.f32 %v4157
        %vm4165 = vmor %vm4163, %vm4164
        %v4166 = vsel %vm4165, %v4157, %v4162
        %v4167 = vmul.f32 %v4133, %v4156
        %v4168 = vmul.f32 %v4134, %v4166
        %v4169 = vperm.slane %v4124, 0
        %v4170 = vmul.f32 %v4167, %v4169
        %v4171 = vmul.f32 %v4168, %v4169
        %v4172 = vperm.slane %v4124, 1
        %v4173 = vadd.f32 %v4170, %v4172
        %v4174 = vadd.f32 %v4171, %v4172
        %4175 = vst.msk [vmem:[%s325] sm:$0xff] %vm816, %v4173
        %4176 = vst.msk [vmem:[%s325 + $0x8] sm:$0xff] %vm816, %v4174
        %s4177 = sand.u32 %s206, 1
        %s4178 = scalar_lea.sflag [#allocation4], %s4177
        %s4179 = sand.u32 %s206, 1
        %s4180 = smul.addr %s4179, 16
        %s4181 = scalar_lea.vmem [#allocation5], %s4180
        // Predicated region
        $region57: #{mamba_backbone.1} parent=51 // pred_check
          %p4182 = pneg %p216
        $region58: #{mamba_backbone.1} parent=51 // pred_check_branch
          %4184 = sbr.rel (%p4182) target = $region60
        $region59: #{mamba_backbone.1} parent=51 // pred_region
          %4186 = vsyncadd %s4178, 0
          %s4187 = smul.addr %s25, 2
          %s4188 = smul.addr %s4187, 8
          %s4189 = scalar_lea.hbm %s8, %s4188
          %s4190 = sshll.u32 %s4181, 4
          %s4191 = int_to_ptr.vmem [resolvable:$true] %s4190
          %s4192 = sshll.u32 %s4189, 4
          %s4193 = int_to_ptr.hbm [resolvable:$true] %s4192
          %4198 = dma.vmem_to_hbm [thread:$0]  %s4191, 256, %s4193, %s4178, 128, 128, 8
        $region60: #{mamba_backbone.1} parent=51 // pred_fallthru
          _
      $region52: #{mamba_backbone.1} parent=5 // pred_fallthru
        _
      %p4199 = scmp.le.s32.totalorder 2, %s20
      // Predicated region
      $region61: #{mamba_backbone.1} parent=5 // pred_check
        %p4200 = pneg %p4199
      $region62: #{mamba_backbone.1} parent=5 // pred_check_branch
        %4202 = sbr.rel (%p4200) target = $region64
      $region63: #{mamba_backbone.1} parent=5 // pred_region
        %s4203 = ssub.s32 %s20, 2
        // Predicated region
        $region65: #{mamba_backbone.1} parent=63 // pred_check
          %p4204 = pneg %p222
        $region66: #{mamba_backbone.1} parent=63 // pred_check_branch
          %4206 = sbr.rel (%p4204) target = $region68
        $region67: #{mamba_backbone.1} parent=63 // pred_region
          %s4207 = sand.u32 %s207, 1
          %s4208 = scalar_lea.sflag [#allocation4], %s4207
          %s4209 = sand.u32 %s207, 1
          %s4210 = smul.addr %s4209, 16
          %s4211 = scalar_lea.vmem [#allocation5], %s4210
          %4213 = dma.done %s4208, 256
        $region68: #{mamba_backbone.1} parent=63 // pred_fallthru
          _
      $region64: #{mamba_backbone.1} parent=5 // pred_fallthru
        _
    $region6: #{mamba_backbone.1} parent=1 // loop_footer
      %s24 = sadd.s32 1, %s20
    $region7: #{mamba_backbone.1} parent=1 // loop_footer_branch
      %19 = sbr.rel target = $region3
    $region8: #{mamba_backbone.1} parent=1 // loop_exit
      _
    %4214 = vsyncpa [#allocation3], 1
    %s4215 = scalar_lea.sflag [#allocation3], 1
    %4216 = vsyncpa %s4215, 1
    %4217 = vsyncpa [#allocation4], 1
    %s4218 = scalar_lea.sflag [#allocation4], 1
    %4219 = vsyncpa %s4218, 1

</llo_original>
